<compile_context>
chip_gen: v7x
topology: tpu7x:2x2x1
jax: 0.10.0
libtpu: 0.0.40
codegen_flags: <defaults>
</compile_context>

<pallas_src>
import functools
import math

import jax
import jax.numpy as jnp
from jax import lax
from jax.experimental import pallas as pl
from jax.experimental.pallas import tpu as pltpu  # noqa: F401  (imported per template)

# ---------------- small config (consistent with the module's structure) -----
VOCAB = 512
HIDDEN = 32
HP = 128                                  # hidden padded to one full 128-lane vreg
NUM_LAYERS = 2
NUM_Q_HEADS = 8
NUM_KV_HEADS = 4
HEAD_DIM = HIDDEN // NUM_Q_HEADS          # 4
KV_DIM = HEAD_DIM * NUM_KV_HEADS          # 16
REP = NUM_Q_HEADS // NUM_KV_HEADS         # 2
INTERMEDIATE = 128
MAX_SEQ = 64
EPS = 1e-6
INIT_STD = 0.02
NEG_BIG = -1e30                           # finite mask value (avoids inf-inf -> NaN)


# ---------------- in-kernel helpers -----------------------------------------
def _rmsnorm(x, w):
    # mean over the REAL hidden width (pad lanes are zero -> sum is unaffected)
    ms = jnp.sum(x * x, axis=-1, keepdims=True) * (1.0 / HIDDEN)
    return (x * lax.rsqrt(ms + EPS)) * w


def _gelu(x, exact):
    if exact:                              # nn.GELU() default (erf form)
        return 0.5 * x * (1.0 + jax.scipy.special.erf(x * (1.0 / math.sqrt(2.0))))
    # TODO(synk): tanh approximation fallback only if Mosaic cannot lower erf.
    c = math.sqrt(2.0 / math.pi)
    return 0.5 * x * (1.0 + jnp.tanh(c * (x + 0.044715 * x * x * x)))


def _erf_lowers():
    """Lowering-only probe (no device execution): can Mosaic lower erf?"""
    def k(x_ref, o_ref):
        o_ref[...] = jax.scipy.special.erf(x_ref[...])
    try:
        f = pl.pallas_call(k, out_shape=jax.ShapeDtypeStruct((8, 128), jnp.float32))
        jax.jit(f).lower(jax.ShapeDtypeStruct((8, 128), jnp.float32))
        return True
    except Exception:
        return False


# ---------------- fully fused forward kernel --------------------------------
def fused_forward_kernel(x_ref, mask_ref, segsum_ref, hmask_ref,
                         ln1_ref, wqkv_ref, bqkv_ref, wo_ref, bo_ref,
                         ln2_ref, w1_ref, b1_ref, w2_ref, b2_ref,
                         lnf_ref, embt_ref,
                         logits_ref,
                         *, B, S, exact_gelu):
    NH = NUM_Q_HEADS
    scale = 1.0 / math.sqrt(HEAD_DIM)

    mask = mask_ref[...]                       # (S, NH*S)  additive causal bias (finite)
    segsum = segsum_ref[...]                   # (NH*S, NH*S) 8x8 block-diagonal ones
    hmask = hmask_ref[...]                     # (NH, HP)  1.0 on that head's 4 lanes
    hm4 = hmask.reshape(1, NH, 1, HP)

    h = x_ref[...]                             # (B*S, HP), pad lanes are zero

    for l in range(NUM_LAYERS):                # static unroll (2 layers)
        # ---- attention block ----
        xn = _rmsnorm(h, ln1_ref[l])                                   # (B*S, HP)
        # one fused 384-wide QKV projection (GQA repeat baked into the packed weight)
        qkv = jnp.dot(xn, wqkv_ref[l], preferred_element_type=jnp.float32) + bqkv_ref[l]
        q = qkv[:, 0:HP]                       # 128-lane-aligned slices (free)
        k = qkv[:, HP:2 * HP]
        v = qkv[:, 2 * HP:3 * HP]

        q3 = q.reshape(B, S, HP)
        # block-structured K/V: row (h*S + j) carries key/value j masked to head h's lanes
        km = (k.reshape(B, 1, S, HP) * hm4).reshape(B, NH * S, HP)
        vm = (v.reshape(B, 1, S, HP) * hm4).reshape(B, NH * S, HP)

        # lane-dense scores: (B, S, NH*S) = (B, S, 64)
        s = jnp.einsum('bqd,bnd->bqn', q3, km,
                       preferred_element_type=jnp.float32) * scale
        s = s + mask[None, :, :]
        # shared per-row shift: softmax is shift-invariant within each head's segment,
        # so this is mathematically identical to the per-head max subtraction.
        s = s - jnp.max(s, axis=-1, keepdims=True)
        p = jnp.exp(s).reshape(B * S, NH * S)
        # per-head denominators, replicated per lane, via ONE matmul (no segment reduces)
        denom = jnp.dot(p, segsum, preferred_element_type=jnp.float32)
        pn = (p / denom).reshape(B, S, NH * S)                          # exact division

        # context: (B, S, HP) with head h's output on its own 4 lanes (torch layout)
        ctx = jnp.einsum('bqn,bnd->bqd', pn, vm, preferred_element_type=jnp.float32)
        attn = jnp.dot(ctx.reshape(B * S, HP), wo_ref[l],
                       preferred_element_type=jnp.float32) + bo_ref[l]
        h = h + attn                                                    # residual

        # ---- FFN block ----
        xn2 = _rmsnorm(h, ln2_ref[l])
        f1 = jnp.dot(xn2, w1_ref[l], preferred_element_type=jnp.float32) + b1_ref[l]
        f2 = jnp.dot(_gelu(f1, exact_gelu), w2_ref[l],
                     preferred_element_type=jnp.float32) + b2_ref[l]
        h = h + f2                                                      # residual

    # ---- final RMSNorm + tied lm_head (embedding pre-transposed: no in-kernel transpose)
    xf = _rmsnorm(h, lnf_ref[...])
    logits_ref[...] = jnp.dot(xf, embt_ref[...], preferred_element_type=jnp.float32)


# ---------------- wrapper: padding / packing / glue --------------------------
def _pad2d(a, rows, cols):
    r, c = a.shape
    return jnp.pad(a, ((0, rows - r), (0, cols - c)))


def _pad_vec(a, width=HP):
    return jnp.pad(a.reshape(1, -1), ((0, 0), (0, width - a.shape[0])))


def make_pos_encoding(d_model, max_len):
    pos = jnp.arange(max_len, dtype=jnp.float32)[:, None]
    div = jnp.exp(jnp.arange(0, d_model, 2, dtype=jnp.float32)
                  * (-math.log(10000.0) / d_model))
    pe = jnp.zeros((max_len, d_model), jnp.float32)
    pe = pe.at[:, 0::2].set(jnp.sin(pos * div))
    pe = pe.at[:, 1::2].set(jnp.cos(pos * div))
    return pe


def init_params(key):
    """Torch-equivalent init: N(0, 0.02) linear/embedding weights, zero biases, unit norms."""
    n_lin = 6
    keys = jax.random.split(key, 1 + NUM_LAYERS * n_lin)
    emb = INIT_STD * jax.random.normal(keys[0], (VOCAB, HIDDEN), jnp.float32)
    layers = []
    for l in range(NUM_LAYERS):
        k = keys[1 + l * n_lin: 1 + (l + 1) * n_lin]
        layers.append(dict(
            wq=INIT_STD * jax.random.normal(k[0], (HIDDEN, HIDDEN), jnp.float32),
            wk=INIT_STD * jax.random.normal(k[1], (KV_DIM, HIDDEN), jnp.float32),
            wv=INIT_STD * jax.random.normal(k[2], (KV_DIM, HIDDEN), jnp.float32),
            wo=INIT_STD * jax.random.normal(k[3], (HIDDEN, HIDDEN), jnp.float32),
            w1=INIT_STD * jax.random.normal(k[4], (INTERMEDIATE, HIDDEN), jnp.float32),
            w2=INIT_STD * jax.random.normal(k[5], (HIDDEN, INTERMEDIATE), jnp.float32),
            bq=jnp.zeros((HIDDEN,), jnp.float32),
            bk=jnp.zeros((KV_DIM,), jnp.float32),
            bv=jnp.zeros((KV_DIM,), jnp.float32),
            bo=jnp.zeros((HIDDEN,), jnp.float32),
            b1=jnp.zeros((INTERMEDIATE,), jnp.float32),
            b2=jnp.zeros((HIDDEN,), jnp.float32),
            ln1=jnp.ones((HIDDEN,), jnp.float32),
            ln2=jnp.ones((HIDDEN,), jnp.float32),
        ))
    lnf = jnp.ones((HIDDEN,), jnp.float32)
    return emb, layers, lnf


def pack_params(emb, layers, lnf):
    """Pre-transpose (x @ W.T -> x @ W_t), bake GQA repeat into Wk/Wv, fuse QKV,
    zero-pad to lane-dense 128-lane widths, stack layers. Batch-independent."""
    def rep_kv_cols(w_t):       # (HIDDEN, KV_DIM) -> (HIDDEN, HIDDEN) in q-head order
        w3 = w_t.reshape(HIDDEN, NUM_KV_HEADS, HEAD_DIM)
        return jnp.repeat(w3, REP, axis=1).reshape(HIDDEN, HIDDEN)

    def rep_kv_bias(b):         # (KV_DIM,) -> (HIDDEN,)
        return jnp.repeat(b.reshape(NUM_KV_HEADS, HEAD_DIM), REP, axis=0).reshape(HIDDEN)

    def per_layer(p):
        wq_t = _pad2d(p['wq'].T, HP, HP)
        wk_t = _pad2d(rep_kv_cols(p['wk'].T), HP, HP)
        wv_t = _pad2d(rep_kv_cols(p['wv'].T), HP, HP)
        wqkv = jnp.concatenate([wq_t, wk_t, wv_t], axis=1)             # (128, 384)
        bqkv = jnp.concatenate([_pad_vec(p['bq']),
                                _pad_vec(rep_kv_bias(p['bk'])),
                                _pad_vec(rep_kv_bias(p['bv']))], axis=1)  # (1, 384)
        return dict(
            ln1=_pad_vec(p['ln1']),
            wqkv=wqkv, bqkv=bqkv,
            wo=_pad2d(p['wo'].T, HP, HP), bo=_pad_vec(p['bo']),
            ln2=_pad_vec(p['ln2']),
            w1=_pad2d(p['w1'].T, HP, INTERMEDIATE), b1=_pad_vec(p['b1'], INTERMEDIATE),
            w2=_pad2d(p['w2'].T, INTERMEDIATE, HP), b2=_pad_vec(p['b2']),
        )
    per = [per_layer(p) for p in layers]
    packed = {name: jnp.stack([d[name] for d in per], axis=0) for name in per[0]}
    emb_pad = _pad2d(emb, VOCAB, HP)        # (512, 128) for the wrapper-side gather
    emb_t = emb_pad.T                       # (128, 512) for the in-kernel tied lm_head
    lnf_pad = _pad_vec(lnf)
    return emb_pad, emb_t, packed, lnf_pad


def make_attn_constants(S):
    """Hoisted kernel constants: packed causal-mask bias, segment-sum matrix, head mask."""
    col = jnp.arange(NUM_Q_HEADS * S, dtype=jnp.int32)[None, :] % S
    row = jnp.arange(S, dtype=jnp.int32)[:, None]
    mask = jnp.where(col <= row, 0.0, NEG_BIG).astype(jnp.float32)      # (S, NH*S)
    idx = jnp.arange(NUM_Q_HEADS * S, dtype=jnp.int32)
    segsum = (idx[:, None] // S == idx[None, :] // S).astype(jnp.float32)  # (NH*S, NH*S)
    lane = jnp.arange(HP, dtype=jnp.int32)[None, :]
    hh = jnp.arange(NUM_Q_HEADS, dtype=jnp.int32)[:, None]
    hmask = ((lane >= hh * HEAD_DIM) &
             (lane < (hh + 1) * HEAD_DIM)).astype(jnp.float32)          # (NH, HP)
    return mask, segsum, hmask


def qwen3_small_forward(input_ids, emb_pad, emb_t, packed, lnf_pad, pe_pad, exact_gelu):
    B, S = input_ids.shape
    # token embedding (gather) + positional encoding; dropout -> identity (eval)
    h = jnp.take(emb_pad, input_ids, axis=0) + pe_pad[None, :S, :]      # (B, S, HP)
    x2d = h.reshape(B * S, HP)
    mask, segsum, hmask = make_attn_constants(S)

    kern = functools.partial(fused_forward_kernel, B=B, S=S, exact_gelu=exact_gelu)
    logits2d = pl.pallas_call(
        kern,
        out_shape=jax.ShapeDtypeStruct((B * S, VOCAB), jnp.float32),
    )(x2d, mask, segsum, hmask,
      packed['ln1'], packed['wqkv'], packed['bqkv'], packed['wo'], packed['bo'],
      packed['ln2'], packed['w1'], packed['b1'], packed['w2'], packed['b2'],
      lnf_pad, emb_t)
    return logits2d.reshape(B, S, VOCAB)


# ---------------- main -------------------------------------------------------
if __name__ == "__main__":
    key = jax.random.PRNGKey(0)
    pkey, ikey = jax.random.split(key)

    B, S = 2, 8
    emb, layers, lnf = init_params(pkey)
    emb_pad, emb_t, packed, lnf_pad = pack_params(emb, layers, lnf)
    pe_pad = _pad2d(make_pos_encoding(HIDDEN, MAX_SEQ), MAX_SEQ, HP)

    input_ids = jax.random.randint(ikey, (B, S), 0, VOCAB, dtype=jnp.int32)

    exact_gelu = _erf_lowers()   # lowering-only probe, no extra device execution

    logits = qwen3_small_forward(input_ids, emb_pad, emb_t, packed, lnf_pad,
                                 pe_pad, exact_gelu)
    logits = jax.block_until_ready(logits)

    assert logits.shape == (B, S, VOCAB)
    assert bool(jnp.all(jnp.isfinite(logits)))
    print("KERNEL_OK")
</pallas_src>

<mosaic_0001>
module attributes {stable_mosaic.version = 11 : i64} {
  func.func @fused_forward_kernel(%arg0: memref<16x128xf32, #tpu.memory_space<vmem>>, %arg1: memref<8x64xf32, #tpu.memory_space<vmem>>, %arg2: memref<64x64xf32, #tpu.memory_space<vmem>>, %arg3: memref<8x128xf32, #tpu.memory_space<vmem>>, %arg4: memref<2x1x128xf32, #tpu.memory_space<vmem>>, %arg5: memref<2x128x384xf32, #tpu.memory_space<vmem>>, %arg6: memref<2x1x384xf32, #tpu.memory_space<vmem>>, %arg7: memref<2x128x128xf32, #tpu.memory_space<vmem>>, %arg8: memref<2x1x128xf32, #tpu.memory_space<vmem>>, %arg9: memref<2x1x128xf32, #tpu.memory_space<vmem>>, %arg10: memref<2x128x128xf32, #tpu.memory_space<vmem>>, %arg11: memref<2x1x128xf32, #tpu.memory_space<vmem>>, %arg12: memref<2x128x128xf32, #tpu.memory_space<vmem>>, %arg13: memref<2x1x128xf32, #tpu.memory_space<vmem>>, %arg14: memref<1x128xf32, #tpu.memory_space<vmem>>, %arg15: memref<128x512xf32, #tpu.memory_space<vmem>>, %arg16: memref<16x512xf32, #tpu.memory_space<vmem>>) attributes {dimension_semantics = [], scalar_prefetch = 0 : i64, scratch_operands = 0 : i64, tpu.core_type = #tpu.core_type<tc>} {
    %c0 = arith.constant 0 : index
    %c0_0 = arith.constant 0 : index
    %0 = vector.load %arg1[%c0, %c0_0] : memref<8x64xf32, #tpu.memory_space<vmem>>, vector<8x64xf32>
    %c0_1 = arith.constant 0 : index
    %c0_2 = arith.constant 0 : index
    %1 = vector.load %arg2[%c0_1, %c0_2] : memref<64x64xf32, #tpu.memory_space<vmem>>, vector<64x64xf32>
    %c0_3 = arith.constant 0 : index
    %c0_4 = arith.constant 0 : index
    %2 = vector.load %arg3[%c0_3, %c0_4] : memref<8x128xf32, #tpu.memory_space<vmem>>, vector<8x128xf32>
    %3 = vector.shape_cast %2 : vector<8x128xf32> to vector<1x8x1x128xf32>
    %c0_5 = arith.constant 0 : index
    %c0_6 = arith.constant 0 : index
    %4 = vector.load %arg0[%c0_5, %c0_6] : memref<16x128xf32, #tpu.memory_space<vmem>>, vector<16x128xf32>
    %c0_7 = arith.constant 0 : index
    %c0_8 = arith.constant 0 : index
    %c0_9 = arith.constant 0 : index
    %5 = vector.load %arg4[%c0_7, %c0_8, %c0_9] : memref<2x1x128xf32, #tpu.memory_space<vmem>>, vector<1x1x128xf32>
    %6 = vector.shape_cast %5 : vector<1x1x128xf32> to vector<1x128xf32>
    %7 = arith.mulf %4, %4 : vector<16x128xf32>
    %cst = arith.constant dense<0.000000e+00> : vector<16xf32>
    %8 = vector.multi_reduction <add>, %7, %cst [1] : vector<16x128xf32> to vector<16xf32>
    %9 = vector.shape_cast %8 : vector<16xf32> to vector<16x1xf32>
    %cst_10 = arith.constant 3.125000e-02 : f32
    %10 = vector.broadcast %cst_10 : f32 to vector<16x1xf32>
    %11 = arith.mulf %9, %10 : vector<16x1xf32>
    %cst_11 = arith.constant 9.99999997E-7 : f32
    %12 = vector.broadcast %cst_11 : f32 to vector<16x1xf32>
    %13 = arith.addf %11, %12 : vector<16x1xf32>
    %14 = math.rsqrt %13 : vector<16x1xf32>
    %15 = vector.broadcast %14 : vector<16x1xf32> to vector<16x128xf32>
    %16 = arith.mulf %4, %15 : vector<16x128xf32>
    %17 = vector.broadcast %6 : vector<1x128xf32> to vector<16x128xf32>
    %18 = arith.mulf %16, %17 : vector<16x128xf32>
    %c0_12 = arith.constant 0 : index
    %c0_13 = arith.constant 0 : index
    %c0_14 = arith.constant 0 : index
    %19 = vector.load %arg5[%c0_12, %c0_13, %c0_14] : memref<2x128x384xf32, #tpu.memory_space<vmem>>, vector<1x128x384xf32>
    %20 = vector.shape_cast %19 : vector<1x128x384xf32> to vector<128x384xf32>
    %cst_15 = arith.constant dense<0.000000e+00> : vector<16x384xf32>
    %21 = tpu.matmul %18, %20, %cst_15 {dimension_numbers = #tpu.dot_dimension_numbers<[1], [0], [0], [1], [0, 0, 1, 1], [], []>} : vector<16x128xf32>, vector<128x384xf32>, vector<16x384xf32> -> vector<16x384xf32>
    %c0_16 = arith.constant 0 : index
    %c0_17 = arith.constant 0 : index
    %c0_18 = arith.constant 0 : index
    %22 = vector.load %arg6[%c0_16, %c0_17, %c0_18] : memref<2x1x384xf32, #tpu.memory_space<vmem>>, vector<1x1x384xf32>
    %23 = vector.shape_cast %22 : vector<1x1x384xf32> to vector<1x384xf32>
    %24 = vector.broadcast %23 : vector<1x384xf32> to vector<16x384xf32>
    %25 = arith.addf %21, %24 : vector<16x384xf32>
    %26 = vector.extract_strided_slice %25 {offsets = [0, 0], sizes = [16, 128], strides = [1, 1]} : vector<16x384xf32> to vector<16x128xf32>
    %27 = vector.extract_strided_slice %25 {offsets = [0, 128], sizes = [16, 128], strides = [1, 1]} : vector<16x384xf32> to vector<16x128xf32>
    %28 = vector.extract_strided_slice %25 {offsets = [0, 256], sizes = [16, 128], strides = [1, 1]} : vector<16x384xf32> to vector<16x128xf32>
    %29 = vector.shape_cast %26 : vector<16x128xf32> to vector<2x8x128xf32>
    %30 = vector.shape_cast %27 : vector<16x128xf32> to vector<2x1x8x128xf32>
    %31 = vector.broadcast %30 : vector<2x1x8x128xf32> to vector<2x8x8x128xf32>
    %32 = vector.broadcast %3 : vector<1x8x1x128xf32> to vector<2x8x8x128xf32>
    %33 = arith.mulf %31, %32 : vector<2x8x8x128xf32>
    %34 = vector.shape_cast %33 : vector<2x8x8x128xf32> to vector<2x64x128xf32>
    %35 = vector.shape_cast %28 : vector<16x128xf32> to vector<2x1x8x128xf32>
    %36 = vector.broadcast %35 : vector<2x1x8x128xf32> to vector<2x8x8x128xf32>
    %37 = vector.broadcast %3 : vector<1x8x1x128xf32> to vector<2x8x8x128xf32>
    %38 = arith.mulf %36, %37 : vector<2x8x8x128xf32>
    %39 = vector.shape_cast %38 : vector<2x8x8x128xf32> to vector<2x64x128xf32>
    "tpu.trace_start"() <{level = 10 : i32, message = "bqd,bnd->bqn"}> : () -> ()
    %cst_19 = arith.constant dense<0.000000e+00> : vector<2x8x64xf32>
    %40 = tpu.matmul %29, %34, %cst_19 {dimension_numbers = #tpu.dot_dimension_numbers<[2], [2], [1], [1], [0, 0, 0, 1, 1, 1], [0], [0]>} : vector<2x8x128xf32>, vector<2x64x128xf32>, vector<2x8x64xf32> -> vector<2x8x64xf32>
    "tpu.trace_stop"() : () -> ()
    %cst_20 = arith.constant 5.000000e-01 : f32
    %41 = vector.broadcast %cst_20 : f32 to vector<2x8x64xf32>
    %42 = arith.mulf %40, %41 : vector<2x8x64xf32>
    %43 = vector.shape_cast %0 : vector<8x64xf32> to vector<1x8x64xf32>
    %44 = vector.broadcast %43 : vector<1x8x64xf32> to vector<2x8x64xf32>
    %45 = arith.addf %42, %44 : vector<2x8x64xf32>
    %cst_21 = arith.constant dense<0xFF800000> : vector<2x8xf32>
    %46 = vector.multi_reduction <maximumf>, %45, %cst_21 [2] : vector<2x8x64xf32> to vector<2x8xf32>
    %47 = vector.shape_cast %46 : vector<2x8xf32> to vector<2x8x1xf32>
    %48 = vector.broadcast %47 : vector<2x8x1xf32> to vector<2x8x64xf32>
    %49 = arith.subf %45, %48 : vector<2x8x64xf32>
    %50 = math.exp %49 : vector<2x8x64xf32>
    %51 = vector.shape_cast %50 : vector<2x8x64xf32> to vector<16x64xf32>
    %cst_22 = arith.constant dense<0.000000e+00> : vector<16x64xf32>
    %52 = tpu.matmul %51, %1, %cst_22 {dimension_numbers = #tpu.dot_dimension_numbers<[1], [0], [0], [1], [0, 0, 1, 1], [], []>} : vector<16x64xf32>, vector<64x64xf32>, vector<16x64xf32> -> vector<16x64xf32>
    %53 = arith.divf %51, %52 : vector<16x64xf32>
    %54 = vector.shape_cast %53 : vector<16x64xf32> to vector<2x8x64xf32>
    "tpu.trace_start"() <{level = 10 : i32, message = "bqn,bnd->bqd"}> : () -> ()
    %cst_23 = arith.constant dense<0.000000e+00> : vector<2x8x128xf32>
    %55 = tpu.matmul %54, %39, %cst_23 {dimension_numbers = #tpu.dot_dimension_numbers<[2], [1], [1], [2], [0, 0, 0, 1, 1, 2], [0], [0]>} : vector<2x8x64xf32>, vector<2x64x128xf32>, vector<2x8x128xf32> -> vector<2x8x128xf32>
    "tpu.trace_stop"() : () -> ()
    %56 = vector.shape_cast %55 : vector<2x8x128xf32> to vector<16x128xf32>
    %c0_24 = arith.constant 0 : index
    %c0_25 = arith.constant 0 : index
    %c0_26 = arith.constant 0 : index
    %57 = vector.load %arg7[%c0_24, %c0_25, %c0_26] : memref<2x128x128xf32, #tpu.memory_space<vmem>>, vector<1x128x128xf32>
    %58 = vector.shape_cast %57 : vector<1x128x128xf32> to vector<128x128xf32>
    %cst_27 = arith.constant dense<0.000000e+00> : vector<16x128xf32>
    %59 = tpu.matmul %56, %58, %cst_27 {dimension_numbers = #tpu.dot_dimension_numbers<[1], [0], [0], [1], [0, 0, 1, 1], [], []>} : vector<16x128xf32>, vector<128x128xf32>, vector<16x128xf32> -> vector<16x128xf32>
    %c0_28 = arith.constant 0 : index
    %c0_29 = arith.constant 0 : index
    %c0_30 = arith.constant 0 : index
    %60 = vector.load %arg8[%c0_28, %c0_29, %c0_30] : memref<2x1x128xf32, #tpu.memory_space<vmem>>, vector<1x1x128xf32>
    %61 = vector.shape_cast %60 : vector<1x1x128xf32> to vector<1x128xf32>
    %62 = vector.broadcast %61 : vector<1x128xf32> to vector<16x128xf32>
    %63 = arith.addf %59, %62 : vector<16x128xf32>
    %64 = arith.addf %4, %63 : vector<16x128xf32>
    %c0_31 = arith.constant 0 : index
    %c0_32 = arith.constant 0 : index
    %c0_33 = arith.constant 0 : index
    %65 = vector.load %arg9[%c0_31, %c0_32, %c0_33] : memref<2x1x128xf32, #tpu.memory_space<vmem>>, vector<1x1x128xf32>
    %66 = vector.shape_cast %65 : vector<1x1x128xf32> to vector<1x128xf32>
    %67 = arith.mulf %64, %64 : vector<16x128xf32>
    %cst_34 = arith.constant dense<0.000000e+00> : vector<16xf32>
    %68 = vector.multi_reduction <add>, %67, %cst_34 [1] : vector<16x128xf32> to vector<16xf32>
    %69 = vector.shape_cast %68 : vector<16xf32> to vector<16x1xf32>
    %cst_35 = arith.constant 3.125000e-02 : f32
    %70 = vector.broadcast %cst_35 : f32 to vector<16x1xf32>
    %71 = arith.mulf %69, %70 : vector<16x1xf32>
    %cst_36 = arith.constant 9.99999997E-7 : f32
    %72 = vector.broadcast %cst_36 : f32 to vector<16x1xf32>
    %73 = arith.addf %71, %72 : vector<16x1xf32>
    %74 = math.rsqrt %73 : vector<16x1xf32>
    %75 = vector.broadcast %74 : vector<16x1xf32> to vector<16x128xf32>
    %76 = arith.mulf %64, %75 : vector<16x128xf32>
    %77 = vector.broadcast %66 : vector<1x128xf32> to vector<16x128xf32>
    %78 = arith.mulf %76, %77 : vector<16x128xf32>
    %c0_37 = arith.constant 0 : index
    %c0_38 = arith.constant 0 : index
    %c0_39 = arith.constant 0 : index
    %79 = vector.load %arg10[%c0_37, %c0_38, %c0_39] : memref<2x128x128xf32, #tpu.memory_space<vmem>>, vector<1x128x128xf32>
    %80 = vector.shape_cast %79 : vector<1x128x128xf32> to vector<128x128xf32>
    %cst_40 = arith.constant dense<0.000000e+00> : vector<16x128xf32>
    %81 = tpu.matmul %78, %80, %cst_40 {dimension_numbers = #tpu.dot_dimension_numbers<[1], [0], [0], [1], [0, 0, 1, 1], [], []>} : vector<16x128xf32>, vector<128x128xf32>, vector<16x128xf32> -> vector<16x128xf32>
    %c0_41 = arith.constant 0 : index
    %c0_42 = arith.constant 0 : index
    %c0_43 = arith.constant 0 : index
    %82 = vector.load %arg11[%c0_41, %c0_42, %c0_43] : memref<2x1x128xf32, #tpu.memory_space<vmem>>, vector<1x1x128xf32>
    %83 = vector.shape_cast %82 : vector<1x1x128xf32> to vector<1x128xf32>
    %84 = vector.broadcast %83 : vector<1x128xf32> to vector<16x128xf32>
    %85 = arith.addf %81, %84 : vector<16x128xf32>
    %cst_44 = arith.constant 5.000000e-01 : f32
    %86 = vector.broadcast %cst_44 : f32 to vector<16x128xf32>
    %87 = arith.mulf %86, %85 : vector<16x128xf32>
    %cst_45 = arith.constant 4.471500e-02 : f32
    %88 = vector.broadcast %cst_45 : f32 to vector<16x128xf32>
    %89 = arith.mulf %88, %85 : vector<16x128xf32>
    %90 = arith.mulf %89, %85 : vector<16x128xf32>
    %91 = arith.mulf %90, %85 : vector<16x128xf32>
    %92 = arith.addf %85, %91 : vector<16x128xf32>
    %cst_46 = arith.constant 0.797884583 : f32
    %93 = vector.broadcast %cst_46 : f32 to vector<16x128xf32>
    %94 = arith.mulf %93, %92 : vector<16x128xf32>
    %95 = math.tanh %94 : vector<16x128xf32>
    %cst_47 = arith.constant 1.000000e+00 : f32
    %96 = vector.broadcast %cst_47 : f32 to vector<16x128xf32>
    %97 = arith.addf %96, %95 : vector<16x128xf32>
    %98 = arith.mulf %87, %97 : vector<16x128xf32>
    %c0_48 = arith.constant 0 : index
    %c0_49 = arith.constant 0 : index
    %c0_50 = arith.constant 0 : index
    %99 = vector.load %arg12[%c0_48, %c0_49, %c0_50] : memref<2x128x128xf32, #tpu.memory_space<vmem>>, vector<1x128x128xf32>
    %100 = vector.shape_cast %99 : vector<1x128x128xf32> to vector<128x128xf32>
    %cst_51 = arith.constant dense<0.000000e+00> : vector<16x128xf32>
    %101 = tpu.matmul %98, %100, %cst_51 {dimension_numbers = #tpu.dot_dimension_numbers<[1], [0], [0], [1], [0, 0, 1, 1], [], []>} : vector<16x128xf32>, vector<128x128xf32>, vector<16x128xf32> -> vector<16x128xf32>
    %c0_52 = arith.constant 0 : index
    %c0_53 = arith.constant 0 : index
    %c0_54 = arith.constant 0 : index
    %102 = vector.load %arg13[%c0_52, %c0_53, %c0_54] : memref<2x1x128xf32, #tpu.memory_space<vmem>>, vector<1x1x128xf32>
    %103 = vector.shape_cast %102 : vector<1x1x128xf32> to vector<1x128xf32>
    %104 = vector.broadcast %103 : vector<1x128xf32> to vector<16x128xf32>
    %105 = arith.addf %101, %104 : vector<16x128xf32>
    %106 = arith.addf %64, %105 : vector<16x128xf32>
    %c1 = arith.constant 1 : index
    %c0_55 = arith.constant 0 : index
    %c0_56 = arith.constant 0 : index
    %107 = vector.load %arg4[%c1, %c0_55, %c0_56] : memref<2x1x128xf32, #tpu.memory_space<vmem>>, vector<1x1x128xf32>
    %108 = vector.shape_cast %107 : vector<1x1x128xf32> to vector<1x128xf32>
    %109 = arith.mulf %106, %106 : vector<16x128xf32>
    %cst_57 = arith.constant dense<0.000000e+00> : vector<16xf32>
    %110 = vector.multi_reduction <add>, %109, %cst_57 [1] : vector<16x128xf32> to vector<16xf32>
    %111 = vector.shape_cast %110 : vector<16xf32> to vector<16x1xf32>
    %cst_58 = arith.constant 3.125000e-02 : f32
    %112 = vector.broadcast %cst_58 : f32 to vector<16x1xf32>
    %113 = arith.mulf %111, %112 : vector<16x1xf32>
    %cst_59 = arith.constant 9.99999997E-7 : f32
    %114 = vector.broadcast %cst_59 : f32 to vector<16x1xf32>
    %115 = arith.addf %113, %114 : vector<16x1xf32>
    %116 = math.rsqrt %115 : vector<16x1xf32>
    %117 = vector.broadcast %116 : vector<16x1xf32> to vector<16x128xf32>
    %118 = arith.mulf %106, %117 : vector<16x128xf32>
    %119 = vector.broadcast %108 : vector<1x128xf32> to vector<16x128xf32>
    %120 = arith.mulf %118, %119 : vector<16x128xf32>
    %c1_60 = arith.constant 1 : index
    %c0_61 = arith.constant 0 : index
    %c0_62 = arith.constant 0 : index
    %121 = vector.load %arg5[%c1_60, %c0_61, %c0_62] : memref<2x128x384xf32, #tpu.memory_space<vmem>>, vector<1x128x384xf32>
    %122 = vector.shape_cast %121 : vector<1x128x384xf32> to vector<128x384xf32>
    %cst_63 = arith.constant dense<0.000000e+00> : vector<16x384xf32>
    %123 = tpu.matmul %120, %122, %cst_63 {dimension_numbers = #tpu.dot_dimension_numbers<[1], [0], [0], [1], [0, 0, 1, 1], [], []>} : vector<16x128xf32>, vector<128x384xf32>, vector<16x384xf32> -> vector<16x384xf32>
    %c1_64 = arith.constant 1 : index
    %c0_65 = arith.constant 0 : index
    %c0_66 = arith.constant 0 : index
    %124 = vector.load %arg6[%c1_64, %c0_65, %c0_66] : memref<2x1x384xf32, #tpu.memory_space<vmem>>, vector<1x1x384xf32>
    %125 = vector.shape_cast %124 : vector<1x1x384xf32> to vector<1x384xf32>
    %126 = vector.broadcast %125 : vector<1x384xf32> to vector<16x384xf32>
    %127 = arith.addf %123, %126 : vector<16x384xf32>
    %128 = vector.extract_strided_slice %127 {offsets = [0, 0], sizes = [16, 128], strides = [1, 1]} : vector<16x384xf32> to vector<16x128xf32>
    %129 = vector.extract_strided_slice %127 {offsets = [0, 128], sizes = [16, 128], strides = [1, 1]} : vector<16x384xf32> to vector<16x128xf32>
    %130 = vector.extract_strided_slice %127 {offsets = [0, 256], sizes = [16, 128], strides = [1, 1]} : vector<16x384xf32> to vector<16x128xf32>
    %131 = vector.shape_cast %128 : vector<16x128xf32> to vector<2x8x128xf32>
    %132 = vector.shape_cast %129 : vector<16x128xf32> to vector<2x1x8x128xf32>
    %133 = vector.broadcast %132 : vector<2x1x8x128xf32> to vector<2x8x8x128xf32>
    %134 = vector.broadcast %3 : vector<1x8x1x128xf32> to vector<2x8x8x128xf32>
    %135 = arith.mulf %133, %134 : vector<2x8x8x128xf32>
    %136 = vector.shape_cast %135 : vector<2x8x8x128xf32> to vector<2x64x128xf32>
    %137 = vector.shape_cast %130 : vector<16x128xf32> to vector<2x1x8x128xf32>
    %138 = vector.broadcast %137 : vector<2x1x8x128xf32> to vector<2x8x8x128xf32>
    %139 = vector.broadcast %3 : vector<1x8x1x128xf32> to vector<2x8x8x128xf32>
    %140 = arith.mulf %138, %139 : vector<2x8x8x128xf32>
    %141 = vector.shape_cast %140 : vector<2x8x8x128xf32> to vector<2x64x128xf32>
    "tpu.trace_start"() <{level = 10 : i32, message = "bqd,bnd->bqn"}> : () -> ()
    %cst_67 = arith.constant dense<0.000000e+00> : vector<2x8x64xf32>
    %142 = tpu.matmul %131, %136, %cst_67 {dimension_numbers = #tpu.dot_dimension_numbers<[2], [2], [1], [1], [0, 0, 0, 1, 1, 1], [0], [0]>} : vector<2x8x128xf32>, vector<2x64x128xf32>, vector<2x8x64xf32> -> vector<2x8x64xf32>
    "tpu.trace_stop"() : () -> ()
    %cst_68 = arith.constant 5.000000e-01 : f32
    %143 = vector.broadcast %cst_68 : f32 to vector<2x8x64xf32>
    %144 = arith.mulf %142, %143 : vector<2x8x64xf32>
    %145 = vector.shape_cast %0 : vector<8x64xf32> to vector<1x8x64xf32>
    %146 = vector.broadcast %145 : vector<1x8x64xf32> to vector<2x8x64xf32>
    %147 = arith.addf %144, %146 : vector<2x8x64xf32>
    %cst_69 = arith.constant dense<0xFF800000> : vector<2x8xf32>
    %148 = vector.multi_reduction <maximumf>, %147, %cst_69 [2] : vector<2x8x64xf32> to vector<2x8xf32>
    %149 = vector.shape_cast %148 : vector<2x8xf32> to vector<2x8x1xf32>
    %150 = vector.broadcast %149 : vector<2x8x1xf32> to vector<2x8x64xf32>
    %151 = arith.subf %147, %150 : vector<2x8x64xf32>
    %152 = math.exp %151 : vector<2x8x64xf32>
    %153 = vector.shape_cast %152 : vector<2x8x64xf32> to vector<16x64xf32>
    %cst_70 = arith.constant dense<0.000000e+00> : vector<16x64xf32>
    %154 = tpu.matmul %153, %1, %cst_70 {dimension_numbers = #tpu.dot_dimension_numbers<[1], [0], [0], [1], [0, 0, 1, 1], [], []>} : vector<16x64xf32>, vector<64x64xf32>, vector<16x64xf32> -> vector<16x64xf32>
    %155 = arith.divf %153, %154 : vector<16x64xf32>
    %156 = vector.shape_cast %155 : vector<16x64xf32> to vector<2x8x64xf32>
    "tpu.trace_start"() <{level = 10 : i32, message = "bqn,bnd->bqd"}> : () -> ()
    %cst_71 = arith.constant dense<0.000000e+00> : vector<2x8x128xf32>
    %157 = tpu.matmul %156, %141, %cst_71 {dimension_numbers = #tpu.dot_dimension_numbers<[2], [1], [1], [2], [0, 0, 0, 1, 1, 2], [0], [0]>} : vector<2x8x64xf32>, vector<2x64x128xf32>, vector<2x8x128xf32> -> vector<2x8x128xf32>
    "tpu.trace_stop"() : () -> ()
    %158 = vector.shape_cast %157 : vector<2x8x128xf32> to vector<16x128xf32>
    %c1_72 = arith.constant 1 : index
    %c0_73 = arith.constant 0 : index
    %c0_74 = arith.constant 0 : index
    %159 = vector.load %arg7[%c1_72, %c0_73, %c0_74] : memref<2x128x128xf32, #tpu.memory_space<vmem>>, vector<1x128x128xf32>
    %160 = vector.shape_cast %159 : vector<1x128x128xf32> to vector<128x128xf32>
    %cst_75 = arith.constant dense<0.000000e+00> : vector<16x128xf32>
    %161 = tpu.matmul %158, %160, %cst_75 {dimension_numbers = #tpu.dot_dimension_numbers<[1], [0], [0], [1], [0, 0, 1, 1], [], []>} : vector<16x128xf32>, vector<128x128xf32>, vector<16x128xf32> -> vector<16x128xf32>
    %c1_76 = arith.constant 1 : index
    %c0_77 = arith.constant 0 : index
    %c0_78 = arith.constant 0 : index
    %162 = vector.load %arg8[%c1_76, %c0_77, %c0_78] : memref<2x1x128xf32, #tpu.memory_space<vmem>>, vector<1x1x128xf32>
    %163 = vector.shape_cast %162 : vector<1x1x128xf32> to vector<1x128xf32>
    %164 = vector.broadcast %163 : vector<1x128xf32> to vector<16x128xf32>
    %165 = arith.addf %161, %164 : vector<16x128xf32>
    %166 = arith.addf %106, %165 : vector<16x128xf32>
    %c1_79 = arith.constant 1 : index
    %c0_80 = arith.constant 0 : index
    %c0_81 = arith.constant 0 : index
    %167 = vector.load %arg9[%c1_79, %c0_80, %c0_81] : memref<2x1x128xf32, #tpu.memory_space<vmem>>, vector<1x1x128xf32>
    %168 = vector.shape_cast %167 : vector<1x1x128xf32> to vector<1x128xf32>
    %169 = arith.mulf %166, %166 : vector<16x128xf32>
    %cst_82 = arith.constant dense<0.000000e+00> : vector<16xf32>
    %170 = vector.multi_reduction <add>, %169, %cst_82 [1] : vector<16x128xf32> to vector<16xf32>
    %171 = vector.shape_cast %170 : vector<16xf32> to vector<16x1xf32>
    %cst_83 = arith.constant 3.125000e-02 : f32
    %172 = vector.broadcast %cst_83 : f32 to vector<16x1xf32>
    %173 = arith.mulf %171, %172 : vector<16x1xf32>
    %cst_84 = arith.constant 9.99999997E-7 : f32
    %174 = vector.broadcast %cst_84 : f32 to vector<16x1xf32>
    %175 = arith.addf %173, %174 : vector<16x1xf32>
    %176 = math.rsqrt %175 : vector<16x1xf32>
    %177 = vector.broadcast %176 : vector<16x1xf32> to vector<16x128xf32>
    %178 = arith.mulf %166, %177 : vector<16x128xf32>
    %179 = vector.broadcast %168 : vector<1x128xf32> to vector<16x128xf32>
    %180 = arith.mulf %178, %179 : vector<16x128xf32>
    %c1_85 = arith.constant 1 : index
    %c0_86 = arith.constant 0 : index
    %c0_87 = arith.constant 0 : index
    %181 = vector.load %arg10[%c1_85, %c0_86, %c0_87] : memref<2x128x128xf32, #tpu.memory_space<vmem>>, vector<1x128x128xf32>
    %182 = vector.shape_cast %181 : vector<1x128x128xf32> to vector<128x128xf32>
    %cst_88 = arith.constant dense<0.000000e+00> : vector<16x128xf32>
    %183 = tpu.matmul %180, %182, %cst_88 {dimension_numbers = #tpu.dot_dimension_numbers<[1], [0], [0], [1], [0, 0, 1, 1], [], []>} : vector<16x128xf32>, vector<128x128xf32>, vector<16x128xf32> -> vector<16x128xf32>
    %c1_89 = arith.constant 1 : index
    %c0_90 = arith.constant 0 : index
    %c0_91 = arith.constant 0 : index
    %184 = vector.load %arg11[%c1_89, %c0_90, %c0_91] : memref<2x1x128xf32, #tpu.memory_space<vmem>>, vector<1x1x128xf32>
    %185 = vector.shape_cast %184 : vector<1x1x128xf32> to vector<1x128xf32>
    %186 = vector.broadcast %185 : vector<1x128xf32> to vector<16x128xf32>
    %187 = arith.addf %183, %186 : vector<16x128xf32>
    %cst_92 = arith.constant 5.000000e-01 : f32
    %188 = vector.broadcast %cst_92 : f32 to vector<16x128xf32>
    %189 = arith.mulf %188, %187 : vector<16x128xf32>
    %cst_93 = arith.constant 4.471500e-02 : f32
    %190 = vector.broadcast %cst_93 : f32 to vector<16x128xf32>
    %191 = arith.mulf %190, %187 : vector<16x128xf32>
    %192 = arith.mulf %191, %187 : vector<16x128xf32>
    %193 = arith.mulf %192, %187 : vector<16x128xf32>
    %194 = arith.addf %187, %193 : vector<16x128xf32>
    %cst_94 = arith.constant 0.797884583 : f32
    %195 = vector.broadcast %cst_94 : f32 to vector<16x128xf32>
    %196 = arith.mulf %195, %194 : vector<16x128xf32>
    %197 = math.tanh %196 : vector<16x128xf32>
    %cst_95 = arith.constant 1.000000e+00 : f32
    %198 = vector.broadcast %cst_95 : f32 to vector<16x128xf32>
    %199 = arith.addf %198, %197 : vector<16x128xf32>
    %200 = arith.mulf %189, %199 : vector<16x128xf32>
    %c1_96 = arith.constant 1 : index
    %c0_97 = arith.constant 0 : index
    %c0_98 = arith.constant 0 : index
    %201 = vector.load %arg12[%c1_96, %c0_97, %c0_98] : memref<2x128x128xf32, #tpu.memory_space<vmem>>, vector<1x128x128xf32>
    %202 = vector.shape_cast %201 : vector<1x128x128xf32> to vector<128x128xf32>
    %cst_99 = arith.constant dense<0.000000e+00> : vector<16x128xf32>
    %203 = tpu.matmul %200, %202, %cst_99 {dimension_numbers = #tpu.dot_dimension_numbers<[1], [0], [0], [1], [0, 0, 1, 1], [], []>} : vector<16x128xf32>, vector<128x128xf32>, vector<16x128xf32> -> vector<16x128xf32>
    %c1_100 = arith.constant 1 : index
    %c0_101 = arith.constant 0 : index
    %c0_102 = arith.constant 0 : index
    %204 = vector.load %arg13[%c1_100, %c0_101, %c0_102] : memref<2x1x128xf32, #tpu.memory_space<vmem>>, vector<1x1x128xf32>
    %205 = vector.shape_cast %204 : vector<1x1x128xf32> to vector<1x128xf32>
    %206 = vector.broadcast %205 : vector<1x128xf32> to vector<16x128xf32>
    %207 = arith.addf %203, %206 : vector<16x128xf32>
    %208 = arith.addf %166, %207 : vector<16x128xf32>
    %c0_103 = arith.constant 0 : index
    %c0_104 = arith.constant 0 : index
    %209 = vector.load %arg14[%c0_103, %c0_104] : memref<1x128xf32, #tpu.memory_space<vmem>>, vector<1x128xf32>
    %210 = arith.mulf %208, %208 : vector<16x128xf32>
    %cst_105 = arith.constant dense<0.000000e+00> : vector<16xf32>
    %211 = vector.multi_reduction <add>, %210, %cst_105 [1] : vector<16x128xf32> to vector<16xf32>
    %212 = vector.shape_cast %211 : vector<16xf32> to vector<16x1xf32>
    %cst_106 = arith.constant 3.125000e-02 : f32
    %213 = vector.broadcast %cst_106 : f32 to vector<16x1xf32>
    %214 = arith.mulf %212, %213 : vector<16x1xf32>
    %cst_107 = arith.constant 9.99999997E-7 : f32
    %215 = vector.broadcast %cst_107 : f32 to vector<16x1xf32>
    %216 = arith.addf %214, %215 : vector<16x1xf32>
    %217 = math.rsqrt %216 : vector<16x1xf32>
    %218 = vector.broadcast %217 : vector<16x1xf32> to vector<16x128xf32>
    %219 = arith.mulf %208, %218 : vector<16x128xf32>
    %220 = vector.broadcast %209 : vector<1x128xf32> to vector<16x128xf32>
    %221 = arith.mulf %219, %220 : vector<16x128xf32>
    %c0_108 = arith.constant 0 : index
    %c0_109 = arith.constant 0 : index
    %222 = vector.load %arg15[%c0_108, %c0_109] : memref<128x512xf32, #tpu.memory_space<vmem>>, vector<128x512xf32>
    %cst_110 = arith.constant dense<0.000000e+00> : vector<16x512xf32>
    %223 = tpu.matmul %221, %222, %cst_110 {dimension_numbers = #tpu.dot_dimension_numbers<[1], [0], [0], [1], [0, 0, 1, 1], [], []>} : vector<16x128xf32>, vector<128x512xf32>, vector<16x512xf32> -> vector<16x512xf32>
    %c0_111 = arith.constant 0 : index
    %c0_112 = arith.constant 0 : index
    %224 = vector.load %arg16[%c0_111, %c0_112] : memref<16x512xf32, #tpu.memory_space<vmem>>, vector<16x512xf32>
    tpu.vector_store %arg16[%c0_111, %c0_112], %223 {strides = array<i32>} : memref<16x512xf32, #tpu.memory_space<vmem>>, vector<16x512xf32>,
    return
  }
}

</mosaic_0001>

<llo_original>
// kernel: tpu_custom_call.1
$region0: #{tpu_custom_call.1}
  #allocation0 [shape = 'u32[]', space=smem, size = 0x4, offset = 0x4, fixed_abs, tag = 'smem constant byte address 0x4 - core index']
  #allocation1 [shape = 'u32[144,128]{1,0:T(1,128)}', space=vmem, size = 0x12000, scoped, tag = 'internal scratch']
  %s0 = inlined_call_operand.hbm [shape: f32[16,128], index: 0, kind: input, shape index: {}]
  %s1 = inlined_call_operand.hbm [shape: f32[8,64], index: 1, kind: input, shape index: {}]
  %s2 = inlined_call_operand.hbm [shape: f32[64,64], index: 2, kind: input, shape index: {}]
  %s3 = inlined_call_operand.vmem [shape: f32[8,128], index: 3, kind: input, shape index: {}]
  %s4 = inlined_call_operand.hbm [shape: f32[2,1,128], index: 4, kind: input, shape index: {}]
  %s5 = inlined_call_operand.hbm [shape: f32[2,128,384], index: 5, kind: input, shape index: {}]
  %s6 = inlined_call_operand.vmem [shape: f32[2,1,384], index: 6, kind: input, shape index: {}]
  %s7 = inlined_call_operand.hbm [shape: f32[2,128,128], index: 7, kind: input, shape index: {}]
  %s8 = inlined_call_operand.vmem [shape: f32[2,1,128], index: 8, kind: input, shape index: {}]
  %s9 = inlined_call_operand.vmem [shape: f32[2,1,128], index: 9, kind: input, shape index: {}]
  %s10 = inlined_call_operand.hbm [shape: f32[2,128,128], index: 10, kind: input, shape index: {}]
  %s11 = inlined_call_operand.vmem [shape: f32[2,1,128], index: 11, kind: input, shape index: {}]
  %s12 = inlined_call_operand.hbm [shape: f32[2,128,128], index: 12, kind: input, shape index: {}]
  %s13 = inlined_call_operand.vmem [shape: f32[2,1,128], index: 13, kind: input, shape index: {}]
  %s14 = inlined_call_operand.vmem [shape: f32[1,128], index: 14, kind: input, shape index: {}]
  %s15 = inlined_call_operand.hbm [shape: f32[128,512], index: 15, kind: input, shape index: {}]
  %s16 = inlined_call_operand.hbm [shape: f32[16,512], index: 16, kind: output, shape index: {}]
  %s17 = sld [smem:[#allocation0]]
  $region110: #{tpu_custom_call.1} parent=0
    _
  %s19 = ssub.s32 1, %s17
  %s20 = scalar_select 0, %s19, %s17
  $region1: #{tpu_custom_call.1} parent=0
    #allocation2 [shape = 'u8[8192]{0}', space=vmem, size = 0x2000, scoped, tag = 'input window, operand 0, single buffered']
    #allocation3 [shape = 's32[1]{0}', space=sflag, size = 0x4, scoped, tag = 'scoped memory for tpu_custom_call.1']
    #allocation4 [shape = 's32[1]{0}', space=sflag, size = 0x4, scoped, tag = 'scoped memory for tpu_custom_call.1']
    #allocation5 [shape = 'u8[4096]{0}', space=vmem, size = 0x1000, scoped, tag = 'input window, operand 1, single buffered']
    #allocation6 [shape = 's32[1]{0}', space=sflag, size = 0x4, scoped, tag = 'scoped memory for tpu_custom_call.1']
    #allocation7 [shape = 'u8[32768]{0}', space=vmem, size = 0x8000, scoped, tag = 'input window, operand 2, single buffered']
    #allocation8 [shape = 'u8[1024]{0}', space=vmem, size = 0x400, scoped, tag = 'input window, operand 4, single buffered']
    #allocation9 [shape = 's32[1]{0}', space=sflag, size = 0x4, scoped, tag = 'scoped memory for tpu_custom_call.1']
    #allocation10 [shape = 'u8[393216]{0}', space=vmem, size = 0x60000, scoped, tag = 'input window, operand 5, single buffered']
    #allocation11 [shape = 'u8[131072]{0}', space=vmem, size = 0x20000, scoped, tag = 'input window, operand 7, single buffered']
    #allocation12 [shape = 's32[1]{0}', space=sflag, size = 0x4, scoped, tag = 'scoped memory for tpu_custom_call.1']
    #allocation13 [shape = 'u8[131072]{0}', space=vmem, size = 0x20000, scoped, tag = 'input window, operand 10, single buffered']
    #allocation14 [shape = 'u8[131072]{0}', space=vmem, size = 0x20000, scoped, tag = 'input window, operand 12, single buffered']
    #allocation15 [shape = 's32[1]{0}', space=sflag, size = 0x4, scoped, tag = 'scoped memory for tpu_custom_call.1']
    #allocation16 [shape = 'u8[262144]{0}', space=vmem, size = 0x40000, scoped, tag = 'input window, operand 15, single buffered']
    #allocation17 [shape = 'u8[32768]{0}', space=vmem, size = 0x8000, scoped, tag = 'output window, operand 0, single buffered']
    %21 = vsyncpa [#allocation3], 0
    %22 = vsyncpa [#allocation6], 0
    %23 = vsyncpa [#allocation9], 0
    %24 = vsyncpa [#allocation12], 0
    %25 = vsyncpa [#allocation15], 0
    %26 = vsyncpa [#allocation4], 0
    // Predicated region
    $region2: #{tpu_custom_call.1} parent=1 // pred_check
      _
    $region3: #{tpu_custom_call.1} parent=1 // pred_check_branch
      %28 = sbr.rel (0) target = $region5
    $region4: #{tpu_custom_call.1} parent=1 // pred_region
      %s30 = ssub.s32 256, 256
      %31 = vsyncadd [#allocation3], %s30
      %s32 = sshll.u32 [#allocation2], 4
      %s33 = int_to_ptr.vmem [resolvable:$true] %s32
      %38 = dma.hbm_to_vmem [thread:$0]  %s0, 256, %s33, [#allocation3], 128, 128, 8
    $region5: #{tpu_custom_call.1} parent=1 // pred_fallthru
      _
    // Predicated region
    $region6: #{tpu_custom_call.1} parent=1 // pred_check
      _
    $region7: #{tpu_custom_call.1} parent=1 // pred_check_branch
      %40 = sbr.rel (0) target = $region9
    $region8: #{tpu_custom_call.1} parent=1 // pred_region
      %s42 = ssub.s32 128, 128
      %43 = vsyncadd [#allocation6], %s42
      %s45 = sshll.u32 [#allocation5], 4
      %s46 = int_to_ptr.vmem [resolvable:$true] %s45
      %48 = dma.hbm_to_vmem [thread:$0]  %s1, 128, %s46, [#allocation6]
    $region9: #{tpu_custom_call.1} parent=1 // pred_fallthru
      _
    // Predicated region
    $region10: #{tpu_custom_call.1} parent=1 // pred_check
      _
    $region11: #{tpu_custom_call.1} parent=1 // pred_check_branch
      %50 = sbr.rel (0) target = $region13
    $region12: #{tpu_custom_call.1} parent=1 // pred_region
      %s52 = ssub.s32 1024, 1024
      %53 = vsyncadd [#allocation6], %s52
      %s54 = sshll.u32 [#allocation7], 4
      %s55 = int_to_ptr.vmem [resolvable:$true] %s54
      %60 = dma.hbm_to_vmem [thread:$0]  %s2, 1024, %s55, [#allocation6], 128, 128, 8
    $region13: #{tpu_custom_call.1} parent=1 // pred_fallthru
      _
    // Predicated region
    $region14: #{tpu_custom_call.1} parent=1 // pred_check
      _
    $region15: #{tpu_custom_call.1} parent=1 // pred_check_branch
      %62 = sbr.rel (0) target = $region17
    $region16: #{tpu_custom_call.1} parent=1 // pred_region
      _
    $region17: #{tpu_custom_call.1} parent=1 // pred_fallthru
      _
    // Predicated region
    $region18: #{tpu_custom_call.1} parent=1 // pred_check
      _
    $region19: #{tpu_custom_call.1} parent=1 // pred_check_branch
      %64 = sbr.rel (0) target = $region21
    $region20: #{tpu_custom_call.1} parent=1 // pred_region
      %s66 = ssub.s32 32, 32
      %67 = vsyncadd [#allocation9], %s66
      %s68 = sshll.u32 [#allocation8], 4
      %s69 = int_to_ptr.vmem [resolvable:$true] %s68
      %74 = dma.hbm_to_vmem [thread:$0]  %s4, 32, %s69, [#allocation9], 16, 16, 1
    $region21: #{tpu_custom_call.1} parent=1 // pred_fallthru
      _
    // Predicated region
    $region22: #{tpu_custom_call.1} parent=1 // pred_check
      _
    $region23: #{tpu_custom_call.1} parent=1 // pred_check_branch
      %76 = sbr.rel (0) target = $region25
    $region24: #{tpu_custom_call.1} parent=1 // pred_region
      %s78 = ssub.s32 12288, 12288
      %79 = vsyncadd [#allocation9], %s78
      %s80 = sshll.u32 [#allocation10], 4
      %s81 = int_to_ptr.vmem [resolvable:$true] %s80
      %86 = dma.hbm_to_vmem [thread:$0]  %s5, 12288, %s81, [#allocation9], 384, 384, 24
    $region25: #{tpu_custom_call.1} parent=1 // pred_fallthru
      _
    // Predicated region
    $region26: #{tpu_custom_call.1} parent=1 // pred_check
      _
    $region27: #{tpu_custom_call.1} parent=1 // pred_check_branch
      %88 = sbr.rel (0) target = $region29
    $region28: #{tpu_custom_call.1} parent=1 // pred_region
      _
    $region29: #{tpu_custom_call.1} parent=1 // pred_fallthru
      _
    // Predicated region
    $region30: #{tpu_custom_call.1} parent=1 // pred_check
      _
    $region31: #{tpu_custom_call.1} parent=1 // pred_check_branch
      %90 = sbr.rel (0) target = $region33
    $region32: #{tpu_custom_call.1} parent=1 // pred_region
      %s92 = ssub.s32 4096, 4096
      %93 = vsyncadd [#allocation12], %s92
      %s94 = sshll.u32 [#allocation11], 4
      %s95 = int_to_ptr.vmem [resolvable:$true] %s94
      %100 = dma.hbm_to_vmem [thread:$0]  %s7, 4096, %s95, [#allocation12], 128, 128, 8
    $region33: #{tpu_custom_call.1} parent=1 // pred_fallthru
      _
    // Predicated region
    $region34: #{tpu_custom_call.1} parent=1 // pred_check
      _
    $region35: #{tpu_custom_call.1} parent=1 // pred_check_branch
      %102 = sbr.rel (0) target = $region37
    $region36: #{tpu_custom_call.1} parent=1 // pred_region
      _
    $region37: #{tpu_custom_call.1} parent=1 // pred_fallthru
      _
    // Predicated region
    $region38: #{tpu_custom_call.1} parent=1 // pred_check
      _
    $region39: #{tpu_custom_call.1} parent=1 // pred_check_branch
      %104 = sbr.rel (0) target = $region41
    $region40: #{tpu_custom_call.1} parent=1 // pred_region
      _
    $region41: #{tpu_custom_call.1} parent=1 // pred_fallthru
      _
    // Predicated region
    $region42: #{tpu_custom_call.1} parent=1 // pred_check
      _
    $region43: #{tpu_custom_call.1} parent=1 // pred_check_branch
      %106 = sbr.rel (0) target = $region45
    $region44: #{tpu_custom_call.1} parent=1 // pred_region
      %s108 = ssub.s32 4096, 4096
      %109 = vsyncadd [#allocation12], %s108
      %s110 = sshll.u32 [#allocation13], 4
      %s111 = int_to_ptr.vmem [resolvable:$true] %s110
      %116 = dma.hbm_to_vmem [thread:$0]  %s10, 4096, %s111, [#allocation12], 128, 128, 8
    $region45: #{tpu_custom_call.1} parent=1 // pred_fallthru
      _
    // Predicated region
    $region46: #{tpu_custom_call.1} parent=1 // pred_check
      _
    $region47: #{tpu_custom_call.1} parent=1 // pred_check_branch
      %118 = sbr.rel (0) target = $region49
    $region48: #{tpu_custom_call.1} parent=1 // pred_region
      _
    $region49: #{tpu_custom_call.1} parent=1 // pred_fallthru
      _
    // Predicated region
    $region50: #{tpu_custom_call.1} parent=1 // pred_check
      _
    $region51: #{tpu_custom_call.1} parent=1 // pred_check_branch
      %120 = sbr.rel (0) target = $region53
    $region52: #{tpu_custom_call.1} parent=1 // pred_region
      %s122 = ssub.s32 4096, 4096
      %123 = vsyncadd [#allocation15], %s122
      %s124 = sshll.u32 [#allocation14], 4
      %s125 = int_to_ptr.vmem [resolvable:$true] %s124
      %130 = dma.hbm_to_vmem [thread:$0]  %s12, 4096, %s125, [#allocation15], 128, 128, 8
    $region53: #{tpu_custom_call.1} parent=1 // pred_fallthru
      _
    // Predicated region
    $region54: #{tpu_custom_call.1} parent=1 // pred_check
      _
    $region55: #{tpu_custom_call.1} parent=1 // pred_check_branch
      %132 = sbr.rel (0) target = $region57
    $region56: #{tpu_custom_call.1} parent=1 // pred_region
      _
    $region57: #{tpu_custom_call.1} parent=1 // pred_fallthru
      _
    // Predicated region
    $region58: #{tpu_custom_call.1} parent=1 // pred_check
      _
    $region59: #{tpu_custom_call.1} parent=1 // pred_check_branch
      %134 = sbr.rel (0) target = $region61
    $region60: #{tpu_custom_call.1} parent=1 // pred_region
      _
    $region61: #{tpu_custom_call.1} parent=1 // pred_fallthru
      _
    // Predicated region
    $region62: #{tpu_custom_call.1} parent=1 // pred_check
      _
    $region63: #{tpu_custom_call.1} parent=1 // pred_check_branch
      %136 = sbr.rel (0) target = $region65
    $region64: #{tpu_custom_call.1} parent=1 // pred_region
      %s138 = ssub.s32 8192, 8192
      %139 = vsyncadd [#allocation15], %s138
      %s140 = sshll.u32 [#allocation16], 4
      %s141 = int_to_ptr.vmem [resolvable:$true] %s140
      %146 = dma.hbm_to_vmem [thread:$0]  %s15, 8192, %s141, [#allocation15], 512, 512, 32
    $region65: #{tpu_custom_call.1} parent=1 // pred_fallthru
      _
    // Predicated region
    $region66: #{tpu_custom_call.1} parent=1 // pred_check
      _
    $region67: #{tpu_custom_call.1} parent=1 // pred_check_branch
      %148 = sbr.rel (0) target = $region69
    $region68: #{tpu_custom_call.1} parent=1 // pred_region
      %149 = dma.done [#allocation3], 256
    $region69: #{tpu_custom_call.1} parent=1 // pred_fallthru
      _
    // Predicated region
    $region70: #{tpu_custom_call.1} parent=1 // pred_check
      _
    $region71: #{tpu_custom_call.1} parent=1 // pred_check_branch
      %151 = sbr.rel (0) target = $region73
    $region72: #{tpu_custom_call.1} parent=1 // pred_region
      %152 = dma.done [#allocation6], 128
    $region73: #{tpu_custom_call.1} parent=1 // pred_fallthru
      _
    // Predicated region
    $region74: #{tpu_custom_call.1} parent=1 // pred_check
      _
    $region75: #{tpu_custom_call.1} parent=1 // pred_check_branch
      %154 = sbr.rel (0) target = $region77
    $region76: #{tpu_custom_call.1} parent=1 // pred_region
      %155 = dma.done [#allocation6], 1024
    $region77: #{tpu_custom_call.1} parent=1 // pred_fallthru
      _
    // Predicated region
    $region78: #{tpu_custom_call.1} parent=1 // pred_check
      _
    $region79: #{tpu_custom_call.1} parent=1 // pred_check_branch
      %157 = sbr.rel (0) target = $region81
    $region80: #{tpu_custom_call.1} parent=1 // pred_region
      %158 = dma.done [#allocation9], 32
    $region81: #{tpu_custom_call.1} parent=1 // pred_fallthru
      _
    // Predicated region
    $region82: #{tpu_custom_call.1} parent=1 // pred_check
      _
    $region83: #{tpu_custom_call.1} parent=1 // pred_check_branch
      %160 = sbr.rel (0) target = $region85
    $region84: #{tpu_custom_call.1} parent=1 // pred_region
      %161 = dma.done [#allocation9], 12288
    $region85: #{tpu_custom_call.1} parent=1 // pred_fallthru
      _
    // Predicated region
    $region86: #{tpu_custom_call.1} parent=1 // pred_check
      _
    $region87: #{tpu_custom_call.1} parent=1 // pred_check_branch
      %163 = sbr.rel (0) target = $region89
    $region88: #{tpu_custom_call.1} parent=1 // pred_region
      %164 = dma.done [#allocation12], 4096
    $region89: #{tpu_custom_call.1} parent=1 // pred_fallthru
      _
    // Predicated region
    $region90: #{tpu_custom_call.1} parent=1 // pred_check
      _
    $region91: #{tpu_custom_call.1} parent=1 // pred_check_branch
      %166 = sbr.rel (0) target = $region93
    $region92: #{tpu_custom_call.1} parent=1 // pred_region
      %167 = dma.done [#allocation12], 4096
    $region93: #{tpu_custom_call.1} parent=1 // pred_fallthru
      _
    // Predicated region
    $region94: #{tpu_custom_call.1} parent=1 // pred_check
      _
    $region95: #{tpu_custom_call.1} parent=1 // pred_check_branch
      %169 = sbr.rel (0) target = $region97
    $region96: #{tpu_custom_call.1} parent=1 // pred_region
      %170 = dma.done [#allocation15], 4096
    $region97: #{tpu_custom_call.1} parent=1 // pred_fallthru
      _
    // Predicated region
    $region98: #{tpu_custom_call.1} parent=1 // pred_check
      _
    $region99: #{tpu_custom_call.1} parent=1 // pred_check_branch
      %172 = sbr.rel (0) target = $region101
    $region100: #{tpu_custom_call.1} parent=1 // pred_region
      %173 = dma.done [#allocation15], 8192
    $region101: #{tpu_custom_call.1} parent=1 // pred_fallthru
      _
    %v174 = vld [vmem:[#allocation5] sm:$0xff]
    %v175 = vld [vmem:[#allocation7] sm:$0xff]
    %v176 = vld [vmem:[#allocation7 + $0x8] sm:$0xff]
    %v177 = vld [vmem:[#allocation7 + $0x10] sm:$0xff]
    %v178 = vld [vmem:[#allocation7 + $0x18] sm:$0xff]
    %v179 = vld [vmem:[#allocation7 + $0x20] sm:$0xff]
    %v180 = vld [vmem:[#allocation7 + $0x28] sm:$0xff]
    %v181 = vld [vmem:[#allocation7 + $0x30] sm:$0xff]
    %v182 = vld [vmem:[#allocation7 + $0x38] sm:$0xff]
    %v183 = vld [vmem:[%s3] sm:$0xff]
    %v185 = vcombine.high %v183, %v183
    %v187 = vunpack.c.l.s4 1966171168
    %v188 = vunpack.c.0.s8 %v187
    %v189 = vlaneseq
    %v190 = vshrl.u32 %v189, 7
    %v191 = vsub.s32 %v188, %v190
    %v192 = vrot.slane %v183, %v191
    %v194 = vunpack.c.l.s4 1966171168
    %v195 = vunpack.c.0.s8 %v194
    %v196 = vlaneseq
    %v197 = vshrl.u32 %v196, 7
    %v198 = vsub.s32 %v195, %v197
    %v199 = vrot.slane %v185, %v198
    %v200 = vcombine.high %v192, %v192
    %v201 = vcombine.high %v199, %v199
    %v203 = vunpack.c.l.s4 1966171168
    %v204 = vunpack.c.0.s8 %v203
    %v205 = vlaneseq
    %v206 = vshrl.u32 %v205, 7
    %v207 = vsub.s32 %v204, %v206
    %v208 = vrot.slane %v192, %v207
    %v210 = vunpack.c.l.s4 1966171168
    %v211 = vunpack.c.0.s8 %v210
    %v212 = vlaneseq
    %v213 = vshrl.u32 %v212, 7
    %v214 = vsub.s32 %v211, %v213
    %v215 = vrot.slane %v199, %v214
    %v217 = vunpack.c.l.s4 1966171168
    %v218 = vunpack.c.0.s8 %v217
    %v219 = vlaneseq
    %v220 = vshrl.u32 %v219, 7
    %v221 = vsub.s32 %v218, %v220
    %v222 = vrot.slane %v200, %v221
    %v224 = vunpack.c.l.s4 1966171168
    %v225 = vunpack.c.0.s8 %v224
    %v226 = vlaneseq
    %v227 = vshrl.u32 %v226, 7
    %v228 = vsub.s32 %v225, %v227
    %v229 = vrot.slane %v201, %v228
    %v230 = vcombine.high %v208, %v208
    %v231 = vcombine.high %v215, %v215
    %v232 = vcombine.high %v222, %v222
    %v233 = vcombine.high %v229, %v229
    %v234 = vld [vmem:[#allocation2] sm:$0xff]
    %v235 = vld [vmem:[#allocation2 + $0x8] sm:$0xff]
    %v236 = vld [vmem:[#allocation8] sm:$0x1]
    %v237 = vmul.f32 %v234, %v234
    %v238 = vmul.f32 %v235, %v235
    %239 = vadd.xlane.f32.xlu0 %v237
    %v240 = vpop.xlane.xlu0 %239
    %241 = vadd.xlane.f32.xlu0 %v238
    %v242 = vpop.xlane.xlu0 %241
    %v243 = vmul.f32 %v240, 0.03125
    %v244 = vmul.f32 %v242, 0.03125
    %v245 = vadd.f32 %v243, 1e-06
    %v246 = vadd.f32 %v244, 1e-06
    %v247 = vrsqrt.pop %v245
    %v248 = vrsqrt.pop %v246
    %v249 = vmul.f32 %v234, %v247
    %v250 = vmul.f32 %v235, %v248
    %v252 = vlaneseq
    %v253 = vshrl.u32 %v252, 7
    %v254 = vsub.s32 0, %v253
    %v255 = vrot.slane %v236, %v254
    %v257 = vmul.f32 %v249, %v255
    %v258 = vmul.f32 %v250, %v255
    %v259 = vld [vmem:[#allocation10] sm:$0xff]
    %v260 = vld [vmem:[#allocation10 + $0x8] sm:$0xff]
    %v261 = vld [vmem:[#allocation10 + $0x10] sm:$0xff]
    %v262 = vld [vmem:[#allocation10 + $0x18] sm:$0xff]
    %v263 = vld [vmem:[#allocation10 + $0x20] sm:$0xff]
    %v264 = vld [vmem:[#allocation10 + $0x28] sm:$0xff]
    %v265 = vld [vmem:[#allocation10 + $0x30] sm:$0xff]
    %v266 = vld [vmem:[#allocation10 + $0x38] sm:$0xff]
    %v267 = vld [vmem:[#allocation10 + $0x40] sm:$0xff]
    %v268 = vld [vmem:[#allocation10 + $0x48] sm:$0xff]
    %v269 = vld [vmem:[#allocation10 + $0x50] sm:$0xff]
    %v270 = vld [vmem:[#allocation10 + $0x58] sm:$0xff]
    %v271 = vld [vmem:[#allocation10 + $0x60] sm:$0xff]
    %v272 = vld [vmem:[#allocation10 + $0x68] sm:$0xff]
    %v273 = vld [vmem:[#allocation10 + $0x70] sm:$0xff]
    %v274 = vld [vmem:[#allocation10 + $0x78] sm:$0xff]
    %v275 = vld [vmem:[#allocation10 + $0x80] sm:$0xff]
    %v276 = vld [vmem:[#allocation10 + $0x88] sm:$0xff]
    %v277 = vld [vmem:[#allocation10 + $0x90] sm:$0xff]
    %v278 = vld [vmem:[#allocation10 + $0x98] sm:$0xff]
    %v279 = vld [vmem:[#allocation10 + $0xa0] sm:$0xff]
    %v280 = vld [vmem:[#allocation10 + $0xa8] sm:$0xff]
    %v281 = vld [vmem:[#allocation10 + $0xb0] sm:$0xff]
    %v282 = vld [vmem:[#allocation10 + $0xb8] sm:$0xff]
    %v283 = vld [vmem:[#allocation10 + $0xc0] sm:$0xff]
    %v284 = vld [vmem:[#allocation10 + $0xc8] sm:$0xff]
    %v285 = vld [vmem:[#allocation10 + $0xd0] sm:$0xff]
    %v286 = vld [vmem:[#allocation10 + $0xd8] sm:$0xff]
    %v287 = vld [vmem:[#allocation10 + $0xe0] sm:$0xff]
    %v288 = vld [vmem:[#allocation10 + $0xe8] sm:$0xff]
    %v289 = vld [vmem:[#allocation10 + $0xf0] sm:$0xff]
    %v290 = vld [vmem:[#allocation10 + $0xf8] sm:$0xff]
    %v291 = vld [vmem:[#allocation10 + $0x100] sm:$0xff]
    %v292 = vld [vmem:[#allocation10 + $0x108] sm:$0xff]
    %v293 = vld [vmem:[#allocation10 + $0x110] sm:$0xff]
    %v294 = vld [vmem:[#allocation10 + $0x118] sm:$0xff]
    %v295 = vld [vmem:[#allocation10 + $0x120] sm:$0xff]
    %v296 = vld [vmem:[#allocation10 + $0x128] sm:$0xff]
    %v297 = vld [vmem:[#allocation10 + $0x130] sm:$0xff]
    %v298 = vld [vmem:[#allocation10 + $0x138] sm:$0xff]
    %v299 = vld [vmem:[#allocation10 + $0x140] sm:$0xff]
    %v300 = vld [vmem:[#allocation10 + $0x148] sm:$0xff]
    %v301 = vld [vmem:[#allocation10 + $0x150] sm:$0xff]
    %v302 = vld [vmem:[#allocation10 + $0x158] sm:$0xff]
    %v303 = vld [vmem:[#allocation10 + $0x160] sm:$0xff]
    %v304 = vld [vmem:[#allocation10 + $0x168] sm:$0xff]
    %v305 = vld [vmem:[#allocation10 + $0x170] sm:$0xff]
    %v306 = vld [vmem:[#allocation10 + $0x178] sm:$0xff]
    %v307 = vld [vmem:[%s6] sm:$0x7]
    %v309 = vlaneseq
    %v310 = vshrl.u32 %v309, 7
    %v311 = vsub.s32 0, %v310
    %v312 = vrot.slane %v307, %v311
    %v313 = vlaneseq
    %v314 = vshrl.u32 %v313, 7
    %v315 = vsub.s32 1, %v314
    %v316 = vrot.slane %v307, %v315
    %v317 = vlaneseq
    %v318 = vshrl.u32 %v317, 7
    %v319 = vsub.s32 2, %v318
    %v320 = vrot.slane %v307, %v319
    %324 = vmatprep.subr.mxu0 %v260
    %325 = vmatpush1.msra.mxu0 %v259
    %326 = vmatprep.subr.mxu0 %v263
    %327 = vmatpush1.msra.mxu0 %v262
    %328 = vmatprep.subr.mxu0 %v266
    %329 = vmatpush1.msra.mxu0 %v265
    %330 = vmatprep.subr.mxu0 %v269
    %331 = vmatpush1.msra.mxu0 %v268
    %332 = vmatprep.subr.mxu0 %v272
    %333 = vmatpush1.msra.mxu0 %v271
    %334 = vmatprep.subr.mxu0 %v275
    %335 = vmatpush1.msra.mxu0 %v274
    %336 = vmatprep.subr.mxu0 %v278
    %337 = vmatpush1.msra.mxu0 %v277
    %338 = vmatprep.subr.mxu0 %v281
    %339 = vmatpush1.msra.mxu0 %v280
    %340 = vmatprep.subr.mxu0 %v284
    %341 = vmatpush1.msra.mxu0 %v283
    %342 = vmatprep.subr.mxu0 %v287
    %343 = vmatpush1.msra.mxu0 %v286
    %344 = vmatprep.subr.mxu0 %v290
    %345 = vmatpush1.msra.mxu0 %v289
    %346 = vmatprep.subr.mxu0 %v293
    %347 = vmatpush1.msra.mxu0 %v292
    %348 = vmatprep.subr.mxu0 %v296
    %349 = vmatpush1.msra.mxu0 %v295
    %350 = vmatprep.subr.mxu0 %v299
    %351 = vmatpush1.msra.mxu0 %v298
    %352 = vmatprep.subr.mxu0 %v302
    %353 = vmatpush1.msra.mxu0 %v301
    %354 = vmatprep.subr.mxu0 %v305
    %355 = vmatpush1.msra.mxu0 %v304
    %356 = vmatprep.subr.mxu0 0.0
    %357 = vmatpush1.msra.mxu0 0.0
    %358 = vmatprep.subr.mxu0 0.0
    %359 = vmatpush1.msra.mxu0 0.0
    %360 = vmatprep.subr.mxu0 0.0
    %361 = vmatpush1.msra.mxu0 0.0
    %362 = vmatprep.subr.mxu0 0.0
    %363 = vmatpush1.msra.mxu0 0.0
    %364 = vmatprep.subr.mxu0 0.0
    %365 = vmatpush1.msra.mxu0 0.0
    %366 = vmatprep.subr.mxu0 0.0
    %367 = vmatpush1.msra.mxu0 0.0
    %368 = vmatprep.subr.mxu0 0.0
    %369 = vmatpush1.msra.mxu0 0.0
    %370 = vmatprep.subr.mxu0 0.0
    %371 = vmatpush1.msra.mxu0 0.0
    %372 = vmatprep.subr.mxu0 0.0
    %373 = vmatpush1.msra.mxu0 0.0
    %374 = vmatprep.subr.mxu0 0.0
    %375 = vmatpush1.msra.mxu0 0.0
    %376 = vmatprep.subr.mxu0 0.0
    %377 = vmatpush1.msra.mxu0 0.0
    %378 = vmatprep.subr.mxu0 0.0
    %379 = vmatpush1.msra.mxu0 0.0
    %380 = vmatprep.subr.mxu0 0.0
    %381 = vmatpush1.msra.mxu0 0.0
    %382 = vmatprep.subr.mxu0 0.0
    %383 = vmatpush1.msra.mxu0 0.0
    %384 = vmatprep.subr.mxu0 0.0
    %385 = vmatpush1.msra.mxu0 0.0
    %386 = vmatprep.subr.mxu0 0.0
    %387 = vmatpush1.msra.mxu0 0.0
    %388 = vmatprep.mubr.f32.mxu0 0.0
    %389 = vmatmul.mubr.f32.gmra.mrb[0].mxu0 %v257
    %v390 = vpop.f32.mrb[0].mxu0
    %v391 = vadd.f32 %v312, %v390
    %v392 = vpop.f32.mrb[0].mxu0
    %v393 = vadd.f32 %v316, %v392
    %394 = vmatprep.mubr.f32.mxu0 0.0
    %395 = vmatmul.mubr.f32.gmra.mrb[0].mxu0 %v258
    %v396 = vpop.f32.mrb[0].mxu0
    %v397 = vadd.f32 %v312, %v396
    %v398 = vpop.f32.mrb[0].mxu0
    %v399 = vadd.f32 %v316, %v398
    %400 = vdwg.mxu0
    %401 = vmatprep.subr.mxu0 0.0
    %402 = vmatpush1.msra.mxu0 %v261
    %403 = vmatprep.subr.mxu0 0.0
    %404 = vmatpush1.msra.mxu0 %v264
    %405 = vmatprep.subr.mxu0 0.0
    %406 = vmatpush1.msra.mxu0 %v267
    %407 = vmatprep.subr.mxu0 0.0
    %408 = vmatpush1.msra.mxu0 %v270
    %409 = vmatprep.subr.mxu0 0.0
    %410 = vmatpush1.msra.mxu0 %v273
    %411 = vmatprep.subr.mxu0 0.0
    %412 = vmatpush1.msra.mxu0 %v276
    %413 = vmatprep.subr.mxu0 0.0
    %414 = vmatpush1.msra.mxu0 %v279
    %415 = vmatprep.subr.mxu0 0.0
    %416 = vmatpush1.msra.mxu0 %v282
    %417 = vmatprep.subr.mxu0 0.0
    %418 = vmatpush1.msra.mxu0 %v285
    %419 = vmatprep.subr.mxu0 0.0
    %420 = vmatpush1.msra.mxu0 %v288
    %421 = vmatprep.subr.mxu0 0.0
    %422 = vmatpush1.msra.mxu0 %v291
    %423 = vmatprep.subr.mxu0 0.0
    %424 = vmatpush1.msra.mxu0 %v294
    %425 = vmatprep.subr.mxu0 0.0
    %426 = vmatpush1.msra.mxu0 %v297
    %427 = vmatprep.subr.mxu0 0.0
    %428 = vmatpush1.msra.mxu0 %v300
    %429 = vmatprep.subr.mxu0 0.0
    %430 = vmatpush1.msra.mxu0 %v303
    %431 = vmatprep.subr.mxu0 0.0
    %432 = vmatpush1.msra.mxu0 %v306
    %433 = vmatprep.subr.mxu0 0.0
    %434 = vmatpush1.msra.mxu0 0.0
    %435 = vmatprep.subr.mxu0 0.0
    %436 = vmatpush1.msra.mxu0 0.0
    %437 = vmatprep.subr.mxu0 0.0
    %438 = vmatpush1.msra.mxu0 0.0
    %439 = vmatprep.subr.mxu0 0.0
    %440 = vmatpush1.msra.mxu0 0.0
    %441 = vmatprep.subr.mxu0 0.0
    %442 = vmatpush1.msra.mxu0 0.0
    %443 = vmatprep.subr.mxu0 0.0
    %444 = vmatpush1.msra.mxu0 0.0
    %445 = vmatprep.subr.mxu0 0.0
    %446 = vmatpush1.msra.mxu0 0.0
    %447 = vmatprep.subr.mxu0 0.0
    %448 = vmatpush1.msra.mxu0 0.0
    %449 = vmatprep.subr.mxu0 0.0
    %450 = vmatpush1.msra.mxu0 0.0
    %451 = vmatprep.subr.mxu0 0.0
    %452 = vmatpush1.msra.mxu0 0.0
    %453 = vmatprep.subr.mxu0 0.0
    %454 = vmatpush1.msra.mxu0 0.0
    %455 = vmatprep.subr.mxu0 0.0
    %456 = vmatpush1.msra.mxu0 0.0
    %457 = vmatprep.subr.mxu0 0.0
    %458 = vmatpush1.msra.mxu0 0.0
    %459 = vmatprep.subr.mxu0 0.0
    %460 = vmatpush1.msra.mxu0 0.0
    %461 = vmatprep.subr.mxu0 0.0
    %462 = vmatpush1.msra.mxu0 0.0
    %463 = vmatprep.subr.mxu0 0.0
    %464 = vmatpush1.msra.mxu0 0.0
    %465 = vmatprep.mubr.f32.mxu0 0.0
    %466 = vmatmul.mubr.f32.gmra.mrb[0].mxu0 %v257
    %v467 = vpop.f32.mrb[0].mxu0
    %v468 = vadd.f32 %v320, %v467
    %v469 = vpop.f32.mrb[0].mxu0
    %470 = vmatprep.mubr.f32.mxu0 0.0
    %471 = vmatmul.mubr.f32.gmra.mrb[0].mxu0 %v258
    %v472 = vpop.f32.mrb[0].mxu0
    %v473 = vadd.f32 %v320, %v472
    %v474 = vpop.f32.mrb[0].mxu0
    %475 = vdwg.mxu0
    %v476 = vlaneseq
    %v477 = vshrl.u32 %v476, 7
    %v478 = vsub.s32 0, %v477
    %v479 = vrot.slane %v208, %v478
    %v480 = vlaneseq
    %v481 = vshrl.u32 %v480, 7
    %v482 = vsub.s32 0, %v481
    %v483 = vrot.slane %v222, %v482
    %v484 = vlaneseq
    %v485 = vshrl.u32 %v484, 7
    %v486 = vsub.s32 0, %v485
    %v487 = vrot.slane %v230, %v486
    %v488 = vlaneseq
    %v489 = vshrl.u32 %v488, 7
    %v490 = vsub.s32 0, %v489
    %v491 = vrot.slane %v232, %v490
    %v492 = vlaneseq
    %v493 = vshrl.u32 %v492, 7
    %v494 = vsub.s32 0, %v493
    %v495 = vrot.slane %v215, %v494
    %v496 = vlaneseq
    %v497 = vshrl.u32 %v496, 7
    %v498 = vsub.s32 0, %v497
    %v499 = vrot.slane %v229, %v498
    %v500 = vlaneseq
    %v501 = vshrl.u32 %v500, 7
    %v502 = vsub.s32 0, %v501
    %v503 = vrot.slane %v231, %v502
    %v504 = vlaneseq
    %v505 = vshrl.u32 %v504, 7
    %v506 = vsub.s32 0, %v505
    %v507 = vrot.slane %v233, %v506
    %v516 = vmul.f32 %v393, %v479
    %v517 = vmul.f32 %v393, %v483
    %v518 = vmul.f32 %v393, %v487
    %v519 = vmul.f32 %v393, %v491
    %v520 = vmul.f32 %v393, %v495
    %v521 = vmul.f32 %v393, %v499
    %v522 = vmul.f32 %v393, %v503
    %v523 = vmul.f32 %v393, %v507
    %v524 = vmul.f32 %v399, %v479
    %v525 = vmul.f32 %v399, %v483
    %v526 = vmul.f32 %v399, %v487
    %v527 = vmul.f32 %v399, %v491
    %v528 = vmul.f32 %v399, %v495
    %v529 = vmul.f32 %v399, %v499
    %v530 = vmul.f32 %v399, %v503
    %v531 = vmul.f32 %v399, %v507
    %v532 = vmul.f32 %v468, %v479
    %v533 = vmul.f32 %v468, %v483
    %v534 = vmul.f32 %v468, %v487
    %v535 = vmul.f32 %v468, %v491
    %v536 = vmul.f32 %v468, %v495
    %v537 = vmul.f32 %v468, %v499
    %v538 = vmul.f32 %v468, %v503
    %v539 = vmul.f32 %v468, %v507
    %v540 = vmul.f32 %v473, %v479
    %v541 = vmul.f32 %v473, %v483
    %v542 = vmul.f32 %v473, %v487
    %v543 = vmul.f32 %v473, %v491
    %v544 = vmul.f32 %v473, %v495
    %v545 = vmul.f32 %v473, %v499
    %v546 = vmul.f32 %v473, %v503
    %v547 = vmul.f32 %v473, %v507
    %548 = vmatprep.subr.mxu0 0.0
    %549 = vmatpush1.xpose.msra.mxu0 %v516
    %550 = vmatprep.subr.mxu0 0.0
    %551 = vmatpush1.xpose.msra.mxu0 %v517
    %552 = vmatprep.subr.mxu0 0.0
    %553 = vmatpush1.xpose.msra.mxu0 %v518
    %554 = vmatprep.subr.mxu0 0.0
    %555 = vmatpush1.xpose.msra.mxu0 %v519
    %556 = vmatprep.subr.mxu0 0.0
    %557 = vmatpush1.xpose.msra.mxu0 %v520
    %558 = vmatprep.subr.mxu0 0.0
    %559 = vmatpush1.xpose.msra.mxu0 %v521
    %560 = vmatprep.subr.mxu0 0.0
    %561 = vmatpush1.xpose.msra.mxu0 %v522
    %562 = vmatprep.subr.mxu0 0.0
    %563 = vmatpush1.xpose.msra.mxu0 %v523
    %564 = vmatprep.subr.mxu0 0.0
    %565 = vmatpush1.xpose.msra.mxu0 0.0
    %566 = vmatprep.subr.mxu0 0.0
    %567 = vmatpush1.xpose.msra.mxu0 0.0
    %568 = vmatprep.subr.mxu0 0.0
    %569 = vmatpush1.xpose.msra.mxu0 0.0
    %570 = vmatprep.subr.mxu0 0.0
    %571 = vmatpush1.xpose.msra.mxu0 0.0
    %572 = vmatprep.subr.mxu0 0.0
    %573 = vmatpush1.xpose.msra.mxu0 0.0
    %574 = vmatprep.subr.mxu0 0.0
    %575 = vmatpush1.xpose.msra.mxu0 0.0
    %576 = vmatprep.subr.mxu0 0.0
    %577 = vmatpush1.xpose.msra.mxu0 0.0
    %578 = vmatprep.subr.mxu0 0.0
    %579 = vmatpush1.xpose.msra.mxu0 0.0
    %580 = vmatprep.subr.mxu0 0.0
    %581 = vmatpush1.xpose.msra.mxu0 0.0
    %582 = vmatprep.subr.mxu0 0.0
    %583 = vmatpush1.xpose.msra.mxu0 0.0
    %584 = vmatprep.subr.mxu0 0.0
    %585 = vmatpush1.xpose.msra.mxu0 0.0
    %586 = vmatprep.subr.mxu0 0.0
    %587 = vmatpush1.xpose.msra.mxu0 0.0
    %588 = vmatprep.subr.mxu0 0.0
    %589 = vmatpush1.xpose.msra.mxu0 0.0
    %590 = vmatprep.subr.mxu0 0.0
    %591 = vmatpush1.xpose.msra.mxu0 0.0
    %592 = vmatprep.subr.mxu0 0.0
    %593 = vmatpush1.xpose.msra.mxu0 0.0
    %594 = vmatprep.subr.mxu0 0.0
    %595 = vmatpush1.xpose.msra.mxu0 0.0
    %596 = vmatprep.subr.mxu0 0.0
    %597 = vmatpush1.xpose.msra.mxu0 0.0
    %598 = vmatprep.subr.mxu0 0.0
    %599 = vmatpush1.xpose.msra.mxu0 0.0
    %600 = vmatprep.subr.mxu0 0.0
    %601 = vmatpush1.xpose.msra.mxu0 0.0
    %602 = vmatprep.subr.mxu0 0.0
    %603 = vmatpush1.xpose.msra.mxu0 0.0
    %604 = vmatprep.subr.mxu0 0.0
    %605 = vmatpush1.xpose.msra.mxu0 0.0
    %606 = vmatprep.subr.mxu0 0.0
    %607 = vmatpush1.xpose.msra.mxu0 0.0
    %608 = vmatprep.subr.mxu0 0.0
    %609 = vmatpush1.xpose.msra.mxu0 0.0
    %610 = vmatprep.subr.mxu0 0.0
    %611 = vmatpush1.xpose.msra.mxu0 0.0
    %612 = vmatprep.mubr.f32.mxu0 0.0
    %613 = vmatmul.mubr.f32.gmra.mrb[0].mxu0 %v391
    %v614 = vpop.f32.mrb[0].mxu0
    %v615 = vadd.f32 0.0, %v614
    %v616 = vpop.f32.mrb[0].mxu0
    %617 = vdwg.mxu0
    %618 = vmatprep.subr.mxu0 0.0
    %619 = vmatpush1.xpose.msra.mxu0 %v524
    %620 = vmatprep.subr.mxu0 0.0
    %621 = vmatpush1.xpose.msra.mxu0 %v525
    %622 = vmatprep.subr.mxu0 0.0
    %623 = vmatpush1.xpose.msra.mxu0 %v526
    %624 = vmatprep.subr.mxu0 0.0
    %625 = vmatpush1.xpose.msra.mxu0 %v527
    %626 = vmatprep.subr.mxu0 0.0
    %627 = vmatpush1.xpose.msra.mxu0 %v528
    %628 = vmatprep.subr.mxu0 0.0
    %629 = vmatpush1.xpose.msra.mxu0 %v529
    %630 = vmatprep.subr.mxu0 0.0
    %631 = vmatpush1.xpose.msra.mxu0 %v530
    %632 = vmatprep.subr.mxu0 0.0
    %633 = vmatpush1.xpose.msra.mxu0 %v531
    %634 = vmatprep.subr.mxu0 0.0
    %635 = vmatpush1.xpose.msra.mxu0 0.0
    %636 = vmatprep.subr.mxu0 0.0
    %637 = vmatpush1.xpose.msra.mxu0 0.0
    %638 = vmatprep.subr.mxu0 0.0
    %639 = vmatpush1.xpose.msra.mxu0 0.0
    %640 = vmatprep.subr.mxu0 0.0
    %641 = vmatpush1.xpose.msra.mxu0 0.0
    %642 = vmatprep.subr.mxu0 0.0
    %643 = vmatpush1.xpose.msra.mxu0 0.0
    %644 = vmatprep.subr.mxu0 0.0
    %645 = vmatpush1.xpose.msra.mxu0 0.0
    %646 = vmatprep.subr.mxu0 0.0
    %647 = vmatpush1.xpose.msra.mxu0 0.0
    %648 = vmatprep.subr.mxu0 0.0
    %649 = vmatpush1.xpose.msra.mxu0 0.0
    %650 = vmatprep.subr.mxu0 0.0
    %651 = vmatpush1.xpose.msra.mxu0 0.0
    %652 = vmatprep.subr.mxu0 0.0
    %653 = vmatpush1.xpose.msra.mxu0 0.0
    %654 = vmatprep.subr.mxu0 0.0
    %655 = vmatpush1.xpose.msra.mxu0 0.0
    %656 = vmatprep.subr.mxu0 0.0
    %657 = vmatpush1.xpose.msra.mxu0 0.0
    %658 = vmatprep.subr.mxu0 0.0
    %659 = vmatpush1.xpose.msra.mxu0 0.0
    %660 = vmatprep.subr.mxu0 0.0
    %661 = vmatpush1.xpose.msra.mxu0 0.0
    %662 = vmatprep.subr.mxu0 0.0
    %663 = vmatpush1.xpose.msra.mxu0 0.0
    %664 = vmatprep.subr.mxu0 0.0
    %665 = vmatpush1.xpose.msra.mxu0 0.0
    %666 = vmatprep.subr.mxu0 0.0
    %667 = vmatpush1.xpose.msra.mxu0 0.0
    %668 = vmatprep.subr.mxu0 0.0
    %669 = vmatpush1.xpose.msra.mxu0 0.0
    %670 = vmatprep.subr.mxu0 0.0
    %671 = vmatpush1.xpose.msra.mxu0 0.0
    %672 = vmatprep.subr.mxu0 0.0
    %673 = vmatpush1.xpose.msra.mxu0 0.0
    %674 = vmatprep.subr.mxu0 0.0
    %675 = vmatpush1.xpose.msra.mxu0 0.0
    %676 = vmatprep.subr.mxu0 0.0
    %677 = vmatpush1.xpose.msra.mxu0 0.0
    %678 = vmatprep.subr.mxu0 0.0
    %679 = vmatpush1.xpose.msra.mxu0 0.0
    %680 = vmatprep.subr.mxu0 0.0
    %681 = vmatpush1.xpose.msra.mxu0 0.0
    %682 = vmatprep.mubr.f32.mxu0 0.0
    %683 = vmatmul.mubr.f32.gmra.mrb[0].mxu0 %v397
    %v684 = vpop.f32.mrb[0].mxu0
    %v685 = vadd.f32 0.0, %v684
    %v686 = vpop.f32.mrb[0].mxu0
    %687 = vdwg.mxu0
    %v688 = vmul.f32 %v615, 0.5
    %v689 = vmul.f32 %v685, 0.5
    %v690 = vadd.f32 %v688, %v174
    %v691 = vadd.f32 %v689, %v174
    %vm692 = vcmask 523264
    %v693 = vsel %vm692, %v690, -inf
    %694 = vmax.xlane.f32.xlu0 %v693
    %v695 = vpop.xlane.xlu0 %694
    %v696 = vsel %vm692, %v691, -inf
    %697 = vmax.xlane.f32.xlu0 %v696
    %v698 = vpop.xlane.xlu0 %697
    %v699 = vsub.f32 %v690, %v695
    %v700 = vsub.f32 %v691, %v698
    %v701 = vmul.f32 %v699, 1.442695
    %v702 = vpow.pop %v701
    %v703 = vmul.f32 %v700, 1.442695
    %v704 = vpow.pop %v703
    %v706 = vsel %vm692, %v702, 0
    %v709 = vsel %vm692, %v704, 0
    %711 = vmatprep.subr.mxu0 0.0
    %712 = vmatpush1.msra.mxu0 %v175
    %713 = vmatprep.subr.mxu0 0.0
    %714 = vmatpush1.msra.mxu0 %v176
    %715 = vmatprep.subr.mxu0 0.0
    %716 = vmatpush1.msra.mxu0 %v177
    %717 = vmatprep.subr.mxu0 0.0
    %718 = vmatpush1.msra.mxu0 %v178
    %719 = vmatprep.subr.mxu0 0.0
    %720 = vmatpush1.msra.mxu0 %v179
    %721 = vmatprep.subr.mxu0 0.0
    %722 = vmatpush1.msra.mxu0 %v180
    %723 = vmatprep.subr.mxu0 0.0
    %724 = vmatpush1.msra.mxu0 %v181
    %725 = vmatprep.subr.mxu0 0.0
    %726 = vmatpush1.msra.mxu0 %v182
    %727 = vmatprep.subr.mxu0 0.0
    %728 = vmatpush1.msra.mxu0 0.0
    %729 = vmatprep.subr.mxu0 0.0
    %730 = vmatpush1.msra.mxu0 0.0
    %731 = vmatprep.subr.mxu0 0.0
    %732 = vmatpush1.msra.mxu0 0.0
    %733 = vmatprep.subr.mxu0 0.0
    %734 = vmatpush1.msra.mxu0 0.0
    %735 = vmatprep.subr.mxu0 0.0
    %736 = vmatpush1.msra.mxu0 0.0
    %737 = vmatprep.subr.mxu0 0.0
    %738 = vmatpush1.msra.mxu0 0.0
    %739 = vmatprep.subr.mxu0 0.0
    %740 = vmatpush1.msra.mxu0 0.0
    %741 = vmatprep.subr.mxu0 0.0
    %742 = vmatpush1.msra.mxu0 0.0
    %743 = vmatprep.subr.mxu0 0.0
    %744 = vmatpush1.msra.mxu0 0.0
    %745 = vmatprep.subr.mxu0 0.0
    %746 = vmatpush1.msra.mxu0 0.0
    %747 = vmatprep.subr.mxu0 0.0
    %748 = vmatpush1.msra.mxu0 0.0
    %749 = vmatprep.subr.mxu0 0.0
    %750 = vmatpush1.msra.mxu0 0.0
    %751 = vmatprep.subr.mxu0 0.0
    %752 = vmatpush1.msra.mxu0 0.0
    %753 = vmatprep.subr.mxu0 0.0
    %754 = vmatpush1.msra.mxu0 0.0
    %755 = vmatprep.subr.mxu0 0.0
    %756 = vmatpush1.msra.mxu0 0.0
    %757 = vmatprep.subr.mxu0 0.0
    %758 = vmatpush1.msra.mxu0 0.0
    %759 = vmatprep.subr.mxu0 0.0
    %760 = vmatpush1.msra.mxu0 0.0
    %761 = vmatprep.subr.mxu0 0.0
    %762 = vmatpush1.msra.mxu0 0.0
    %763 = vmatprep.subr.mxu0 0.0
    %764 = vmatpush1.msra.mxu0 0.0
    %765 = vmatprep.subr.mxu0 0.0
    %766 = vmatpush1.msra.mxu0 0.0
    %767 = vmatprep.subr.mxu0 0.0
    %768 = vmatpush1.msra.mxu0 0.0
    %769 = vmatprep.subr.mxu0 0.0
    %770 = vmatpush1.msra.mxu0 0.0
    %771 = vmatprep.subr.mxu0 0.0
    %772 = vmatpush1.msra.mxu0 0.0
    %773 = vmatprep.subr.mxu0 0.0
    %774 = vmatpush1.msra.mxu0 0.0
    %775 = vmatprep.mubr.f32.mxu0 0.0
    %776 = vmatmul.mubr.f32.gmra.mrb[0].mxu0 %v706
    %v777 = vpop.f32.mrb[0].mxu0
    %v778 = vadd.f32 0.0, %v777
    %v779 = vpop.f32.mrb[0].mxu0
    %780 = vmatprep.mubr.f32.mxu0 0.0
    %781 = vmatmul.mubr.f32.gmra.mrb[0].mxu0 %v709
    %v782 = vpop.f32.mrb[0].mxu0
    %v783 = vadd.f32 0.0, %v782
    %v784 = vpop.f32.mrb[0].mxu0
    %785 = vdwg.mxu0
    %v786 = vrcp.pop %v778
    %v787 = vmul.f32 %v702, %v786
    %v788 = vrcp.pop %v783
    %v789 = vmul.f32 %v704, %v788
    %v791 = vsel %vm692, %v787, 0
    %793 = vmatprep.subr.mxu0 0.0
    %794 = vmatpush1.msra.mxu0 %v532
    %795 = vmatprep.subr.mxu0 0.0
    %796 = vmatpush1.msra.mxu0 %v533
    %797 = vmatprep.subr.mxu0 0.0
    %798 = vmatpush1.msra.mxu0 %v534
    %799 = vmatprep.subr.mxu0 0.0
    %800 = vmatpush1.msra.mxu0 %v535
    %801 = vmatprep.subr.mxu0 0.0
    %802 = vmatpush1.msra.mxu0 %v536
    %803 = vmatprep.subr.mxu0 0.0
    %804 = vmatpush1.msra.mxu0 %v537
    %805 = vmatprep.subr.mxu0 0.0
    %806 = vmatpush1.msra.mxu0 %v538
    %807 = vmatprep.subr.mxu0 0.0
    %808 = vmatpush1.msra.mxu0 %v539
    %809 = vmatprep.subr.mxu0 0.0
    %810 = vmatpush1.msra.mxu0 0.0
    %811 = vmatprep.subr.mxu0 0.0
    %812 = vmatpush1.msra.mxu0 0.0
    %813 = vmatprep.subr.mxu0 0.0
    %814 = vmatpush1.msra.mxu0 0.0
    %815 = vmatprep.subr.mxu0 0.0
    %816 = vmatpush1.msra.mxu0 0.0
    %817 = vmatprep.subr.mxu0 0.0
    %818 = vmatpush1.msra.mxu0 0.0
    %819 = vmatprep.subr.mxu0 0.0
    %820 = vmatpush1.msra.mxu0 0.0
    %821 = vmatprep.subr.mxu0 0.0
    %822 = vmatpush1.msra.mxu0 0.0
    %823 = vmatprep.subr.mxu0 0.0
    %824 = vmatpush1.msra.mxu0 0.0
    %825 = vmatprep.subr.mxu0 0.0
    %826 = vmatpush1.msra.mxu0 0.0
    %827 = vmatprep.subr.mxu0 0.0
    %828 = vmatpush1.msra.mxu0 0.0
    %829 = vmatprep.subr.mxu0 0.0
    %830 = vmatpush1.msra.mxu0 0.0
    %831 = vmatprep.subr.mxu0 0.0
    %832 = vmatpush1.msra.mxu0 0.0
    %833 = vmatprep.subr.mxu0 0.0
    %834 = vmatpush1.msra.mxu0 0.0
    %835 = vmatprep.subr.mxu0 0.0
    %836 = vmatpush1.msra.mxu0 0.0
    %837 = vmatprep.subr.mxu0 0.0
    %838 = vmatpush1.msra.mxu0 0.0
    %839 = vmatprep.subr.mxu0 0.0
    %840 = vmatpush1.msra.mxu0 0.0
    %841 = vmatprep.subr.mxu0 0.0
    %842 = vmatpush1.msra.mxu0 0.0
    %843 = vmatprep.subr.mxu0 0.0
    %844 = vmatpush1.msra.mxu0 0.0
    %845 = vmatprep.subr.mxu0 0.0
    %846 = vmatpush1.msra.mxu0 0.0
    %847 = vmatprep.subr.mxu0 0.0
    %848 = vmatpush1.msra.mxu0 0.0
    %849 = vmatprep.subr.mxu0 0.0
    %850 = vmatpush1.msra.mxu0 0.0
    %851 = vmatprep.subr.mxu0 0.0
    %852 = vmatpush1.msra.mxu0 0.0
    %853 = vmatprep.subr.mxu0 0.0
    %854 = vmatpush1.msra.mxu0 0.0
    %855 = vmatprep.subr.mxu0 0.0
    %856 = vmatpush1.msra.mxu0 0.0
    %857 = vmatprep.mubr.f32.mxu0 0.0
    %858 = vmatmul.mubr.f32.gmra.mrb[0].mxu0 %v791
    %v859 = vpop.f32.mrb[0].mxu0
    %v860 = vadd.f32 0.0, %v859
    %v861 = vpop.f32.mrb[0].mxu0
    %862 = vdwg.mxu0
    %v864 = vsel %vm692, %v789, 0
    %866 = vmatprep.subr.mxu0 0.0
    %867 = vmatpush1.msra.mxu0 %v540
    %868 = vmatprep.subr.mxu0 0.0
    %869 = vmatpush1.msra.mxu0 %v541
    %870 = vmatprep.subr.mxu0 0.0
    %871 = vmatpush1.msra.mxu0 %v542
    %872 = vmatprep.subr.mxu0 0.0
    %873 = vmatpush1.msra.mxu0 %v543
    %874 = vmatprep.subr.mxu0 0.0
    %875 = vmatpush1.msra.mxu0 %v544
    %876 = vmatprep.subr.mxu0 0.0
    %877 = vmatpush1.msra.mxu0 %v545
    %878 = vmatprep.subr.mxu0 0.0
    %879 = vmatpush1.msra.mxu0 %v546
    %880 = vmatprep.subr.mxu0 0.0
    %881 = vmatpush1.msra.mxu0 %v547
    %882 = vmatprep.subr.mxu0 0.0
    %883 = vmatpush1.msra.mxu0 0.0
    %884 = vmatprep.subr.mxu0 0.0
    %885 = vmatpush1.msra.mxu0 0.0
    %886 = vmatprep.subr.mxu0 0.0
    %887 = vmatpush1.msra.mxu0 0.0
    %888 = vmatprep.subr.mxu0 0.0
    %889 = vmatpush1.msra.mxu0 0.0
    %890 = vmatprep.subr.mxu0 0.0
    %891 = vmatpush1.msra.mxu0 0.0
    %892 = vmatprep.subr.mxu0 0.0
    %893 = vmatpush1.msra.mxu0 0.0
    %894 = vmatprep.subr.mxu0 0.0
    %895 = vmatpush1.msra.mxu0 0.0
    %896 = vmatprep.subr.mxu0 0.0
    %897 = vmatpush1.msra.mxu0 0.0
    %898 = vmatprep.subr.mxu0 0.0
    %899 = vmatpush1.msra.mxu0 0.0
    %900 = vmatprep.subr.mxu0 0.0
    %901 = vmatpush1.msra.mxu0 0.0
    %902 = vmatprep.subr.mxu0 0.0
    %903 = vmatpush1.msra.mxu0 0.0
    %904 = vmatprep.subr.mxu0 0.0
    %905 = vmatpush1.msra.mxu0 0.0
    %906 = vmatprep.subr.mxu0 0.0
    %907 = vmatpush1.msra.mxu0 0.0
    %908 = vmatprep.subr.mxu0 0.0
    %909 = vmatpush1.msra.mxu0 0.0
    %910 = vmatprep.subr.mxu0 0.0
    %911 = vmatpush1.msra.mxu0 0.0
    %912 = vmatprep.subr.mxu0 0.0
    %913 = vmatpush1.msra.mxu0 0.0
    %914 = vmatprep.subr.mxu0 0.0
    %915 = vmatpush1.msra.mxu0 0.0
    %916 = vmatprep.subr.mxu0 0.0
    %917 = vmatpush1.msra.mxu0 0.0
    %918 = vmatprep.subr.mxu0 0.0
    %919 = vmatpush1.msra.mxu0 0.0
    %920 = vmatprep.subr.mxu0 0.0
    %921 = vmatpush1.msra.mxu0 0.0
    %922 = vmatprep.subr.mxu0 0.0
    %923 = vmatpush1.msra.mxu0 0.0
    %924 = vmatprep.subr.mxu0 0.0
    %925 = vmatpush1.msra.mxu0 0.0
    %926 = vmatprep.subr.mxu0 0.0
    %927 = vmatpush1.msra.mxu0 0.0
    %928 = vmatprep.subr.mxu0 0.0
    %929 = vmatpush1.msra.mxu0 0.0
    %930 = vmatprep.mubr.f32.mxu0 0.0
    %931 = vmatmul.mubr.f32.gmra.mrb[0].mxu0 %v864
    %v932 = vpop.f32.mrb[0].mxu0
    %v933 = vadd.f32 0.0, %v932
    %v934 = vpop.f32.mrb[0].mxu0
    %935 = vdwg.mxu0
    %v936 = vld [vmem:[#allocation11] sm:$0xff]
    %v937 = vld [vmem:[#allocation11 + $0x8] sm:$0xff]
    %v938 = vld [vmem:[#allocation11 + $0x10] sm:$0xff]
    %v939 = vld [vmem:[#allocation11 + $0x18] sm:$0xff]
    %v940 = vld [vmem:[#allocation11 + $0x20] sm:$0xff]
    %v941 = vld [vmem:[#allocation11 + $0x28] sm:$0xff]
    %v942 = vld [vmem:[#allocation11 + $0x30] sm:$0xff]
    %v943 = vld [vmem:[#allocation11 + $0x38] sm:$0xff]
    %v944 = vld [vmem:[#allocation11 + $0x40] sm:$0xff]
    %v945 = vld [vmem:[#allocation11 + $0x48] sm:$0xff]
    %v946 = vld [vmem:[#allocation11 + $0x50] sm:$0xff]
    %v947 = vld [vmem:[#allocation11 + $0x58] sm:$0xff]
    %v948 = vld [vmem:[#allocation11 + $0x60] sm:$0xff]
    %v949 = vld [vmem:[#allocation11 + $0x68] sm:$0xff]
    %v950 = vld [vmem:[#allocation11 + $0x70] sm:$0xff]
    %v951 = vld [vmem:[#allocation11 + $0x78] sm:$0xff]
    %v952 = vld [vmem:[%s8] sm:$0x1]
    %v954 = vlaneseq
    %v955 = vshrl.u32 %v954, 7
    %v956 = vsub.s32 0, %v955
    %v957 = vrot.slane %v952, %v956
    %959 = vmatprep.subr.mxu0 0.0
    %960 = vmatpush1.msra.mxu0 %v936
    %961 = vmatprep.subr.mxu0 0.0
    %962 = vmatpush1.msra.mxu0 %v937
    %963 = vmatprep.subr.mxu0 0.0
    %964 = vmatpush1.msra.mxu0 %v938
    %965 = vmatprep.subr.mxu0 0.0
    %966 = vmatpush1.msra.mxu0 %v939
    %967 = vmatprep.subr.mxu0 0.0
    %968 = vmatpush1.msra.mxu0 %v940
    %969 = vmatprep.subr.mxu0 0.0
    %970 = vmatpush1.msra.mxu0 %v941
    %971 = vmatprep.subr.mxu0 0.0
    %972 = vmatpush1.msra.mxu0 %v942
    %973 = vmatprep.subr.mxu0 0.0
    %974 = vmatpush1.msra.mxu0 %v943
    %975 = vmatprep.subr.mxu0 0.0
    %976 = vmatpush1.msra.mxu0 %v944
    %977 = vmatprep.subr.mxu0 0.0
    %978 = vmatpush1.msra.mxu0 %v945
    %979 = vmatprep.subr.mxu0 0.0
    %980 = vmatpush1.msra.mxu0 %v946
    %981 = vmatprep.subr.mxu0 0.0
    %982 = vmatpush1.msra.mxu0 %v947
    %983 = vmatprep.subr.mxu0 0.0
    %984 = vmatpush1.msra.mxu0 %v948
    %985 = vmatprep.subr.mxu0 0.0
    %986 = vmatpush1.msra.mxu0 %v949
    %987 = vmatprep.subr.mxu0 0.0
    %988 = vmatpush1.msra.mxu0 %v950
    %989 = vmatprep.subr.mxu0 0.0
    %990 = vmatpush1.msra.mxu0 %v951
    %991 = vmatprep.subr.mxu0 0.0
    %992 = vmatpush1.msra.mxu0 0.0
    %993 = vmatprep.subr.mxu0 0.0
    %994 = vmatpush1.msra.mxu0 0.0
    %995 = vmatprep.subr.mxu0 0.0
    %996 = vmatpush1.msra.mxu0 0.0
    %997 = vmatprep.subr.mxu0 0.0
    %998 = vmatpush1.msra.mxu0 0.0
    %999 = vmatprep.subr.mxu0 0.0
    %1000 = vmatpush1.msra.mxu0 0.0
    %1001 = vmatprep.subr.mxu0 0.0
    %1002 = vmatpush1.msra.mxu0 0.0
    %1003 = vmatprep.subr.mxu0 0.0
    %1004 = vmatpush1.msra.mxu0 0.0
    %1005 = vmatprep.subr.mxu0 0.0
    %1006 = vmatpush1.msra.mxu0 0.0
    %1007 = vmatprep.subr.mxu0 0.0
    %1008 = vmatpush1.msra.mxu0 0.0
    %1009 = vmatprep.subr.mxu0 0.0
    %1010 = vmatpush1.msra.mxu0 0.0
    %1011 = vmatprep.subr.mxu0 0.0
    %1012 = vmatpush1.msra.mxu0 0.0
    %1013 = vmatprep.subr.mxu0 0.0
    %1014 = vmatpush1.msra.mxu0 0.0
    %1015 = vmatprep.subr.mxu0 0.0
    %1016 = vmatpush1.msra.mxu0 0.0
    %1017 = vmatprep.subr.mxu0 0.0
    %1018 = vmatpush1.msra.mxu0 0.0
    %1019 = vmatprep.subr.mxu0 0.0
    %1020 = vmatpush1.msra.mxu0 0.0
    %1021 = vmatprep.subr.mxu0 0.0
    %1022 = vmatpush1.msra.mxu0 0.0
    %1023 = vmatprep.mubr.f32.mxu0 0.0
    %1024 = vmatmul.mubr.f32.gmra.mrb[0].mxu0 %v860
    %v1025 = vpop.f32.mrb[0].mxu0
    %v1026 = vadd.f32 %v957, %v1025
    %v1027 = vpop.f32.mrb[0].mxu0
    %1028 = vmatprep.mubr.f32.mxu0 0.0
    %1029 = vmatmul.mubr.f32.gmra.mrb[0].mxu0 %v933
    %v1030 = vpop.f32.mrb[0].mxu0
    %v1031 = vadd.f32 %v957, %v1030
    %v1032 = vpop.f32.mrb[0].mxu0
    %1033 = vdwg.mxu0
    %v1034 = vadd.f32 %v234, %v1026
    %v1035 = vadd.f32 %v235, %v1031
    %v1036 = vld [vmem:[%s9] sm:$0x1]
    %v1037 = vmul.f32 %v1034, %v1034
    %v1038 = vmul.f32 %v1035, %v1035
    %1039 = vadd.xlane.f32.xlu0 %v1037
    %v1040 = vpop.xlane.xlu0 %1039
    %1041 = vadd.xlane.f32.xlu0 %v1038
    %v1042 = vpop.xlane.xlu0 %1041
    %v1043 = vmul.f32 %v1040, 0.03125
    %v1044 = vmul.f32 %v1042, 0.03125
    %v1045 = vadd.f32 %v1043, 1e-06
    %v1046 = vadd.f32 %v1044, 1e-06
    %v1047 = vrsqrt.pop %v1045
    %v1048 = vrsqrt.pop %v1046
    %v1049 = vmul.f32 %v1034, %v1047
    %v1050 = vmul.f32 %v1035, %v1048
    %v1052 = vlaneseq
    %v1053 = vshrl.u32 %v1052, 7
    %v1054 = vsub.s32 0, %v1053
    %v1055 = vrot.slane %v1036, %v1054
    %v1057 = vmul.f32 %v1049, %v1055
    %v1058 = vmul.f32 %v1050, %v1055
    %v1059 = vld [vmem:[#allocation13] sm:$0xff]
    %v1060 = vld [vmem:[#allocation13 + $0x8] sm:$0xff]
    %v1061 = vld [vmem:[#allocation13 + $0x10] sm:$0xff]
    %v1062 = vld [vmem:[#allocation13 + $0x18] sm:$0xff]
    %v1063 = vld [vmem:[#allocation13 + $0x20] sm:$0xff]
    %v1064 = vld [vmem:[#allocation13 + $0x28] sm:$0xff]
    %v1065 = vld [vmem:[#allocation13 + $0x30] sm:$0xff]
    %v1066 = vld [vmem:[#allocation13 + $0x38] sm:$0xff]
    %v1067 = vld [vmem:[#allocation13 + $0x40] sm:$0xff]
    %v1068 = vld [vmem:[#allocation13 + $0x48] sm:$0xff]
    %v1069 = vld [vmem:[#allocation13 + $0x50] sm:$0xff]
    %v1070 = vld [vmem:[#allocation13 + $0x58] sm:$0xff]
    %v1071 = vld [vmem:[#allocation13 + $0x60] sm:$0xff]
    %v1072 = vld [vmem:[#allocation13 + $0x68] sm:$0xff]
    %v1073 = vld [vmem:[#allocation13 + $0x70] sm:$0xff]
    %v1074 = vld [vmem:[#allocation13 + $0x78] sm:$0xff]
    %v1075 = vld [vmem:[%s11] sm:$0x1]
    %v1077 = vlaneseq
    %v1078 = vshrl.u32 %v1077, 7
    %v1079 = vsub.s32 0, %v1078
    %v1080 = vrot.slane %v1075, %v1079
    %1082 = vmatprep.subr.mxu0 0.0
    %1083 = vmatpush1.msra.mxu0 %v1059
    %1084 = vmatprep.subr.mxu0 0.0
    %1085 = vmatpush1.msra.mxu0 %v1060
    %1086 = vmatprep.subr.mxu0 0.0
    %1087 = vmatpush1.msra.mxu0 %v1061
    %1088 = vmatprep.subr.mxu0 0.0
    %1089 = vmatpush1.msra.mxu0 %v1062
    %1090 = vmatprep.subr.mxu0 0.0
    %1091 = vmatpush1.msra.mxu0 %v1063
    %1092 = vmatprep.subr.mxu0 0.0
    %1093 = vmatpush1.msra.mxu0 %v1064
    %1094 = vmatprep.subr.mxu0 0.0
    %1095 = vmatpush1.msra.mxu0 %v1065
    %1096 = vmatprep.subr.mxu0 0.0
    %1097 = vmatpush1.msra.mxu0 %v1066
    %1098 = vmatprep.subr.mxu0 0.0
    %1099 = vmatpush1.msra.mxu0 %v1067
    %1100 = vmatprep.subr.mxu0 0.0
    %1101 = vmatpush1.msra.mxu0 %v1068
    %1102 = vmatprep.subr.mxu0 0.0
    %1103 = vmatpush1.msra.mxu0 %v1069
    %1104 = vmatprep.subr.mxu0 0.0
    %1105 = vmatpush1.msra.mxu0 %v1070
    %1106 = vmatprep.subr.mxu0 0.0
    %1107 = vmatpush1.msra.mxu0 %v1071
    %1108 = vmatprep.subr.mxu0 0.0
    %1109 = vmatpush1.msra.mxu0 %v1072
    %1110 = vmatprep.subr.mxu0 0.0
    %1111 = vmatpush1.msra.mxu0 %v1073
    %1112 = vmatprep.subr.mxu0 0.0
    %1113 = vmatpush1.msra.mxu0 %v1074
    %1114 = vmatprep.subr.mxu0 0.0
    %1115 = vmatpush1.msra.mxu0 0.0
    %1116 = vmatprep.subr.mxu0 0.0
    %1117 = vmatpush1.msra.mxu0 0.0
    %1118 = vmatprep.subr.mxu0 0.0
    %1119 = vmatpush1.msra.mxu0 0.0
    %1120 = vmatprep.subr.mxu0 0.0
    %1121 = vmatpush1.msra.mxu0 0.0
    %1122 = vmatprep.subr.mxu0 0.0
    %1123 = vmatpush1.msra.mxu0 0.0
    %1124 = vmatprep.subr.mxu0 0.0
    %1125 = vmatpush1.msra.mxu0 0.0
    %1126 = vmatprep.subr.mxu0 0.0
    %1127 = vmatpush1.msra.mxu0 0.0
    %1128 = vmatprep.subr.mxu0 0.0
    %1129 = vmatpush1.msra.mxu0 0.0
    %1130 = vmatprep.subr.mxu0 0.0
    %1131 = vmatpush1.msra.mxu0 0.0
    %1132 = vmatprep.subr.mxu0 0.0
    %1133 = vmatpush1.msra.mxu0 0.0
    %1134 = vmatprep.subr.mxu0 0.0
    %1135 = vmatpush1.msra.mxu0 0.0
    %1136 = vmatprep.subr.mxu0 0.0
    %1137 = vmatpush1.msra.mxu0 0.0
    %1138 = vmatprep.subr.mxu0 0.0
    %1139 = vmatpush1.msra.mxu0 0.0
    %1140 = vmatprep.subr.mxu0 0.0
    %1141 = vmatpush1.msra.mxu0 0.0
    %1142 = vmatprep.subr.mxu0 0.0
    %1143 = vmatpush1.msra.mxu0 0.0
    %1144 = vmatprep.subr.mxu0 0.0
    %1145 = vmatpush1.msra.mxu0 0.0
    %1146 = vmatprep.mubr.f32.mxu0 0.0
    %1147 = vmatmul.mubr.f32.gmra.mrb[0].mxu0 %v1057
    %v1148 = vpop.f32.mrb[0].mxu0
    %v1149 = vadd.f32 %v1080, %v1148
    %v1150 = vpop.f32.mrb[0].mxu0
    %1151 = vmatprep.mubr.f32.mxu0 0.0
    %1152 = vmatmul.mubr.f32.gmra.mrb[0].mxu0 %v1058
    %v1153 = vpop.f32.mrb[0].mxu0
    %v1154 = vadd.f32 %v1080, %v1153
    %v1155 = vpop.f32.mrb[0].mxu0
    %1156 = vdwg.mxu0
    %v1157 = vmul.f32 %v1149, 0.5
    %v1158 = vmul.f32 %v1154, 0.5
    %v1159 = vmul.f32 %v1149, 0.044715
    %v1160 = vmul.f32 %v1154, 0.044715
    %v1161 = vmul.f32 %v1159, %v1149
    %v1162 = vmul.f32 %v1160, %v1154
    %v1163 = vmul.f32 %v1161, %v1149
    %v1164 = vmul.f32 %v1162, %v1154
    %v1165 = vadd.f32 %v1149, %v1163
    %v1166 = vadd.f32 %v1154, %v1164
    %v1167 = vmul.f32 %v1165, 0.7978846
    %v1168 = vmul.f32 %v1166, 0.7978846
    %v1169 = vtanh.pop %v1167
    %v1170 = vtanh.pop %v1168
    %v1171 = vadd.f32 %v1169, 1.0
    %v1172 = vadd.f32 %v1170, 1.0
    %v1173 = vmul.f32 %v1157, %v1171
    %v1174 = vmul.f32 %v1158, %v1172
    %v1175 = vld [vmem:[#allocation14] sm:$0xff]
    %v1176 = vld [vmem:[#allocation14 + $0x8] sm:$0xff]
    %v1177 = vld [vmem:[#allocation14 + $0x10] sm:$0xff]
    %v1178 = vld [vmem:[#allocation14 + $0x18] sm:$0xff]
    %v1179 = vld [vmem:[#allocation14 + $0x20] sm:$0xff]
    %v1180 = vld [vmem:[#allocation14 + $0x28] sm:$0xff]
    %v1181 = vld [vmem:[#allocation14 + $0x30] sm:$0xff]
    %v1182 = vld [vmem:[#allocation14 + $0x38] sm:$0xff]
    %v1183 = vld [vmem:[#allocation14 + $0x40] sm:$0xff]
    %v1184 = vld [vmem:[#allocation14 + $0x48] sm:$0xff]
    %v1185 = vld [vmem:[#allocation14 + $0x50] sm:$0xff]
    %v1186 = vld [vmem:[#allocation14 + $0x58] sm:$0xff]
    %v1187 = vld [vmem:[#allocation14 + $0x60] sm:$0xff]
    %v1188 = vld [vmem:[#allocation14 + $0x68] sm:$0xff]
    %v1189 = vld [vmem:[#allocation14 + $0x70] sm:$0xff]
    %v1190 = vld [vmem:[#allocation14 + $0x78] sm:$0xff]
    %v1191 = vld [vmem:[%s13] sm:$0x1]
    %v1193 = vlaneseq
    %v1194 = vshrl.u32 %v1193, 7
    %v1195 = vsub.s32 0, %v1194
    %v1196 = vrot.slane %v1191, %v1195
    %1198 = vmatprep.subr.mxu0 0.0
    %1199 = vmatpush1.msra.mxu0 %v1175
    %1200 = vmatprep.subr.mxu0 0.0
    %1201 = vmatpush1.msra.mxu0 %v1176
    %1202 = vmatprep.subr.mxu0 0.0
    %1203 = vmatpush1.msra.mxu0 %v1177
    %1204 = vmatprep.subr.mxu0 0.0
    %1205 = vmatpush1.msra.mxu0 %v1178
    %1206 = vmatprep.subr.mxu0 0.0
    %1207 = vmatpush1.msra.mxu0 %v1179
    %1208 = vmatprep.subr.mxu0 0.0
    %1209 = vmatpush1.msra.mxu0 %v1180
    %1210 = vmatprep.subr.mxu0 0.0
    %1211 = vmatpush1.msra.mxu0 %v1181
    %1212 = vmatprep.subr.mxu0 0.0
    %1213 = vmatpush1.msra.mxu0 %v1182
    %1214 = vmatprep.subr.mxu0 0.0
    %1215 = vmatpush1.msra.mxu0 %v1183
    %1216 = vmatprep.subr.mxu0 0.0
    %1217 = vmatpush1.msra.mxu0 %v1184
    %1218 = vmatprep.subr.mxu0 0.0
    %1219 = vmatpush1.msra.mxu0 %v1185
    %1220 = vmatprep.subr.mxu0 0.0
    %1221 = vmatpush1.msra.mxu0 %v1186
    %1222 = vmatprep.subr.mxu0 0.0
    %1223 = vmatpush1.msra.mxu0 %v1187
    %1224 = vmatprep.subr.mxu0 0.0
    %1225 = vmatpush1.msra.mxu0 %v1188
    %1226 = vmatprep.subr.mxu0 0.0
    %1227 = vmatpush1.msra.mxu0 %v1189
    %1228 = vmatprep.subr.mxu0 0.0
    %1229 = vmatpush1.msra.mxu0 %v1190
    %1230 = vmatprep.subr.mxu0 0.0
    %1231 = vmatpush1.msra.mxu0 0.0
    %1232 = vmatprep.subr.mxu0 0.0
    %1233 = vmatpush1.msra.mxu0 0.0
    %1234 = vmatprep.subr.mxu0 0.0
    %1235 = vmatpush1.msra.mxu0 0.0
    %1236 = vmatprep.subr.mxu0 0.0
    %1237 = vmatpush1.msra.mxu0 0.0
    %1238 = vmatprep.subr.mxu0 0.0
    %1239 = vmatpush1.msra.mxu0 0.0
    %1240 = vmatprep.subr.mxu0 0.0
    %1241 = vmatpush1.msra.mxu0 0.0
    %1242 = vmatprep.subr.mxu0 0.0
    %1243 = vmatpush1.msra.mxu0 0.0
    %1244 = vmatprep.subr.mxu0 0.0
    %1245 = vmatpush1.msra.mxu0 0.0
    %1246 = vmatprep.subr.mxu0 0.0
    %1247 = vmatpush1.msra.mxu0 0.0
    %1248 = vmatprep.subr.mxu0 0.0
    %1249 = vmatpush1.msra.mxu0 0.0
    %1250 = vmatprep.subr.mxu0 0.0
    %1251 = vmatpush1.msra.mxu0 0.0
    %1252 = vmatprep.subr.mxu0 0.0
    %1253 = vmatpush1.msra.mxu0 0.0
    %1254 = vmatprep.subr.mxu0 0.0
    %1255 = vmatpush1.msra.mxu0 0.0
    %1256 = vmatprep.subr.mxu0 0.0
    %1257 = vmatpush1.msra.mxu0 0.0
    %1258 = vmatprep.subr.mxu0 0.0
    %1259 = vmatpush1.msra.mxu0 0.0
    %1260 = vmatprep.subr.mxu0 0.0
    %1261 = vmatpush1.msra.mxu0 0.0
    %1262 = vmatprep.mubr.f32.mxu0 0.0
    %1263 = vmatmul.mubr.f32.gmra.mrb[0].mxu0 %v1173
    %v1264 = vpop.f32.mrb[0].mxu0
    %v1265 = vadd.f32 %v1196, %v1264
    %v1266 = vpop.f32.mrb[0].mxu0
    %1267 = vmatprep.mubr.f32.mxu0 0.0
    %1268 = vmatmul.mubr.f32.gmra.mrb[0].mxu0 %v1174
    %v1269 = vpop.f32.mrb[0].mxu0
    %v1270 = vadd.f32 %v1196, %v1269
    %v1271 = vpop.f32.mrb[0].mxu0
    %1272 = vdwg.mxu0
    %v1273 = vadd.f32 %v1034, %v1265
    %v1274 = vadd.f32 %v1035, %v1270
    %s1275 = scalar_lea.vmem [#allocation8], 1
    %v1276 = vld [vmem:[%s1275] sm:$0x1]
    %v1277 = vmul.f32 %v1273, %v1273
    %v1278 = vmul.f32 %v1274, %v1274
    %1279 = vadd.xlane.f32.xlu0 %v1277
    %v1280 = vpop.xlane.xlu0 %1279
    %1281 = vadd.xlane.f32.xlu0 %v1278
    %v1282 = vpop.xlane.xlu0 %1281
    %v1283 = vmul.f32 %v1280, 0.03125
    %v1284 = vmul.f32 %v1282, 0.03125
    %v1285 = vadd.f32 %v1283, 1e-06
    %v1286 = vadd.f32 %v1284, 1e-06
    %v1287 = vrsqrt.pop %v1285
    %v1288 = vrsqrt.pop %v1286
    %v1289 = vmul.f32 %v1273, %v1287
    %v1290 = vmul.f32 %v1274, %v1288
    %v1292 = vlaneseq
    %v1293 = vshrl.u32 %v1292, 7
    %v1294 = vsub.s32 0, %v1293
    %v1295 = vrot.slane %v1276, %v1294
    %v1297 = vmul.f32 %v1289, %v1295
    %v1298 = vmul.f32 %v1290, %v1295
    %s1299 = scalar_lea.vmem [#allocation10], 384
    %v1300 = vld [vmem:[%s1299] sm:$0xff]
    %v1301 = vld [vmem:[%s1299 + $0x8] sm:$0xff]
    %v1302 = vld [vmem:[%s1299 + $0x10] sm:$0xff]
    %v1303 = vld [vmem:[%s1299 + $0x18] sm:$0xff]
    %v1304 = vld [vmem:[%s1299 + $0x20] sm:$0xff]
    %v1305 = vld [vmem:[%s1299 + $0x28] sm:$0xff]
    %v1306 = vld [vmem:[%s1299 + $0x30] sm:$0xff]
    %v1307 = vld [vmem:[%s1299 + $0x38] sm:$0xff]
    %v1308 = vld [vmem:[%s1299 + $0x40] sm:$0xff]
    %v1309 = vld [vmem:[%s1299 + $0x48] sm:$0xff]
    %v1310 = vld [vmem:[%s1299 + $0x50] sm:$0xff]
    %v1311 = vld [vmem:[%s1299 + $0x58] sm:$0xff]
    %v1312 = vld [vmem:[%s1299 + $0x60] sm:$0xff]
    %v1313 = vld [vmem:[%s1299 + $0x68] sm:$0xff]
    %v1314 = vld [vmem:[%s1299 + $0x70] sm:$0xff]
    %v1315 = vld [vmem:[%s1299 + $0x78] sm:$0xff]
    %v1316 = vld [vmem:[%s1299 + $0x80] sm:$0xff]
    %v1317 = vld [vmem:[%s1299 + $0x88] sm:$0xff]
    %v1318 = vld [vmem:[%s1299 + $0x90] sm:$0xff]
    %v1319 = vld [vmem:[%s1299 + $0x98] sm:$0xff]
    %v1320 = vld [vmem:[%s1299 + $0xa0] sm:$0xff]
    %v1321 = vld [vmem:[%s1299 + $0xa8] sm:$0xff]
    %v1322 = vld [vmem:[%s1299 + $0xb0] sm:$0xff]
    %v1323 = vld [vmem:[%s1299 + $0xb8] sm:$0xff]
    %v1324 = vld [vmem:[%s1299 + $0xc0] sm:$0xff]
    %v1325 = vld [vmem:[%s1299 + $0xc8] sm:$0xff]
    %v1326 = vld [vmem:[%s1299 + $0xd0] sm:$0xff]
    %v1327 = vld [vmem:[%s1299 + $0xd8] sm:$0xff]
    %v1328 = vld [vmem:[%s1299 + $0xe0] sm:$0xff]
    %v1329 = vld [vmem:[%s1299 + $0xe8] sm:$0xff]
    %v1330 = vld [vmem:[%s1299 + $0xf0] sm:$0xff]
    %v1331 = vld [vmem:[%s1299 + $0xf8] sm:$0xff]
    %v1332 = vld [vmem:[%s1299 + $0x100] sm:$0xff]
    %v1333 = vld [vmem:[%s1299 + $0x108] sm:$0xff]
    %v1334 = vld [vmem:[%s1299 + $0x110] sm:$0xff]
    %v1335 = vld [vmem:[%s1299 + $0x118] sm:$0xff]
    %v1336 = vld [vmem:[%s1299 + $0x120] sm:$0xff]
    %v1337 = vld [vmem:[%s1299 + $0x128] sm:$0xff]
    %v1338 = vld [vmem:[%s1299 + $0x130] sm:$0xff]
    %v1339 = vld [vmem:[%s1299 + $0x138] sm:$0xff]
    %v1340 = vld [vmem:[%s1299 + $0x140] sm:$0xff]
    %v1341 = vld [vmem:[%s1299 + $0x148] sm:$0xff]
    %v1342 = vld [vmem:[%s1299 + $0x150] sm:$0xff]
    %v1343 = vld [vmem:[%s1299 + $0x158] sm:$0xff]
    %v1344 = vld [vmem:[%s1299 + $0x160] sm:$0xff]
    %v1345 = vld [vmem:[%s1299 + $0x168] sm:$0xff]
    %v1346 = vld [vmem:[%s1299 + $0x170] sm:$0xff]
    %v1347 = vld [vmem:[%s1299 + $0x178] sm:$0xff]
    %s1348 = scalar_lea.vmem %s6, 3
    %v1349 = vld [vmem:[%s1348] sm:$0x7]
    %v1351 = vlaneseq
    %v1352 = vshrl.u32 %v1351, 7
    %v1353 = vsub.s32 0, %v1352
    %v1354 = vrot.slane %v1349, %v1353
    %v1355 = vlaneseq
    %v1356 = vshrl.u32 %v1355, 7
    %v1357 = vsub.s32 1, %v1356
    %v1358 = vrot.slane %v1349, %v1357
    %v1359 = vlaneseq
    %v1360 = vshrl.u32 %v1359, 7
    %v1361 = vsub.s32 2, %v1360
    %v1362 = vrot.slane %v1349, %v1361
    %1366 = vmatprep.subr.mxu0 %v1301
    %1367 = vmatpush1.msra.mxu0 %v1300
    %1368 = vmatprep.subr.mxu0 %v1304
    %1369 = vmatpush1.msra.mxu0 %v1303
    %1370 = vmatprep.subr.mxu0 %v1307
    %1371 = vmatpush1.msra.mxu0 %v1306
    %1372 = vmatprep.subr.mxu0 %v1310
    %1373 = vmatpush1.msra.mxu0 %v1309
    %1374 = vmatprep.subr.mxu0 %v1313
    %1375 = vmatpush1.msra.mxu0 %v1312
    %1376 = vmatprep.subr.mxu0 %v1316
    %1377 = vmatpush1.msra.mxu0 %v1315
    %1378 = vmatprep.subr.mxu0 %v1319
    %1379 = vmatpush1.msra.mxu0 %v1318
    %1380 = vmatprep.subr.mxu0 %v1322
    %1381 = vmatpush1.msra.mxu0 %v1321
    %1382 = vmatprep.subr.mxu0 %v1325
    %1383 = vmatpush1.msra.mxu0 %v1324
    %1384 = vmatprep.subr.mxu0 %v1328
    %1385 = vmatpush1.msra.mxu0 %v1327
    %1386 = vmatprep.subr.mxu0 %v1331
    %1387 = vmatpush1.msra.mxu0 %v1330
    %1388 = vmatprep.subr.mxu0 %v1334
    %1389 = vmatpush1.msra.mxu0 %v1333
    %1390 = vmatprep.subr.mxu0 %v1337
    %1391 = vmatpush1.msra.mxu0 %v1336
    %1392 = vmatprep.subr.mxu0 %v1340
    %1393 = vmatpush1.msra.mxu0 %v1339
    %1394 = vmatprep.subr.mxu0 %v1343
    %1395 = vmatpush1.msra.mxu0 %v1342
    %1396 = vmatprep.subr.mxu0 %v1346
    %1397 = vmatpush1.msra.mxu0 %v1345
    %1398 = vmatprep.subr.mxu0 0.0
    %1399 = vmatpush1.msra.mxu0 0.0
    %1400 = vmatprep.subr.mxu0 0.0
    %1401 = vmatpush1.msra.mxu0 0.0
    %1402 = vmatprep.subr.mxu0 0.0
    %1403 = vmatpush1.msra.mxu0 0.0
    %1404 = vmatprep.subr.mxu0 0.0
    %1405 = vmatpush1.msra.mxu0 0.0
    %1406 = vmatprep.subr.mxu0 0.0
    %1407 = vmatpush1.msra.mxu0 0.0
    %1408 = vmatprep.subr.mxu0 0.0
    %1409 = vmatpush1.msra.mxu0 0.0
    %1410 = vmatprep.subr.mxu0 0.0
    %1411 = vmatpush1.msra.mxu0 0.0
    %1412 = vmatprep.subr.mxu0 0.0
    %1413 = vmatpush1.msra.mxu0 0.0
    %1414 = vmatprep.subr.mxu0 0.0
    %1415 = vmatpush1.msra.mxu0 0.0
    %1416 = vmatprep.subr.mxu0 0.0
    %1417 = vmatpush1.msra.mxu0 0.0
    %1418 = vmatprep.subr.mxu0 0.0
    %1419 = vmatpush1.msra.mxu0 0.0
    %1420 = vmatprep.subr.mxu0 0.0
    %1421 = vmatpush1.msra.mxu0 0.0
    %1422 = vmatprep.subr.mxu0 0.0
    %1423 = vmatpush1.msra.mxu0 0.0
    %1424 = vmatprep.subr.mxu0 0.0
    %1425 = vmatpush1.msra.mxu0 0.0
    %1426 = vmatprep.subr.mxu0 0.0
    %1427 = vmatpush1.msra.mxu0 0.0
    %1428 = vmatprep.subr.mxu0 0.0
    %1429 = vmatpush1.msra.mxu0 0.0
    %1430 = vmatprep.mubr.f32.mxu0 0.0
    %1431 = vmatmul.mubr.f32.gmra.mrb[0].mxu0 %v1297
    %v1432 = vpop.f32.mrb[0].mxu0
    %v1433 = vadd.f32 %v1354, %v1432
    %v1434 = vpop.f32.mrb[0].mxu0
    %v1435 = vadd.f32 %v1358, %v1434
    %1436 = vmatprep.mubr.f32.mxu0 0.0
    %1437 = vmatmul.mubr.f32.gmra.mrb[0].mxu0 %v1298
    %v1438 = vpop.f32.mrb[0].mxu0
    %v1439 = vadd.f32 %v1354, %v1438
    %v1440 = vpop.f32.mrb[0].mxu0
    %v1441 = vadd.f32 %v1358, %v1440
    %1442 = vdwg.mxu0
    %1443 = vmatprep.subr.mxu0 0.0
    %1444 = vmatpush1.msra.mxu0 %v1302
    %1445 = vmatprep.subr.mxu0 0.0
    %1446 = vmatpush1.msra.mxu0 %v1305
    %1447 = vmatprep.subr.mxu0 0.0
    %1448 = vmatpush1.msra.mxu0 %v1308
    %1449 = vmatprep.subr.mxu0 0.0
    %1450 = vmatpush1.msra.mxu0 %v1311
    %1451 = vmatprep.subr.mxu0 0.0
    %1452 = vmatpush1.msra.mxu0 %v1314
    %1453 = vmatprep.subr.mxu0 0.0
    %1454 = vmatpush1.msra.mxu0 %v1317
    %1455 = vmatprep.subr.mxu0 0.0
    %1456 = vmatpush1.msra.mxu0 %v1320
    %1457 = vmatprep.subr.mxu0 0.0
    %1458 = vmatpush1.msra.mxu0 %v1323
    %1459 = vmatprep.subr.mxu0 0.0
    %1460 = vmatpush1.msra.mxu0 %v1326
    %1461 = vmatprep.subr.mxu0 0.0
    %1462 = vmatpush1.msra.mxu0 %v1329
    %1463 = vmatprep.subr.mxu0 0.0
    %1464 = vmatpush1.msra.mxu0 %v1332
    %1465 = vmatprep.subr.mxu0 0.0
    %1466 = vmatpush1.msra.mxu0 %v1335
    %1467 = vmatprep.subr.mxu0 0.0
    %1468 = vmatpush1.msra.mxu0 %v1338
    %1469 = vmatprep.subr.mxu0 0.0
    %1470 = vmatpush1.msra.mxu0 %v1341
    %1471 = vmatprep.subr.mxu0 0.0
    %1472 = vmatpush1.msra.mxu0 %v1344
    %1473 = vmatprep.subr.mxu0 0.0
    %1474 = vmatpush1.msra.mxu0 %v1347
    %1475 = vmatprep.subr.mxu0 0.0
    %1476 = vmatpush1.msra.mxu0 0.0
    %1477 = vmatprep.subr.mxu0 0.0
    %1478 = vmatpush1.msra.mxu0 0.0
    %1479 = vmatprep.subr.mxu0 0.0
    %1480 = vmatpush1.msra.mxu0 0.0
    %1481 = vmatprep.subr.mxu0 0.0
    %1482 = vmatpush1.msra.mxu0 0.0
    %1483 = vmatprep.subr.mxu0 0.0
    %1484 = vmatpush1.msra.mxu0 0.0
    %1485 = vmatprep.subr.mxu0 0.0
    %1486 = vmatpush1.msra.mxu0 0.0
    %1487 = vmatprep.subr.mxu0 0.0
    %1488 = vmatpush1.msra.mxu0 0.0
    %1489 = vmatprep.subr.mxu0 0.0
    %1490 = vmatpush1.msra.mxu0 0.0
    %1491 = vmatprep.subr.mxu0 0.0
    %1492 = vmatpush1.msra.mxu0 0.0
    %1493 = vmatprep.subr.mxu0 0.0
    %1494 = vmatpush1.msra.mxu0 0.0
    %1495 = vmatprep.subr.mxu0 0.0
    %1496 = vmatpush1.msra.mxu0 0.0
    %1497 = vmatprep.subr.mxu0 0.0
    %1498 = vmatpush1.msra.mxu0 0.0
    %1499 = vmatprep.subr.mxu0 0.0
    %1500 = vmatpush1.msra.mxu0 0.0
    %1501 = vmatprep.subr.mxu0 0.0
    %1502 = vmatpush1.msra.mxu0 0.0
    %1503 = vmatprep.subr.mxu0 0.0
    %1504 = vmatpush1.msra.mxu0 0.0
    %1505 = vmatprep.subr.mxu0 0.0
    %1506 = vmatpush1.msra.mxu0 0.0
    %1507 = vmatprep.mubr.f32.mxu0 0.0
    %1508 = vmatmul.mubr.f32.gmra.mrb[0].mxu0 %v1297
    %v1509 = vpop.f32.mrb[0].mxu0
    %v1510 = vadd.f32 %v1362, %v1509
    %v1511 = vpop.f32.mrb[0].mxu0
    %1512 = vmatprep.mubr.f32.mxu0 0.0
    %1513 = vmatmul.mubr.f32.gmra.mrb[0].mxu0 %v1298
    %v1514 = vpop.f32.mrb[0].mxu0
    %v1515 = vadd.f32 %v1362, %v1514
    %v1516 = vpop.f32.mrb[0].mxu0
    %1517 = vdwg.mxu0
    %v1518 = vmul.f32 %v1435, %v479
    %v1519 = vmul.f32 %v1435, %v483
    %v1520 = vmul.f32 %v1435, %v487
    %v1521 = vmul.f32 %v1435, %v491
    %v1522 = vmul.f32 %v1435, %v495
    %v1523 = vmul.f32 %v1435, %v499
    %v1524 = vmul.f32 %v1435, %v503
    %v1525 = vmul.f32 %v1435, %v507
    %v1526 = vmul.f32 %v1441, %v479
    %v1527 = vmul.f32 %v1441, %v483
    %v1528 = vmul.f32 %v1441, %v487
    %v1529 = vmul.f32 %v1441, %v491
    %v1530 = vmul.f32 %v1441, %v495
    %v1531 = vmul.f32 %v1441, %v499
    %v1532 = vmul.f32 %v1441, %v503
    %v1533 = vmul.f32 %v1441, %v507
    %v1534 = vmul.f32 %v1510, %v479
    %v1535 = vmul.f32 %v1510, %v483
    %v1536 = vmul.f32 %v1510, %v487
    %v1537 = vmul.f32 %v1510, %v491
    %v1538 = vmul.f32 %v1510, %v495
    %v1539 = vmul.f32 %v1510, %v499
    %v1540 = vmul.f32 %v1510, %v503
    %v1541 = vmul.f32 %v1510, %v507
    %v1542 = vmul.f32 %v1515, %v479
    %v1543 = vmul.f32 %v1515, %v483
    %v1544 = vmul.f32 %v1515, %v487
    %v1545 = vmul.f32 %v1515, %v491
    %v1546 = vmul.f32 %v1515, %v495
    %v1547 = vmul.f32 %v1515, %v499
    %v1548 = vmul.f32 %v1515, %v503
    %v1549 = vmul.f32 %v1515, %v507
    %1550 = vmatprep.subr.mxu0 0.0
    %1551 = vmatpush1.xpose.msra.mxu0 %v1518
    %1552 = vmatprep.subr.mxu0 0.0
    %1553 = vmatpush1.xpose.msra.mxu0 %v1519
    %1554 = vmatprep.subr.mxu0 0.0
    %1555 = vmatpush1.xpose.msra.mxu0 %v1520
    %1556 = vmatprep.subr.mxu0 0.0
    %1557 = vmatpush1.xpose.msra.mxu0 %v1521
    %1558 = vmatprep.subr.mxu0 0.0
    %1559 = vmatpush1.xpose.msra.mxu0 %v1522
    %1560 = vmatprep.subr.mxu0 0.0
    %1561 = vmatpush1.xpose.msra.mxu0 %v1523
    %1562 = vmatprep.subr.mxu0 0.0
    %1563 = vmatpush1.xpose.msra.mxu0 %v1524
    %1564 = vmatprep.subr.mxu0 0.0
    %1565 = vmatpush1.xpose.msra.mxu0 %v1525
    %1566 = vmatprep.subr.mxu0 0.0
    %1567 = vmatpush1.xpose.msra.mxu0 0.0
    %1568 = vmatprep.subr.mxu0 0.0
    %1569 = vmatpush1.xpose.msra.mxu0 0.0
    %1570 = vmatprep.subr.mxu0 0.0
    %1571 = vmatpush1.xpose.msra.mxu0 0.0
    %1572 = vmatprep.subr.mxu0 0.0
    %1573 = vmatpush1.xpose.msra.mxu0 0.0
    %1574 = vmatprep.subr.mxu0 0.0
    %1575 = vmatpush1.xpose.msra.mxu0 0.0
    %1576 = vmatprep.subr.mxu0 0.0
    %1577 = vmatpush1.xpose.msra.mxu0 0.0
    %1578 = vmatprep.subr.mxu0 0.0
    %1579 = vmatpush1.xpose.msra.mxu0 0.0
    %1580 = vmatprep.subr.mxu0 0.0
    %1581 = vmatpush1.xpose.msra.mxu0 0.0
    %1582 = vmatprep.subr.mxu0 0.0
    %1583 = vmatpush1.xpose.msra.mxu0 0.0
    %1584 = vmatprep.subr.mxu0 0.0
    %1585 = vmatpush1.xpose.msra.mxu0 0.0
    %1586 = vmatprep.subr.mxu0 0.0
    %1587 = vmatpush1.xpose.msra.mxu0 0.0
    %1588 = vmatprep.subr.mxu0 0.0
    %1589 = vmatpush1.xpose.msra.mxu0 0.0
    %1590 = vmatprep.subr.mxu0 0.0
    %1591 = vmatpush1.xpose.msra.mxu0 0.0
    %1592 = vmatprep.subr.mxu0 0.0
    %1593 = vmatpush1.xpose.msra.mxu0 0.0
    %1594 = vmatprep.subr.mxu0 0.0
    %1595 = vmatpush1.xpose.msra.mxu0 0.0
    %1596 = vmatprep.subr.mxu0 0.0
    %1597 = vmatpush1.xpose.msra.mxu0 0.0
    %1598 = vmatprep.subr.mxu0 0.0
    %1599 = vmatpush1.xpose.msra.mxu0 0.0
    %1600 = vmatprep.subr.mxu0 0.0
    %1601 = vmatpush1.xpose.msra.mxu0 0.0
    %1602 = vmatprep.subr.mxu0 0.0
    %1603 = vmatpush1.xpose.msra.mxu0 0.0
    %1604 = vmatprep.subr.mxu0 0.0
    %1605 = vmatpush1.xpose.msra.mxu0 0.0
    %1606 = vmatprep.subr.mxu0 0.0
    %1607 = vmatpush1.xpose.msra.mxu0 0.0
    %1608 = vmatprep.subr.mxu0 0.0
    %1609 = vmatpush1.xpose.msra.mxu0 0.0
    %1610 = vmatprep.subr.mxu0 0.0
    %1611 = vmatpush1.xpose.msra.mxu0 0.0
    %1612 = vmatprep.subr.mxu0 0.0
    %1613 = vmatpush1.xpose.msra.mxu0 0.0
    %1614 = vmatprep.mubr.f32.mxu0 0.0
    %1615 = vmatmul.mubr.f32.gmra.mrb[0].mxu0 %v1433
    %v1616 = vpop.f32.mrb[0].mxu0
    %v1617 = vadd.f32 0.0, %v1616
    %v1618 = vpop.f32.mrb[0].mxu0
    %1619 = vdwg.mxu0
    %1620 = vmatprep.subr.mxu0 0.0
    %1621 = vmatpush1.xpose.msra.mxu0 %v1526
    %1622 = vmatprep.subr.mxu0 0.0
    %1623 = vmatpush1.xpose.msra.mxu0 %v1527
    %1624 = vmatprep.subr.mxu0 0.0
    %1625 = vmatpush1.xpose.msra.mxu0 %v1528
    %1626 = vmatprep.subr.mxu0 0.0
    %1627 = vmatpush1.xpose.msra.mxu0 %v1529
    %1628 = vmatprep.subr.mxu0 0.0
    %1629 = vmatpush1.xpose.msra.mxu0 %v1530
    %1630 = vmatprep.subr.mxu0 0.0
    %1631 = vmatpush1.xpose.msra.mxu0 %v1531
    %1632 = vmatprep.subr.mxu0 0.0
    %1633 = vmatpush1.xpose.msra.mxu0 %v1532
    %1634 = vmatprep.subr.mxu0 0.0
    %1635 = vmatpush1.xpose.msra.mxu0 %v1533
    %1636 = vmatprep.subr.mxu0 0.0
    %1637 = vmatpush1.xpose.msra.mxu0 0.0
    %1638 = vmatprep.subr.mxu0 0.0
    %1639 = vmatpush1.xpose.msra.mxu0 0.0
    %1640 = vmatprep.subr.mxu0 0.0
    %1641 = vmatpush1.xpose.msra.mxu0 0.0
    %1642 = vmatprep.subr.mxu0 0.0
    %1643 = vmatpush1.xpose.msra.mxu0 0.0
    %1644 = vmatprep.subr.mxu0 0.0
    %1645 = vmatpush1.xpose.msra.mxu0 0.0
    %1646 = vmatprep.subr.mxu0 0.0
    %1647 = vmatpush1.xpose.msra.mxu0 0.0
    %1648 = vmatprep.subr.mxu0 0.0
    %1649 = vmatpush1.xpose.msra.mxu0 0.0
    %1650 = vmatprep.subr.mxu0 0.0
    %1651 = vmatpush1.xpose.msra.mxu0 0.0
    %1652 = vmatprep.subr.mxu0 0.0
    %1653 = vmatpush1.xpose.msra.mxu0 0.0
    %1654 = vmatprep.subr.mxu0 0.0
    %1655 = vmatpush1.xpose.msra.mxu0 0.0
    %1656 = vmatprep.subr.mxu0 0.0
    %1657 = vmatpush1.xpose.msra.mxu0 0.0
    %1658 = vmatprep.subr.mxu0 0.0
    %1659 = vmatpush1.xpose.msra.mxu0 0.0
    %1660 = vmatprep.subr.mxu0 0.0
    %1661 = vmatpush1.xpose.msra.mxu0 0.0
    %1662 = vmatprep.subr.mxu0 0.0
    %1663 = vmatpush1.xpose.msra.mxu0 0.0
    %1664 = vmatprep.subr.mxu0 0.0
    %1665 = vmatpush1.xpose.msra.mxu0 0.0
    %1666 = vmatprep.subr.mxu0 0.0
    %1667 = vmatpush1.xpose.msra.mxu0 0.0
    %1668 = vmatprep.subr.mxu0 0.0
    %1669 = vmatpush1.xpose.msra.mxu0 0.0
    %1670 = vmatprep.subr.mxu0 0.0
    %1671 = vmatpush1.xpose.msra.mxu0 0.0
    %1672 = vmatprep.subr.mxu0 0.0
    %1673 = vmatpush1.xpose.msra.mxu0 0.0
    %1674 = vmatprep.subr.mxu0 0.0
    %1675 = vmatpush1.xpose.msra.mxu0 0.0
    %1676 = vmatprep.subr.mxu0 0.0
    %1677 = vmatpush1.xpose.msra.mxu0 0.0
    %1678 = vmatprep.subr.mxu0 0.0
    %1679 = vmatpush1.xpose.msra.mxu0 0.0
    %1680 = vmatprep.subr.mxu0 0.0
    %1681 = vmatpush1.xpose.msra.mxu0 0.0
    %1682 = vmatprep.subr.mxu0 0.0
    %1683 = vmatpush1.xpose.msra.mxu0 0.0
    %1684 = vmatprep.mubr.f32.mxu0 0.0
    %1685 = vmatmul.mubr.f32.gmra.mrb[0].mxu0 %v1439
    %v1686 = vpop.f32.mrb[0].mxu0
    %v1687 = vadd.f32 0.0, %v1686
    %v1688 = vpop.f32.mrb[0].mxu0
    %1689 = vdwg.mxu0
    %v1690 = vmul.f32 %v1617, 0.5
    %v1691 = vmul.f32 %v1687, 0.5
    %v1692 = vadd.f32 %v1690, %v174
    %v1693 = vadd.f32 %v1691, %v174
    %v1694 = vsel %vm692, %v1692, -inf
    %1695 = vmax.xlane.f32.xlu0 %v1694
    %v1696 = vpop.xlane.xlu0 %1695
    %v1697 = vsel %vm692, %v1693, -inf
    %1698 = vmax.xlane.f32.xlu0 %v1697
    %v1699 = vpop.xlane.xlu0 %1698
    %v1700 = vsub.f32 %v1692, %v1696
    %v1701 = vsub.f32 %v1693, %v1699
    %v1702 = vmul.f32 %v1700, 1.442695
    %v1703 = vpow.pop %v1702
    %v1704 = vmul.f32 %v1701, 1.442695
    %v1705 = vpow.pop %v1704
    %v1707 = vsel %vm692, %v1703, 0
    %v1710 = vsel %vm692, %v1705, 0
    %1712 = vmatprep.subr.mxu0 0.0
    %1713 = vmatpush1.msra.mxu0 %v175
    %1714 = vmatprep.subr.mxu0 0.0
    %1715 = vmatpush1.msra.mxu0 %v176
    %1716 = vmatprep.subr.mxu0 0.0
    %1717 = vmatpush1.msra.mxu0 %v177
    %1718 = vmatprep.subr.mxu0 0.0
    %1719 = vmatpush1.msra.mxu0 %v178
    %1720 = vmatprep.subr.mxu0 0.0
    %1721 = vmatpush1.msra.mxu0 %v179
    %1722 = vmatprep.subr.mxu0 0.0
    %1723 = vmatpush1.msra.mxu0 %v180
    %1724 = vmatprep.subr.mxu0 0.0
    %1725 = vmatpush1.msra.mxu0 %v181
    %1726 = vmatprep.subr.mxu0 0.0
    %1727 = vmatpush1.msra.mxu0 %v182
    %1728 = vmatprep.subr.mxu0 0.0
    %1729 = vmatpush1.msra.mxu0 0.0
    %1730 = vmatprep.subr.mxu0 0.0
    %1731 = vmatpush1.msra.mxu0 0.0
    %1732 = vmatprep.subr.mxu0 0.0
    %1733 = vmatpush1.msra.mxu0 0.0
    %1734 = vmatprep.subr.mxu0 0.0
    %1735 = vmatpush1.msra.mxu0 0.0
    %1736 = vmatprep.subr.mxu0 0.0
    %1737 = vmatpush1.msra.mxu0 0.0
    %1738 = vmatprep.subr.mxu0 0.0
    %1739 = vmatpush1.msra.mxu0 0.0
    %1740 = vmatprep.subr.mxu0 0.0
    %1741 = vmatpush1.msra.mxu0 0.0
    %1742 = vmatprep.subr.mxu0 0.0
    %1743 = vmatpush1.msra.mxu0 0.0
    %1744 = vmatprep.subr.mxu0 0.0
    %1745 = vmatpush1.msra.mxu0 0.0
    %1746 = vmatprep.subr.mxu0 0.0
    %1747 = vmatpush1.msra.mxu0 0.0
    %1748 = vmatprep.subr.mxu0 0.0
    %1749 = vmatpush1.msra.mxu0 0.0
    %1750 = vmatprep.subr.mxu0 0.0
    %1751 = vmatpush1.msra.mxu0 0.0
    %1752 = vmatprep.subr.mxu0 0.0
    %1753 = vmatpush1.msra.mxu0 0.0
    %1754 = vmatprep.subr.mxu0 0.0
    %1755 = vmatpush1.msra.mxu0 0.0
    %1756 = vmatprep.subr.mxu0 0.0
    %1757 = vmatpush1.msra.mxu0 0.0
    %1758 = vmatprep.subr.mxu0 0.0
    %1759 = vmatpush1.msra.mxu0 0.0
    %1760 = vmatprep.subr.mxu0 0.0
    %1761 = vmatpush1.msra.mxu0 0.0
    %1762 = vmatprep.subr.mxu0 0.0
    %1763 = vmatpush1.msra.mxu0 0.0
    %1764 = vmatprep.subr.mxu0 0.0
    %1765 = vmatpush1.msra.mxu0 0.0
    %1766 = vmatprep.subr.mxu0 0.0
    %1767 = vmatpush1.msra.mxu0 0.0
    %1768 = vmatprep.subr.mxu0 0.0
    %1769 = vmatpush1.msra.mxu0 0.0
    %1770 = vmatprep.subr.mxu0 0.0
    %1771 = vmatpush1.msra.mxu0 0.0
    %1772 = vmatprep.subr.mxu0 0.0
    %1773 = vmatpush1.msra.mxu0 0.0
    %1774 = vmatprep.subr.mxu0 0.0
    %1775 = vmatpush1.msra.mxu0 0.0
    %1776 = vmatprep.mubr.f32.mxu0 0.0
    %1777 = vmatmul.mubr.f32.gmra.mrb[0].mxu0 %v1707
    %v1778 = vpop.f32.mrb[0].mxu0
    %v1779 = vadd.f32 0.0, %v1778
    %v1780 = vpop.f32.mrb[0].mxu0
    %1781 = vmatprep.mubr.f32.mxu0 0.0
    %1782 = vmatmul.mubr.f32.gmra.mrb[0].mxu0 %v1710
    %v1783 = vpop.f32.mrb[0].mxu0
    %v1784 = vadd.f32 0.0, %v1783
    %v1785 = vpop.f32.mrb[0].mxu0
    %1786 = vdwg.mxu0
    %v1787 = vrcp.pop %v1779
    %v1788 = vmul.f32 %v1703, %v1787
    %v1789 = vrcp.pop %v1784
    %v1790 = vmul.f32 %v1705, %v1789
    %v1792 = vsel %vm692, %v1788, 0
    %1794 = vmatprep.subr.mxu0 0.0
    %1795 = vmatpush1.msra.mxu0 %v1534
    %1796 = vmatprep.subr.mxu0 0.0
    %1797 = vmatpush1.msra.mxu0 %v1535
    %1798 = vmatprep.subr.mxu0 0.0
    %1799 = vmatpush1.msra.mxu0 %v1536
    %1800 = vmatprep.subr.mxu0 0.0
    %1801 = vmatpush1.msra.mxu0 %v1537
    %1802 = vmatprep.subr.mxu0 0.0
    %1803 = vmatpush1.msra.mxu0 %v1538
    %1804 = vmatprep.subr.mxu0 0.0
    %1805 = vmatpush1.msra.mxu0 %v1539
    %1806 = vmatprep.subr.mxu0 0.0
    %1807 = vmatpush1.msra.mxu0 %v1540
    %1808 = vmatprep.subr.mxu0 0.0
    %1809 = vmatpush1.msra.mxu0 %v1541
    %1810 = vmatprep.subr.mxu0 0.0
    %1811 = vmatpush1.msra.mxu0 0.0
    %1812 = vmatprep.subr.mxu0 0.0
    %1813 = vmatpush1.msra.mxu0 0.0
    %1814 = vmatprep.subr.mxu0 0.0
    %1815 = vmatpush1.msra.mxu0 0.0
    %1816 = vmatprep.subr.mxu0 0.0
    %1817 = vmatpush1.msra.mxu0 0.0
    %1818 = vmatprep.subr.mxu0 0.0
    %1819 = vmatpush1.msra.mxu0 0.0
    %1820 = vmatprep.subr.mxu0 0.0
    %1821 = vmatpush1.msra.mxu0 0.0
    %1822 = vmatprep.subr.mxu0 0.0
    %1823 = vmatpush1.msra.mxu0 0.0
    %1824 = vmatprep.subr.mxu0 0.0
    %1825 = vmatpush1.msra.mxu0 0.0
    %1826 = vmatprep.subr.mxu0 0.0
    %1827 = vmatpush1.msra.mxu0 0.0
    %1828 = vmatprep.subr.mxu0 0.0
    %1829 = vmatpush1.msra.mxu0 0.0
    %1830 = vmatprep.subr.mxu0 0.0
    %1831 = vmatpush1.msra.mxu0 0.0
    %1832 = vmatprep.subr.mxu0 0.0
    %1833 = vmatpush1.msra.mxu0 0.0
    %1834 = vmatprep.subr.mxu0 0.0
    %1835 = vmatpush1.msra.mxu0 0.0
    %1836 = vmatprep.subr.mxu0 0.0
    %1837 = vmatpush1.msra.mxu0 0.0
    %1838 = vmatprep.subr.mxu0 0.0
    %1839 = vmatpush1.msra.mxu0 0.0
    %1840 = vmatprep.subr.mxu0 0.0
    %1841 = vmatpush1.msra.mxu0 0.0
    %1842 = vmatprep.subr.mxu0 0.0
    %1843 = vmatpush1.msra.mxu0 0.0
    %1844 = vmatprep.subr.mxu0 0.0
    %1845 = vmatpush1.msra.mxu0 0.0
    %1846 = vmatprep.subr.mxu0 0.0
    %1847 = vmatpush1.msra.mxu0 0.0
    %1848 = vmatprep.subr.mxu0 0.0
    %1849 = vmatpush1.msra.mxu0 0.0
    %1850 = vmatprep.subr.mxu0 0.0
    %1851 = vmatpush1.msra.mxu0 0.0
    %1852 = vmatprep.subr.mxu0 0.0
    %1853 = vmatpush1.msra.mxu0 0.0
    %1854 = vmatprep.subr.mxu0 0.0
    %1855 = vmatpush1.msra.mxu0 0.0
    %1856 = vmatprep.subr.mxu0 0.0
    %1857 = vmatpush1.msra.mxu0 0.0
    %1858 = vmatprep.mubr.f32.mxu0 0.0
    %1859 = vmatmul.mubr.f32.gmra.mrb[0].mxu0 %v1792
    %v1860 = vpop.f32.mrb[0].mxu0
    %v1861 = vadd.f32 0.0, %v1860
    %v1862 = vpop.f32.mrb[0].mxu0
    %1863 = vdwg.mxu0
    %v1865 = vsel %vm692, %v1790, 0
    %1867 = vmatprep.subr.mxu0 0.0
    %1868 = vmatpush1.msra.mxu0 %v1542
    %1869 = vmatprep.subr.mxu0 0.0
    %1870 = vmatpush1.msra.mxu0 %v1543
    %1871 = vmatprep.subr.mxu0 0.0
    %1872 = vmatpush1.msra.mxu0 %v1544
    %1873 = vmatprep.subr.mxu0 0.0
    %1874 = vmatpush1.msra.mxu0 %v1545
    %1875 = vmatprep.subr.mxu0 0.0
    %1876 = vmatpush1.msra.mxu0 %v1546
    %1877 = vmatprep.subr.mxu0 0.0
    %1878 = vmatpush1.msra.mxu0 %v1547
    %1879 = vmatprep.subr.mxu0 0.0
    %1880 = vmatpush1.msra.mxu0 %v1548
    %1881 = vmatprep.subr.mxu0 0.0
    %1882 = vmatpush1.msra.mxu0 %v1549
    %1883 = vmatprep.subr.mxu0 0.0
    %1884 = vmatpush1.msra.mxu0 0.0
    %1885 = vmatprep.subr.mxu0 0.0
    %1886 = vmatpush1.msra.mxu0 0.0
    %1887 = vmatprep.subr.mxu0 0.0
    %1888 = vmatpush1.msra.mxu0 0.0
    %1889 = vmatprep.subr.mxu0 0.0
    %1890 = vmatpush1.msra.mxu0 0.0
    %1891 = vmatprep.subr.mxu0 0.0
    %1892 = vmatpush1.msra.mxu0 0.0
    %1893 = vmatprep.subr.mxu0 0.0
    %1894 = vmatpush1.msra.mxu0 0.0
    %1895 = vmatprep.subr.mxu0 0.0
    %1896 = vmatpush1.msra.mxu0 0.0
    %1897 = vmatprep.subr.mxu0 0.0
    %1898 = vmatpush1.msra.mxu0 0.0
    %1899 = vmatprep.subr.mxu0 0.0
    %1900 = vmatpush1.msra.mxu0 0.0
    %1901 = vmatprep.subr.mxu0 0.0
    %1902 = vmatpush1.msra.mxu0 0.0
    %1903 = vmatprep.subr.mxu0 0.0
    %1904 = vmatpush1.msra.mxu0 0.0
    %1905 = vmatprep.subr.mxu0 0.0
    %1906 = vmatpush1.msra.mxu0 0.0
    %1907 = vmatprep.subr.mxu0 0.0
    %1908 = vmatpush1.msra.mxu0 0.0
    %1909 = vmatprep.subr.mxu0 0.0
    %1910 = vmatpush1.msra.mxu0 0.0
    %1911 = vmatprep.subr.mxu0 0.0
    %1912 = vmatpush1.msra.mxu0 0.0
    %1913 = vmatprep.subr.mxu0 0.0
    %1914 = vmatpush1.msra.mxu0 0.0
    %1915 = vmatprep.subr.mxu0 0.0
    %1916 = vmatpush1.msra.mxu0 0.0
    %1917 = vmatprep.subr.mxu0 0.0
    %1918 = vmatpush1.msra.mxu0 0.0
    %1919 = vmatprep.subr.mxu0 0.0
    %1920 = vmatpush1.msra.mxu0 0.0
    %1921 = vmatprep.subr.mxu0 0.0
    %1922 = vmatpush1.msra.mxu0 0.0
    %1923 = vmatprep.subr.mxu0 0.0
    %1924 = vmatpush1.msra.mxu0 0.0
    %1925 = vmatprep.subr.mxu0 0.0
    %1926 = vmatpush1.msra.mxu0 0.0
    %1927 = vmatprep.subr.mxu0 0.0
    %1928 = vmatpush1.msra.mxu0 0.0
    %1929 = vmatprep.subr.mxu0 0.0
    %1930 = vmatpush1.msra.mxu0 0.0
    %1931 = vmatprep.mubr.f32.mxu0 0.0
    %1932 = vmatmul.mubr.f32.gmra.mrb[0].mxu0 %v1865
    %v1933 = vpop.f32.mrb[0].mxu0
    %v1934 = vadd.f32 0.0, %v1933
    %v1935 = vpop.f32.mrb[0].mxu0
    %1936 = vdwg.mxu0
    %s1937 = scalar_lea.vmem [#allocation11], 128
    %v1938 = vld [vmem:[%s1937] sm:$0xff]
    %v1939 = vld [vmem:[%s1937 + $0x8] sm:$0xff]
    %v1940 = vld [vmem:[%s1937 + $0x10] sm:$0xff]
    %v1941 = vld [vmem:[%s1937 + $0x18] sm:$0xff]
    %v1942 = vld [vmem:[%s1937 + $0x20] sm:$0xff]
    %v1943 = vld [vmem:[%s1937 + $0x28] sm:$0xff]
    %v1944 = vld [vmem:[%s1937 + $0x30] sm:$0xff]
    %v1945 = vld [vmem:[%s1937 + $0x38] sm:$0xff]
    %v1946 = vld [vmem:[%s1937 + $0x40] sm:$0xff]
    %v1947 = vld [vmem:[%s1937 + $0x48] sm:$0xff]
    %v1948 = vld [vmem:[%s1937 + $0x50] sm:$0xff]
    %v1949 = vld [vmem:[%s1937 + $0x58] sm:$0xff]
    %v1950 = vld [vmem:[%s1937 + $0x60] sm:$0xff]
    %v1951 = vld [vmem:[%s1937 + $0x68] sm:$0xff]
    %v1952 = vld [vmem:[%s1937 + $0x70] sm:$0xff]
    %v1953 = vld [vmem:[%s1937 + $0x78] sm:$0xff]
    %s1954 = scalar_lea.vmem %s8, 1
    %v1955 = vld [vmem:[%s1954] sm:$0x1]
    %v1957 = vlaneseq
    %v1958 = vshrl.u32 %v1957, 7
    %v1959 = vsub.s32 0, %v1958
    %v1960 = vrot.slane %v1955, %v1959
    %1962 = vmatprep.subr.mxu0 0.0
    %1963 = vmatpush1.msra.mxu0 %v1938
    %1964 = vmatprep.subr.mxu0 0.0
    %1965 = vmatpush1.msra.mxu0 %v1939
    %1966 = vmatprep.subr.mxu0 0.0
    %1967 = vmatpush1.msra.mxu0 %v1940
    %1968 = vmatprep.subr.mxu0 0.0
    %1969 = vmatpush1.msra.mxu0 %v1941
    %1970 = vmatprep.subr.mxu0 0.0
    %1971 = vmatpush1.msra.mxu0 %v1942
    %1972 = vmatprep.subr.mxu0 0.0
    %1973 = vmatpush1.msra.mxu0 %v1943
    %1974 = vmatprep.subr.mxu0 0.0
    %1975 = vmatpush1.msra.mxu0 %v1944
    %1976 = vmatprep.subr.mxu0 0.0
    %1977 = vmatpush1.msra.mxu0 %v1945
    %1978 = vmatprep.subr.mxu0 0.0
    %1979 = vmatpush1.msra.mxu0 %v1946
    %1980 = vmatprep.subr.mxu0 0.0
    %1981 = vmatpush1.msra.mxu0 %v1947
    %1982 = vmatprep.subr.mxu0 0.0
    %1983 = vmatpush1.msra.mxu0 %v1948
    %1984 = vmatprep.subr.mxu0 0.0
    %1985 = vmatpush1.msra.mxu0 %v1949
    %1986 = vmatprep.subr.mxu0 0.0
    %1987 = vmatpush1.msra.mxu0 %v1950
    %1988 = vmatprep.subr.mxu0 0.0
    %1989 = vmatpush1.msra.mxu0 %v1951
    %1990 = vmatprep.subr.mxu0 0.0
    %1991 = vmatpush1.msra.mxu0 %v1952
    %1992 = vmatprep.subr.mxu0 0.0
    %1993 = vmatpush1.msra.mxu0 %v1953
    %1994 = vmatprep.subr.mxu0 0.0
    %1995 = vmatpush1.msra.mxu0 0.0
    %1996 = vmatprep.subr.mxu0 0.0
    %1997 = vmatpush1.msra.mxu0 0.0
    %1998 = vmatprep.subr.mxu0 0.0
    %1999 = vmatpush1.msra.mxu0 0.0
    %2000 = vmatprep.subr.mxu0 0.0
    %2001 = vmatpush1.msra.mxu0 0.0
    %2002 = vmatprep.subr.mxu0 0.0
    %2003 = vmatpush1.msra.mxu0 0.0
    %2004 = vmatprep.subr.mxu0 0.0
    %2005 = vmatpush1.msra.mxu0 0.0
    %2006 = vmatprep.subr.mxu0 0.0
    %2007 = vmatpush1.msra.mxu0 0.0
    %2008 = vmatprep.subr.mxu0 0.0
    %2009 = vmatpush1.msra.mxu0 0.0
    %2010 = vmatprep.subr.mxu0 0.0
    %2011 = vmatpush1.msra.mxu0 0.0
    %2012 = vmatprep.subr.mxu0 0.0
    %2013 = vmatpush1.msra.mxu0 0.0
    %2014 = vmatprep.subr.mxu0 0.0
    %2015 = vmatpush1.msra.mxu0 0.0
    %2016 = vmatprep.subr.mxu0 0.0
    %2017 = vmatpush1.msra.mxu0 0.0
    %2018 = vmatprep.subr.mxu0 0.0
    %2019 = vmatpush1.msra.mxu0 0.0
    %2020 = vmatprep.subr.mxu0 0.0
    %2021 = vmatpush1.msra.mxu0 0.0
    %2022 = vmatprep.subr.mxu0 0.0
    %2023 = vmatpush1.msra.mxu0 0.0
    %2024 = vmatprep.subr.mxu0 0.0
    %2025 = vmatpush1.msra.mxu0 0.0
    %2026 = vmatprep.mubr.f32.mxu0 0.0
    %2027 = vmatmul.mubr.f32.gmra.mrb[0].mxu0 %v1861
    %v2028 = vpop.f32.mrb[0].mxu0
    %v2029 = vadd.f32 %v1960, %v2028
    %v2030 = vpop.f32.mrb[0].mxu0
    %2031 = vmatprep.mubr.f32.mxu0 0.0
    %2032 = vmatmul.mubr.f32.gmra.mrb[0].mxu0 %v1934
    %v2033 = vpop.f32.mrb[0].mxu0
    %v2034 = vadd.f32 %v1960, %v2033
    %v2035 = vpop.f32.mrb[0].mxu0
    %2036 = vdwg.mxu0
    %v2037 = vadd.f32 %v1273, %v2029
    %v2038 = vadd.f32 %v1274, %v2034
    %s2039 = scalar_lea.vmem %s9, 1
    %v2040 = vld [vmem:[%s2039] sm:$0x1]
    %v2041 = vmul.f32 %v2037, %v2037
    %v2042 = vmul.f32 %v2038, %v2038
    %2043 = vadd.xlane.f32.xlu0 %v2041
    %v2044 = vpop.xlane.xlu0 %2043
    %2045 = vadd.xlane.f32.xlu0 %v2042
    %v2046 = vpop.xlane.xlu0 %2045
    %v2047 = vmul.f32 %v2044, 0.03125
    %v2048 = vmul.f32 %v2046, 0.03125
    %v2049 = vadd.f32 %v2047, 1e-06
    %v2050 = vadd.f32 %v2048, 1e-06
    %v2051 = vrsqrt.pop %v2049
    %v2052 = vrsqrt.pop %v2050
    %v2053 = vmul.f32 %v2037, %v2051
    %v2054 = vmul.f32 %v2038, %v2052
    %v2056 = vlaneseq
    %v2057 = vshrl.u32 %v2056, 7
    %v2058 = vsub.s32 0, %v2057
    %v2059 = vrot.slane %v2040, %v2058
    %v2061 = vmul.f32 %v2053, %v2059
    %v2062 = vmul.f32 %v2054, %v2059
    %s2063 = scalar_lea.vmem [#allocation13], 128
    %v2064 = vld [vmem:[%s2063] sm:$0xff]
    %v2065 = vld [vmem:[%s2063 + $0x8] sm:$0xff]
    %v2066 = vld [vmem:[%s2063 + $0x10] sm:$0xff]
    %v2067 = vld [vmem:[%s2063 + $0x18] sm:$0xff]
    %v2068 = vld [vmem:[%s2063 + $0x20] sm:$0xff]
    %v2069 = vld [vmem:[%s2063 + $0x28] sm:$0xff]
    %v2070 = vld [vmem:[%s2063 + $0x30] sm:$0xff]
    %v2071 = vld [vmem:[%s2063 + $0x38] sm:$0xff]
    %v2072 = vld [vmem:[%s2063 + $0x40] sm:$0xff]
    %v2073 = vld [vmem:[%s2063 + $0x48] sm:$0xff]
    %v2074 = vld [vmem:[%s2063 + $0x50] sm:$0xff]
    %v2075 = vld [vmem:[%s2063 + $0x58] sm:$0xff]
    %v2076 = vld [vmem:[%s2063 + $0x60] sm:$0xff]
    %v2077 = vld [vmem:[%s2063 + $0x68] sm:$0xff]
    %v2078 = vld [vmem:[%s2063 + $0x70] sm:$0xff]
    %v2079 = vld [vmem:[%s2063 + $0x78] sm:$0xff]
    %s2080 = scalar_lea.vmem %s11, 1
    %v2081 = vld [vmem:[%s2080] sm:$0x1]
    %v2083 = vlaneseq
    %v2084 = vshrl.u32 %v2083, 7
    %v2085 = vsub.s32 0, %v2084
    %v2086 = vrot.slane %v2081, %v2085
    %2088 = vmatprep.subr.mxu0 0.0
    %2089 = vmatpush1.msra.mxu0 %v2064
    %2090 = vmatprep.subr.mxu0 0.0
    %2091 = vmatpush1.msra.mxu0 %v2065
    %2092 = vmatprep.subr.mxu0 0.0
    %2093 = vmatpush1.msra.mxu0 %v2066
    %2094 = vmatprep.subr.mxu0 0.0
    %2095 = vmatpush1.msra.mxu0 %v2067
    %2096 = vmatprep.subr.mxu0 0.0
    %2097 = vmatpush1.msra.mxu0 %v2068
    %2098 = vmatprep.subr.mxu0 0.0
    %2099 = vmatpush1.msra.mxu0 %v2069
    %2100 = vmatprep.subr.mxu0 0.0
    %2101 = vmatpush1.msra.mxu0 %v2070
    %2102 = vmatprep.subr.mxu0 0.0
    %2103 = vmatpush1.msra.mxu0 %v2071
    %2104 = vmatprep.subr.mxu0 0.0
    %2105 = vmatpush1.msra.mxu0 %v2072
    %2106 = vmatprep.subr.mxu0 0.0
    %2107 = vmatpush1.msra.mxu0 %v2073
    %2108 = vmatprep.subr.mxu0 0.0
    %2109 = vmatpush1.msra.mxu0 %v2074
    %2110 = vmatprep.subr.mxu0 0.0
    %2111 = vmatpush1.msra.mxu0 %v2075
    %2112 = vmatprep.subr.mxu0 0.0
    %2113 = vmatpush1.msra.mxu0 %v2076
    %2114 = vmatprep.subr.mxu0 0.0
    %2115 = vmatpush1.msra.mxu0 %v2077
    %2116 = vmatprep.subr.mxu0 0.0
    %2117 = vmatpush1.msra.mxu0 %v2078
    %2118 = vmatprep.subr.mxu0 0.0
    %2119 = vmatpush1.msra.mxu0 %v2079
    %2120 = vmatprep.subr.mxu0 0.0
    %2121 = vmatpush1.msra.mxu0 0.0
    %2122 = vmatprep.subr.mxu0 0.0
    %2123 = vmatpush1.msra.mxu0 0.0
    %2124 = vmatprep.subr.mxu0 0.0
    %2125 = vmatpush1.msra.mxu0 0.0
    %2126 = vmatprep.subr.mxu0 0.0
    %2127 = vmatpush1.msra.mxu0 0.0
    %2128 = vmatprep.subr.mxu0 0.0
    %2129 = vmatpush1.msra.mxu0 0.0
    %2130 = vmatprep.subr.mxu0 0.0
    %2131 = vmatpush1.msra.mxu0 0.0
    %2132 = vmatprep.subr.mxu0 0.0
    %2133 = vmatpush1.msra.mxu0 0.0
    %2134 = vmatprep.subr.mxu0 0.0
    %2135 = vmatpush1.msra.mxu0 0.0
    %2136 = vmatprep.subr.mxu0 0.0
    %2137 = vmatpush1.msra.mxu0 0.0
    %2138 = vmatprep.subr.mxu0 0.0
    %2139 = vmatpush1.msra.mxu0 0.0
    %2140 = vmatprep.subr.mxu0 0.0
    %2141 = vmatpush1.msra.mxu0 0.0
    %2142 = vmatprep.subr.mxu0 0.0
    %2143 = vmatpush1.msra.mxu0 0.0
    %2144 = vmatprep.subr.mxu0 0.0
    %2145 = vmatpush1.msra.mxu0 0.0
    %2146 = vmatprep.subr.mxu0 0.0
    %2147 = vmatpush1.msra.mxu0 0.0
    %2148 = vmatprep.subr.mxu0 0.0
    %2149 = vmatpush1.msra.mxu0 0.0
    %2150 = vmatprep.subr.mxu0 0.0
    %2151 = vmatpush1.msra.mxu0 0.0
    %2152 = vmatprep.mubr.f32.mxu0 0.0
    %2153 = vmatmul.mubr.f32.gmra.mrb[0].mxu0 %v2061
    %v2154 = vpop.f32.mrb[0].mxu0
    %v2155 = vadd.f32 %v2086, %v2154
    %v2156 = vpop.f32.mrb[0].mxu0
    %2157 = vmatprep.mubr.f32.mxu0 0.0
    %2158 = vmatmul.mubr.f32.gmra.mrb[0].mxu0 %v2062
    %v2159 = vpop.f32.mrb[0].mxu0
    %v2160 = vadd.f32 %v2086, %v2159
    %v2161 = vpop.f32.mrb[0].mxu0
    %2162 = vdwg.mxu0
    %v2163 = vmul.f32 %v2155, 0.5
    %v2164 = vmul.f32 %v2160, 0.5
    %v2165 = vmul.f32 %v2155, 0.044715
    %v2166 = vmul.f32 %v2160, 0.044715
    %v2167 = vmul.f32 %v2165, %v2155
    %v2168 = vmul.f32 %v2166, %v2160
    %v2169 = vmul.f32 %v2167, %v2155
    %v2170 = vmul.f32 %v2168, %v2160
    %v2171 = vadd.f32 %v2155, %v2169
    %v2172 = vadd.f32 %v2160, %v2170
    %v2173 = vmul.f32 %v2171, 0.7978846
    %v2174 = vmul.f32 %v2172, 0.7978846
    %v2175 = vtanh.pop %v2173
    %v2176 = vtanh.pop %v2174
    %v2177 = vadd.f32 %v2175, 1.0
    %v2178 = vadd.f32 %v2176, 1.0
    %v2179 = vmul.f32 %v2163, %v2177
    %v2180 = vmul.f32 %v2164, %v2178
    %s2181 = scalar_lea.vmem [#allocation14], 128
    %v2182 = vld [vmem:[%s2181] sm:$0xff]
    %v2183 = vld [vmem:[%s2181 + $0x8] sm:$0xff]
    %v2184 = vld [vmem:[%s2181 + $0x10] sm:$0xff]
    %v2185 = vld [vmem:[%s2181 + $0x18] sm:$0xff]
    %v2186 = vld [vmem:[%s2181 + $0x20] sm:$0xff]
    %v2187 = vld [vmem:[%s2181 + $0x28] sm:$0xff]
    %v2188 = vld [vmem:[%s2181 + $0x30] sm:$0xff]
    %v2189 = vld [vmem:[%s2181 + $0x38] sm:$0xff]
    %v2190 = vld [vmem:[%s2181 + $0x40] sm:$0xff]
    %v2191 = vld [vmem:[%s2181 + $0x48] sm:$0xff]
    %v2192 = vld [vmem:[%s2181 + $0x50] sm:$0xff]
    %v2193 = vld [vmem:[%s2181 + $0x58] sm:$0xff]
    %v2194 = vld [vmem:[%s2181 + $0x60] sm:$0xff]
    %v2195 = vld [vmem:[%s2181 + $0x68] sm:$0xff]
    %v2196 = vld [vmem:[%s2181 + $0x70] sm:$0xff]
    %v2197 = vld [vmem:[%s2181 + $0x78] sm:$0xff]
    %s2198 = scalar_lea.vmem %s13, 1
    %v2199 = vld [vmem:[%s2198] sm:$0x1]
    %v2201 = vlaneseq
    %v2202 = vshrl.u32 %v2201, 7
    %v2203 = vsub.s32 0, %v2202
    %v2204 = vrot.slane %v2199, %v2203
    %2206 = vmatprep.subr.mxu0 0.0
    %2207 = vmatpush1.msra.mxu0 %v2182
    %2208 = vmatprep.subr.mxu0 0.0
    %2209 = vmatpush1.msra.mxu0 %v2183
    %2210 = vmatprep.subr.mxu0 0.0
    %2211 = vmatpush1.msra.mxu0 %v2184
    %2212 = vmatprep.subr.mxu0 0.0
    %2213 = vmatpush1.msra.mxu0 %v2185
    %2214 = vmatprep.subr.mxu0 0.0
    %2215 = vmatpush1.msra.mxu0 %v2186
    %2216 = vmatprep.subr.mxu0 0.0
    %2217 = vmatpush1.msra.mxu0 %v2187
    %2218 = vmatprep.subr.mxu0 0.0
    %2219 = vmatpush1.msra.mxu0 %v2188
    %2220 = vmatprep.subr.mxu0 0.0
    %2221 = vmatpush1.msra.mxu0 %v2189
    %2222 = vmatprep.subr.mxu0 0.0
    %2223 = vmatpush1.msra.mxu0 %v2190
    %2224 = vmatprep.subr.mxu0 0.0
    %2225 = vmatpush1.msra.mxu0 %v2191
    %2226 = vmatprep.subr.mxu0 0.0
    %2227 = vmatpush1.msra.mxu0 %v2192
    %2228 = vmatprep.subr.mxu0 0.0
    %2229 = vmatpush1.msra.mxu0 %v2193
    %2230 = vmatprep.subr.mxu0 0.0
    %2231 = vmatpush1.msra.mxu0 %v2194
    %2232 = vmatprep.subr.mxu0 0.0
    %2233 = vmatpush1.msra.mxu0 %v2195
    %2234 = vmatprep.subr.mxu0 0.0
    %2235 = vmatpush1.msra.mxu0 %v2196
    %2236 = vmatprep.subr.mxu0 0.0
    %2237 = vmatpush1.msra.mxu0 %v2197
    %2238 = vmatprep.subr.mxu0 0.0
    %2239 = vmatpush1.msra.mxu0 0.0
    %2240 = vmatprep.subr.mxu0 0.0
    %2241 = vmatpush1.msra.mxu0 0.0
    %2242 = vmatprep.subr.mxu0 0.0
    %2243 = vmatpush1.msra.mxu0 0.0
    %2244 = vmatprep.subr.mxu0 0.0
    %2245 = vmatpush1.msra.mxu0 0.0
    %2246 = vmatprep.subr.mxu0 0.0
    %2247 = vmatpush1.msra.mxu0 0.0
    %2248 = vmatprep.subr.mxu0 0.0
    %2249 = vmatpush1.msra.mxu0 0.0
    %2250 = vmatprep.subr.mxu0 0.0
    %2251 = vmatpush1.msra.mxu0 0.0
    %2252 = vmatprep.subr.mxu0 0.0
    %2253 = vmatpush1.msra.mxu0 0.0
    %2254 = vmatprep.subr.mxu0 0.0
    %2255 = vmatpush1.msra.mxu0 0.0
    %2256 = vmatprep.subr.mxu0 0.0
    %2257 = vmatpush1.msra.mxu0 0.0
    %2258 = vmatprep.subr.mxu0 0.0
    %2259 = vmatpush1.msra.mxu0 0.0
    %2260 = vmatprep.subr.mxu0 0.0
    %2261 = vmatpush1.msra.mxu0 0.0
    %2262 = vmatprep.subr.mxu0 0.0
    %2263 = vmatpush1.msra.mxu0 0.0
    %2264 = vmatprep.subr.mxu0 0.0
    %2265 = vmatpush1.msra.mxu0 0.0
    %2266 = vmatprep.subr.mxu0 0.0
    %2267 = vmatpush1.msra.mxu0 0.0
    %2268 = vmatprep.subr.mxu0 0.0
    %2269 = vmatpush1.msra.mxu0 0.0
    %2270 = vmatprep.mubr.f32.mxu0 0.0
    %2271 = vmatmul.mubr.f32.gmra.mrb[0].mxu0 %v2179
    %v2272 = vpop.f32.mrb[0].mxu0
    %v2273 = vadd.f32 %v2204, %v2272
    %v2274 = vpop.f32.mrb[0].mxu0
    %2275 = vmatprep.mubr.f32.mxu0 0.0
    %2276 = vmatmul.mubr.f32.gmra.mrb[0].mxu0 %v2180
    %v2277 = vpop.f32.mrb[0].mxu0
    %v2278 = vadd.f32 %v2204, %v2277
    %v2279 = vpop.f32.mrb[0].mxu0
    %2280 = vdwg.mxu0
    %v2281 = vadd.f32 %v2037, %v2273
    %v2282 = vadd.f32 %v2038, %v2278
    %v2283 = vld [vmem:[%s14] sm:$0x1]
    %v2284 = vmul.f32 %v2281, %v2281
    %v2285 = vmul.f32 %v2282, %v2282
    %2286 = vadd.xlane.f32.xlu0 %v2284
    %v2287 = vpop.xlane.xlu0 %2286
    %2288 = vadd.xlane.f32.xlu0 %v2285
    %v2289 = vpop.xlane.xlu0 %2288
    %v2290 = vmul.f32 %v2287, 0.03125
    %v2291 = vmul.f32 %v2289, 0.03125
    %v2292 = vadd.f32 %v2290, 1e-06
    %v2293 = vadd.f32 %v2291, 1e-06
    %v2294 = vrsqrt.pop %v2292
    %v2295 = vrsqrt.pop %v2293
    %v2296 = vmul.f32 %v2281, %v2294
    %v2297 = vmul.f32 %v2282, %v2295
    %v2299 = vlaneseq
    %v2300 = vshrl.u32 %v2299, 7
    %v2301 = vsub.s32 0, %v2300
    %v2302 = vrot.slane %v2283, %v2301
    %v2304 = vmul.f32 %v2296, %v2302
    %v2305 = vmul.f32 %v2297, %v2302
    %v2306 = vld [vmem:[#allocation16] sm:$0xff]
    %v2307 = vld [vmem:[#allocation16 + $0x8] sm:$0xff]
    %v2308 = vld [vmem:[#allocation16 + $0x10] sm:$0xff]
    %v2309 = vld [vmem:[#allocation16 + $0x18] sm:$0xff]
    %v2310 = vld [vmem:[#allocation16 + $0x20] sm:$0xff]
    %v2311 = vld [vmem:[#allocation16 + $0x28] sm:$0xff]
    %v2312 = vld [vmem:[#allocation16 + $0x30] sm:$0xff]
    %v2313 = vld [vmem:[#allocation16 + $0x38] sm:$0xff]
    %v2314 = vld [vmem:[#allocation16 + $0x40] sm:$0xff]
    %v2315 = vld [vmem:[#allocation16 + $0x48] sm:$0xff]
    %v2316 = vld [vmem:[#allocation16 + $0x50] sm:$0xff]
    %v2317 = vld [vmem:[#allocation16 + $0x58] sm:$0xff]
    %v2318 = vld [vmem:[#allocation16 + $0x60] sm:$0xff]
    %v2319 = vld [vmem:[#allocation16 + $0x68] sm:$0xff]
    %v2320 = vld [vmem:[#allocation16 + $0x70] sm:$0xff]
    %v2321 = vld [vmem:[#allocation16 + $0x78] sm:$0xff]
    %v2322 = vld [vmem:[#allocation16 + $0x80] sm:$0xff]
    %v2323 = vld [vmem:[#allocation16 + $0x88] sm:$0xff]
    %v2324 = vld [vmem:[#allocation16 + $0x90] sm:$0xff]
    %v2325 = vld [vmem:[#allocation16 + $0x98] sm:$0xff]
    %v2326 = vld [vmem:[#allocation16 + $0xa0] sm:$0xff]
    %v2327 = vld [vmem:[#allocation16 + $0xa8] sm:$0xff]
    %v2328 = vld [vmem:[#allocation16 + $0xb0] sm:$0xff]
    %v2329 = vld [vmem:[#allocation16 + $0xb8] sm:$0xff]
    %v2330 = vld [vmem:[#allocation16 + $0xc0] sm:$0xff]
    %v2331 = vld [vmem:[#allocation16 + $0xc8] sm:$0xff]
    %v2332 = vld [vmem:[#allocation16 + $0xd0] sm:$0xff]
    %v2333 = vld [vmem:[#allocation16 + $0xd8] sm:$0xff]
    %v2334 = vld [vmem:[#allocation16 + $0xe0] sm:$0xff]
    %v2335 = vld [vmem:[#allocation16 + $0xe8] sm:$0xff]
    %v2336 = vld [vmem:[#allocation16 + $0xf0] sm:$0xff]
    %v2337 = vld [vmem:[#allocation16 + $0xf8] sm:$0xff]
    %v2338 = vld [vmem:[#allocation16 + $0x100] sm:$0xff]
    %v2339 = vld [vmem:[#allocation16 + $0x108] sm:$0xff]
    %v2340 = vld [vmem:[#allocation16 + $0x110] sm:$0xff]
    %v2341 = vld [vmem:[#allocation16 + $0x118] sm:$0xff]
    %v2342 = vld [vmem:[#allocation16 + $0x120] sm:$0xff]
    %v2343 = vld [vmem:[#allocation16 + $0x128] sm:$0xff]
    %v2344 = vld [vmem:[#allocation16 + $0x130] sm:$0xff]
    %v2345 = vld [vmem:[#allocation16 + $0x138] sm:$0xff]
    %v2346 = vld [vmem:[#allocation16 + $0x140] sm:$0xff]
    %v2347 = vld [vmem:[#allocation16 + $0x148] sm:$0xff]
    %v2348 = vld [vmem:[#allocation16 + $0x150] sm:$0xff]
    %v2349 = vld [vmem:[#allocation16 + $0x158] sm:$0xff]
    %v2350 = vld [vmem:[#allocation16 + $0x160] sm:$0xff]
    %v2351 = vld [vmem:[#allocation16 + $0x168] sm:$0xff]
    %v2352 = vld [vmem:[#allocation16 + $0x170] sm:$0xff]
    %v2353 = vld [vmem:[#allocation16 + $0x178] sm:$0xff]
    %v2354 = vld [vmem:[#allocation16 + $0x180] sm:$0xff]
    %v2355 = vld [vmem:[#allocation16 + $0x188] sm:$0xff]
    %v2356 = vld [vmem:[#allocation16 + $0x190] sm:$0xff]
    %v2357 = vld [vmem:[#allocation16 + $0x198] sm:$0xff]
    %v2358 = vld [vmem:[#allocation16 + $0x1a0] sm:$0xff]
    %v2359 = vld [vmem:[#allocation16 + $0x1a8] sm:$0xff]
    %v2360 = vld [vmem:[#allocation16 + $0x1b0] sm:$0xff]
    %v2361 = vld [vmem:[#allocation16 + $0x1b8] sm:$0xff]
    %v2362 = vld [vmem:[#allocation16 + $0x1c0] sm:$0xff]
    %v2363 = vld [vmem:[#allocation16 + $0x1c8] sm:$0xff]
    %v2364 = vld [vmem:[#allocation16 + $0x1d0] sm:$0xff]
    %v2365 = vld [vmem:[#allocation16 + $0x1d8] sm:$0xff]
    %v2366 = vld [vmem:[#allocation16 + $0x1e0] sm:$0xff]
    %v2367 = vld [vmem:[#allocation16 + $0x1e8] sm:$0xff]
    %v2368 = vld [vmem:[#allocation16 + $0x1f0] sm:$0xff]
    %v2369 = vld [vmem:[#allocation16 + $0x1f8] sm:$0xff]
    %2370 = vmatprep.subr.mxu0 %v2307
    %2371 = vmatpush1.msra.mxu0 %v2306
    %2372 = vmatprep.subr.mxu0 %v2311
    %2373 = vmatpush1.msra.mxu0 %v2310
    %2374 = vmatprep.subr.mxu0 %v2315
    %2375 = vmatpush1.msra.mxu0 %v2314
    %2376 = vmatprep.subr.mxu0 %v2319
    %2377 = vmatpush1.msra.mxu0 %v2318
    %2378 = vmatprep.subr.mxu0 %v2323
    %2379 = vmatpush1.msra.mxu0 %v2322
    %2380 = vmatprep.subr.mxu0 %v2327
    %2381 = vmatpush1.msra.mxu0 %v2326
    %2382 = vmatprep.subr.mxu0 %v2331
    %2383 = vmatpush1.msra.mxu0 %v2330
    %2384 = vmatprep.subr.mxu0 %v2335
    %2385 = vmatpush1.msra.mxu0 %v2334
    %2386 = vmatprep.subr.mxu0 %v2339
    %2387 = vmatpush1.msra.mxu0 %v2338
    %2388 = vmatprep.subr.mxu0 %v2343
    %2389 = vmatpush1.msra.mxu0 %v2342
    %2390 = vmatprep.subr.mxu0 %v2347
    %2391 = vmatpush1.msra.mxu0 %v2346
    %2392 = vmatprep.subr.mxu0 %v2351
    %2393 = vmatpush1.msra.mxu0 %v2350
    %2394 = vmatprep.subr.mxu0 %v2355
    %2395 = vmatpush1.msra.mxu0 %v2354
    %2396 = vmatprep.subr.mxu0 %v2359
    %2397 = vmatpush1.msra.mxu0 %v2358
    %2398 = vmatprep.subr.mxu0 %v2363
    %2399 = vmatpush1.msra.mxu0 %v2362
    %2400 = vmatprep.subr.mxu0 %v2367
    %2401 = vmatpush1.msra.mxu0 %v2366
    %2402 = vmatprep.subr.mxu0 0.0
    %2403 = vmatpush1.msra.mxu0 0.0
    %2404 = vmatprep.subr.mxu0 0.0
    %2405 = vmatpush1.msra.mxu0 0.0
    %2406 = vmatprep.subr.mxu0 0.0
    %2407 = vmatpush1.msra.mxu0 0.0
    %2408 = vmatprep.subr.mxu0 0.0
    %2409 = vmatpush1.msra.mxu0 0.0
    %2410 = vmatprep.subr.mxu0 0.0
    %2411 = vmatpush1.msra.mxu0 0.0
    %2412 = vmatprep.subr.mxu0 0.0
    %2413 = vmatpush1.msra.mxu0 0.0
    %2414 = vmatprep.subr.mxu0 0.0
    %2415 = vmatpush1.msra.mxu0 0.0
    %2416 = vmatprep.subr.mxu0 0.0
    %2417 = vmatpush1.msra.mxu0 0.0
    %2418 = vmatprep.subr.mxu0 0.0
    %2419 = vmatpush1.msra.mxu0 0.0
    %2420 = vmatprep.subr.mxu0 0.0
    %2421 = vmatpush1.msra.mxu0 0.0
    %2422 = vmatprep.subr.mxu0 0.0
    %2423 = vmatpush1.msra.mxu0 0.0
    %2424 = vmatprep.subr.mxu0 0.0
    %2425 = vmatpush1.msra.mxu0 0.0
    %2426 = vmatprep.subr.mxu0 0.0
    %2427 = vmatpush1.msra.mxu0 0.0
    %2428 = vmatprep.subr.mxu0 0.0
    %2429 = vmatpush1.msra.mxu0 0.0
    %2430 = vmatprep.subr.mxu0 0.0
    %2431 = vmatpush1.msra.mxu0 0.0
    %2432 = vmatprep.subr.mxu0 0.0
    %2433 = vmatpush1.msra.mxu0 0.0
    %2434 = vmatprep.mubr.f32.mxu0 0.0
    %2435 = vmatmul.mubr.f32.gmra.mrb[0].mxu0 %v2304
    %v2436 = vpop.f32.mrb[0].mxu0
    %v2437 = vadd.f32 0.0, %v2436
    %v2438 = vpop.f32.mrb[0].mxu0
    %v2439 = vadd.f32 0.0, %v2438
    %2440 = vmatprep.mubr.f32.mxu0 0.0
    %2441 = vmatmul.mubr.f32.gmra.mrb[0].mxu0 %v2305
    %v2442 = vpop.f32.mrb[0].mxu0
    %v2443 = vadd.f32 0.0, %v2442
    %v2444 = vpop.f32.mrb[0].mxu0
    %v2445 = vadd.f32 0.0, %v2444
    %2446 = vdwg.mxu0
    %2447 = vmatprep.subr.mxu0 %v2309
    %2448 = vmatpush1.msra.mxu0 %v2308
    %2449 = vmatprep.subr.mxu0 %v2313
    %2450 = vmatpush1.msra.mxu0 %v2312
    %2451 = vmatprep.subr.mxu0 %v2317
    %2452 = vmatpush1.msra.mxu0 %v2316
    %2453 = vmatprep.subr.mxu0 %v2321
    %2454 = vmatpush1.msra.mxu0 %v2320
    %2455 = vmatprep.subr.mxu0 %v2325
    %2456 = vmatpush1.msra.mxu0 %v2324
    %2457 = vmatprep.subr.mxu0 %v2329
    %2458 = vmatpush1.msra.mxu0 %v2328
    %2459 = vmatprep.subr.mxu0 %v2333
    %2460 = vmatpush1.msra.mxu0 %v2332
    %2461 = vmatprep.subr.mxu0 %v2337
    %2462 = vmatpush1.msra.mxu0 %v2336
    %2463 = vmatprep.subr.mxu0 %v2341
    %2464 = vmatpush1.msra.mxu0 %v2340
    %2465 = vmatprep.subr.mxu0 %v2345
    %2466 = vmatpush1.msra.mxu0 %v2344
    %2467 = vmatprep.subr.mxu0 %v2349
    %2468 = vmatpush1.msra.mxu0 %v2348
    %2469 = vmatprep.subr.mxu0 %v2353
    %2470 = vmatpush1.msra.mxu0 %v2352
    %2471 = vmatprep.subr.mxu0 %v2357
    %2472 = vmatpush1.msra.mxu0 %v2356
    %2473 = vmatprep.subr.mxu0 %v2361
    %2474 = vmatpush1.msra.mxu0 %v2360
    %2475 = vmatprep.subr.mxu0 %v2365
    %2476 = vmatpush1.msra.mxu0 %v2364
    %2477 = vmatprep.subr.mxu0 %v2369
    %2478 = vmatpush1.msra.mxu0 %v2368
    %2479 = vmatprep.subr.mxu0 0.0
    %2480 = vmatpush1.msra.mxu0 0.0
    %2481 = vmatprep.subr.mxu0 0.0
    %2482 = vmatpush1.msra.mxu0 0.0
    %2483 = vmatprep.subr.mxu0 0.0
    %2484 = vmatpush1.msra.mxu0 0.0
    %2485 = vmatprep.subr.mxu0 0.0
    %2486 = vmatpush1.msra.mxu0 0.0
    %2487 = vmatprep.subr.mxu0 0.0
    %2488 = vmatpush1.msra.mxu0 0.0
    %2489 = vmatprep.subr.mxu0 0.0
    %2490 = vmatpush1.msra.mxu0 0.0
    %2491 = vmatprep.subr.mxu0 0.0
    %2492 = vmatpush1.msra.mxu0 0.0
    %2493 = vmatprep.subr.mxu0 0.0
    %2494 = vmatpush1.msra.mxu0 0.0
    %2495 = vmatprep.subr.mxu0 0.0
    %2496 = vmatpush1.msra.mxu0 0.0
    %2497 = vmatprep.subr.mxu0 0.0
    %2498 = vmatpush1.msra.mxu0 0.0
    %2499 = vmatprep.subr.mxu0 0.0
    %2500 = vmatpush1.msra.mxu0 0.0
    %2501 = vmatprep.subr.mxu0 0.0
    %2502 = vmatpush1.msra.mxu0 0.0
    %2503 = vmatprep.subr.mxu0 0.0
    %2504 = vmatpush1.msra.mxu0 0.0
    %2505 = vmatprep.subr.mxu0 0.0
    %2506 = vmatpush1.msra.mxu0 0.0
    %2507 = vmatprep.subr.mxu0 0.0
    %2508 = vmatpush1.msra.mxu0 0.0
    %2509 = vmatprep.subr.mxu0 0.0
    %2510 = vmatpush1.msra.mxu0 0.0
    %2511 = vmatprep.mubr.f32.mxu0 0.0
    %2512 = vmatmul.mubr.f32.gmra.mrb[0].mxu0 %v2304
    %v2513 = vpop.f32.mrb[0].mxu0
    %v2514 = vadd.f32 0.0, %v2513
    %v2515 = vpop.f32.mrb[0].mxu0
    %v2516 = vadd.f32 0.0, %v2515
    %2517 = vmatprep.mubr.f32.mxu0 0.0
    %2518 = vmatmul.mubr.f32.gmra.mrb[0].mxu0 %v2305
    %v2519 = vpop.f32.mrb[0].mxu0
    %v2520 = vadd.f32 0.0, %v2519
    %v2521 = vpop.f32.mrb[0].mxu0
    %v2522 = vadd.f32 0.0, %v2521
    %2523 = vdwg.mxu0
    %2524 = vst [vmem:[#allocation17] sm:$0xff] %v2437
    %2525 = vst [vmem:[#allocation17 + $0x8] sm:$0xff] %v2439
    %2526 = vst [vmem:[#allocation17 + $0x10] sm:$0xff] %v2514
    %2527 = vst [vmem:[#allocation17 + $0x18] sm:$0xff] %v2516
    %2528 = vst [vmem:[#allocation17 + $0x20] sm:$0xff] %v2443
    %2529 = vst [vmem:[#allocation17 + $0x28] sm:$0xff] %v2445
    %2530 = vst [vmem:[#allocation17 + $0x30] sm:$0xff] %v2520
    %2531 = vst [vmem:[#allocation17 + $0x38] sm:$0xff] %v2522
    // Predicated region
    $region102: #{tpu_custom_call.1} parent=1 // pred_check
      _
    $region103: #{tpu_custom_call.1} parent=1 // pred_check_branch
      %2533 = sbr.rel (0) target = $region105
    $region104: #{tpu_custom_call.1} parent=1 // pred_region
      %s2535 = ssub.s32 1024, 1024
      %2536 = vsyncadd [#allocation4], %s2535
      %s2537 = sshll.u32 [#allocation17], 4
      %s2538 = int_to_ptr.vmem [resolvable:$true] %s2537
      %2543 = dma.vmem_to_hbm [thread:$0]  %s2538, 1024, %s16, [#allocation4], 512, 512, 32
    $region105: #{tpu_custom_call.1} parent=1 // pred_fallthru
      _
    // Predicated region
    $region106: #{tpu_custom_call.1} parent=1 // pred_check
      _
    $region107: #{tpu_custom_call.1} parent=1 // pred_check_branch
      %2545 = sbr.rel (0) target = $region109
    $region108: #{tpu_custom_call.1} parent=1 // pred_region
      %2546 = dma.done [#allocation4], 1024
    $region109: #{tpu_custom_call.1} parent=1 // pred_fallthru
      _
    %2547 = vsyncpa [#allocation3], 1
    %2548 = vsyncpa [#allocation6], 1
    %2549 = vsyncpa [#allocation9], 1
    %2550 = vsyncpa [#allocation12], 1
    %2551 = vsyncpa [#allocation15], 1
    %2552 = vsyncpa [#allocation4], 1

</llo_original>
